<compile_context>
chip_gen: v7x
topology: tpu7x:2x2x1
jax: 0.10.0
libtpu: 0.0.40
codegen_flags: <defaults>
</compile_context>

<pallas_src>
import functools

import jax
import jax.numpy as jnp
from jax.experimental import pallas as pl
from jax.experimental.pallas import tpu as pltpu


def _round_up(x, m):
    return (x + m - 1) // m * m


_MIB = 1024 * 1024


def _tpu_vmem_capacity_bytes():
    try:
        return int(pltpu.get_tpu_info().vmem_capacity_bytes)
    except Exception:
        return 64 * _MIB  # conservative: v7x per-TC physical VMEM


_VMEM_CAP = _tpu_vmem_capacity_bytes()

# Generation-dependent projection tiles: bigger on 128 MiB VMEM parts
# (v5e/v6e), conservative on v7x's 64 MiB per-TC budget.
if _VMEM_CAP >= 100 * _MIB:
    _PROJ_TM, _PROJ_TN, _PROJ_TK = 512, 1024, 512
else:
    _PROJ_TM, _PROJ_TN, _PROJ_TK = 256, 512, 512
_PROJ_VMEM_LIMIT = int(min(64 * _MIB, max(32 * _MIB, _VMEM_CAP // 2)))


# --------------------------------------------------------------------------
# Tiled linear (x @ w + b) kernel:  bf16 inputs, f32 accumulation
# --------------------------------------------------------------------------

def _linear_kernel(x_ref, w_ref, b_ref, o_ref, acc_ref):
    @pl.when(pl.program_id(2) == 0)
    def _():
        acc_ref[...] = jnp.zeros_like(acc_ref)

    acc_ref[...] += jnp.dot(x_ref[...], w_ref[...],
                            preferred_element_type=jnp.float32)

    @pl.when(pl.program_id(2) == pl.num_programs(2) - 1)
    def _():
        o_ref[...] = (acc_ref[...] + b_ref[...]).astype(o_ref.dtype)


def _pick_tile_m(M, tm_max):
    """Largest tile <= tm_max that divides M and is a multiple of 8."""
    top = min(tm_max, M)
    top -= top % 8
    for tm in range(top, 7, -8):
        if M % tm == 0:
            return tm
    return None


def pallas_linear(x, w, b, *, out_dtype=jnp.float32,
                  tm=None, tn=None, tk=None):
    """y = x @ w + b.  x: (M, K), w: (K, N) pre-transposed bf16, b: (N,) f32."""
    M, K = x.shape
    K2, N = w.shape
    assert K == K2, (x.shape, w.shape)

    tm = _PROJ_TM if tm is None else tm
    tn = _PROJ_TN if tn is None else tn
    tk = _PROJ_TK if tk is None else tk

    # Prefer an M tile that exactly divides M (M = T*Bp with Bp a multiple of
    # 8, so a divisor always exists) -> avoids an XLA-side pad copy of x.
    tm_div = _pick_tile_m(M, tm)
    if tm_div is not None:
        tm, Mp = tm_div, M
    else:
        tm = min(tm, _round_up(M, 8))
        Mp = _round_up(M, tm)
    tn = min(tn, _round_up(N, 128))
    tk = min(tk, _round_up(K, 128))
    Kp, Np = _round_up(K, tk), _round_up(N, tn)

    # Keep >= 2 blocks along a "parallel" axis when possible so the grid can
    # shard across both v7x TensorCores.
    if Mp // tm == 1 and Np // tn == 1 and tn >= 256:
        tn //= 2
        Np = _round_up(N, tn)

    x = x.astype(jnp.bfloat16)
    w = w.astype(jnp.bfloat16)
    b = b.astype(jnp.float32).reshape(1, N)
    if (Mp, Kp) != (M, K):
        x = jnp.pad(x, ((0, Mp - M), (0, Kp - K)))
    if (Kp, Np) != (K, N):
        w = jnp.pad(w, ((0, Kp - K), (0, Np - N)))
    if Np != N:
        b = jnp.pad(b, ((0, 0), (0, Np - N)))

    grid = (Mp // tm, Np // tn, Kp // tk)
    out = pl.pallas_call(
        _linear_kernel,
        out_shape=jax.ShapeDtypeStruct((Mp, Np), out_dtype),
        grid_spec=pltpu.PrefetchScalarGridSpec(
            num_scalar_prefetch=0,
            grid=grid,
            in_specs=[
                pl.BlockSpec((tm, tk), lambda i, j, k: (i, k)),
                pl.BlockSpec((tk, tn), lambda i, j, k: (k, j)),
                pl.BlockSpec((1, tn), lambda i, j, k: (0, j)),
            ],
            out_specs=pl.BlockSpec((tm, tn), lambda i, j, k: (i, j)),
            scratch_shapes=[pltpu.VMEM((tm, tn), jnp.float32)],
        ),
        compiler_params=pltpu.CompilerParams(
            dimension_semantics=("parallel", "parallel", "arbitrary"),
            vmem_limit_bytes=_PROJ_VMEM_LIMIT),
    )(x, w, b)

    if (Mp, Np) != (M, N):
        out = out[:M, :N]
    return out


# --------------------------------------------------------------------------
# LSTM recurrence kernel (per layer).  The input projection has already been
# hoisted out: gates_in[t] = x_t @ W_ih + (b_ih + b_hh) (bf16).  Only h @ W_hh
# is computed inside the sequential time loop.
# --------------------------------------------------------------------------

def _make_lstm_layer_kernel(t_chunk, hp, unroll):
    def kernel(gin_ref, whh_ref, out_ref, h_scr, c_scr):
        @pl.when(pl.program_id(0) == 0)
        def _():
            h_scr[...] = jnp.zeros_like(h_scr)
            c_scr[...] = jnp.zeros_like(c_scr)

        w_hh = whh_ref[...]                          # (Hp, 4Hp) bf16, resident

        def step(j, carry):
            h, c = carry                             # f32 (Bp, Hp), live in vregs
            # TODO(synk): keep W_hh staged in the MXU across the time loop
            # (pltpu.matmul_push_rhs / matmul_acc_lhs / matmul_pop) so the
            # per-step RHS re-push drops off the serial critical path.
            gates = gin_ref[j] + jnp.dot(h.astype(jnp.bfloat16), w_hh,
                                         preferred_element_type=jnp.float32)
            # lane-aligned 128-multiple gate slices (PyTorch order i, f, g, o)
            i_g = jax.nn.sigmoid(gates[:, 0 * hp:1 * hp])
            f_g = jax.nn.sigmoid(gates[:, 1 * hp:2 * hp])
            g_g = jnp.tanh(gates[:, 2 * hp:3 * hp])
            o_g = jax.nn.sigmoid(gates[:, 3 * hp:4 * hp])
            c_new = f_g * c + i_g * g_g
            h_new = o_g * jnp.tanh(c_new)
            out_ref[j] = h_new.astype(out_ref.dtype)
            return h_new, c_new

        h, c = jax.lax.fori_loop(0, t_chunk, step,
                                 (h_scr[...], c_scr[...]), unroll=unroll)
        h_scr[...] = h
        c_scr[...] = c

    return kernel


def _derive_rec_t_chunk(total_t, Bp, Hp):
    """VMEM-budget-derived time chunk + scoped-VMEM limit for the recurrence."""
    budget = min(24 * _MIB, _VMEM_CAP // 3)
    fixed = Hp * 4 * Hp * 2 + 2 * Bp * Hp * 4            # W_hh (bf16) + h/c (f32)
    per_step = 2 * Bp * 4 * Hp * 2 + 2 * Bp * Hp * 2     # dbl-buffered bf16 gin+out
    t_chunk = max(1, (budget - fixed) // per_step)
    t_chunk = int(min(t_chunk, total_t, 256))
    footprint = fixed + per_step * t_chunk
    vmem_limit = int(min(max(_VMEM_CAP - 8 * _MIB, 16 * _MIB),
                         max(footprint + 8 * _MIB, 32 * _MIB)))
    return t_chunk, vmem_limit


def pallas_lstm_layer(gates_in, w_hh, *, t_chunk, vmem_limit):
    """One LSTM layer over precomputed input gates.

    gates_in: (Tp, Bp, 4*Hp) bf16, w_hh: (Hp, 4*Hp) bf16 -> (Tp, Bp, Hp) bf16.
    """
    Tp, Bp, G4 = gates_in.shape
    Hp = G4 // 4
    t_chunk = min(t_chunk, Tp)
    Tpad = _round_up(Tp, t_chunk)
    if Tpad != Tp:
        gates_in = jnp.pad(gates_in, ((0, Tpad - Tp), (0, 0), (0, 0)))
    n_chunks = Tpad // t_chunk

    # Full unroll for small hidden sizes; cap it once Hp >= 512 so live ranges
    # don't push the kernel into a spill-bound regime (64-vreg file).
    unroll = t_chunk if Hp < 512 else min(8, t_chunk)

    out = pl.pallas_call(
        _make_lstm_layer_kernel(t_chunk, Hp, unroll),
        out_shape=jax.ShapeDtypeStruct((Tpad, Bp, Hp), jnp.bfloat16),
        grid_spec=pltpu.PrefetchScalarGridSpec(
            num_scalar_prefetch=0,
            grid=(n_chunks,),
            in_specs=[
                pl.BlockSpec((t_chunk, Bp, 4 * Hp), lambda c: (c, 0, 0)),
                # W_hh never changes across the time grid: single-buffer it.
                pl.BlockSpec((Hp, 4 * Hp), lambda c: (0, 0),
                             pipeline_mode=pl.Buffered(1)),
            ],
            out_specs=pl.BlockSpec((t_chunk, Bp, Hp), lambda c: (c, 0, 0)),
            scratch_shapes=[pltpu.VMEM((Bp, Hp), jnp.float32),   # h state
                            pltpu.VMEM((Bp, Hp), jnp.float32)],  # c state
        ),
        compiler_params=pltpu.CompilerParams(
            dimension_semantics=("arbitrary",),   # recurrence: sequential
            vmem_limit_bytes=vmem_limit),
    )(gates_in, w_hh)

    if Tpad != Tp:
        out = out[:Tp]
    return out


# --------------------------------------------------------------------------
# DecoderRNN forward
# --------------------------------------------------------------------------

def decoder_rnn_forward(features, captions, params, *,
                        hidden_size, num_layers, vocab_size):
    """features: (B, E) f32, captions: (T, B) int32 -> (T+1, B, vocab) f32."""
    B, E = features.shape
    T = captions.shape[0]
    H = hidden_size
    Hp = _round_up(H, 128)
    Ep = params["embed_w"].shape[1]          # padded embed width
    Vp = params["out_w"].shape[1]            # padded vocab width
    Bp = _round_up(B, 8)
    Tp1 = T + 1

    # Dropout on embeddings is identity in eval mode.
    if Bp != B:
        captions = jnp.pad(captions, ((0, 0), (0, Bp - B)))
        features = jnp.pad(features, ((0, Bp - B), (0, 0)))
    # TODO(synk): fold this gather into the layer-0 projection via
    # PrefetchScalarGridSpec (caption ids scalar-prefetched) + pl.Element.
    emb = jnp.take(params["embed_w"], captions, axis=0)             # (T, Bp, Ep) bf16
    feat = jnp.pad(features, ((0, 0), (0, Ep - E))).astype(jnp.bfloat16)
    x = jnp.concatenate([feat[None], emb], axis=0)                  # (T+1, Bp, Ep)

    # VMEM-budget-derived time chunk for the recurrence; pad time once so
    # every layer sees a chunk-aligned sequence.
    t_chunk, rec_vmem = _derive_rec_t_chunk(Tp1, Bp, Hp)
    Tseq = _round_up(Tp1, t_chunk)
    if Tseq != Tp1:
        x = jnp.pad(x, ((0, Tseq - Tp1), (0, 0), (0, 0)))

    # TODO(synk): fuse the per-chunk input projection into the recurrence
    # kernel (emit_pipeline) so gin never round-trips HBM, and wavefront-
    # pipeline adjacent layers across the two v7x TensorCores via pl.core_map.
    for l in range(num_layers):
        in_dim = x.shape[-1]
        # Hoisted input projection for the WHOLE sequence: one big matmul.
        # bf16 output halves gin's HBM traffic and its VMEM block in the
        # recurrence; gate math stays f32 inside the kernel.
        gin = pallas_linear(x.reshape(Tseq * Bp, in_dim),
                            params[f"w_ih_{l}"], params[f"b_{l}"],
                            out_dtype=jnp.bfloat16)
        gin = gin.reshape(Tseq, Bp, 4 * Hp)
        # Sequential recurrence (only h @ W_hh on the critical path).
        x = pallas_lstm_layer(gin, params[f"w_hh_{l}"],
                              t_chunk=t_chunk, vmem_limit=rec_vmem)

    # Drop time padding before the (largest) vocab projection: no MXU work or
    # f32 writeback for rows that would be discarded anyway.
    x = x[:Tp1]
    logits = pallas_linear(x.reshape(Tp1 * Bp, Hp),
                           params["out_w"], params["out_b"],
                           out_dtype=jnp.float32)
    logits = logits.reshape(Tp1, Bp, Vp)
    return logits[:, :B, :vocab_size]


# --------------------------------------------------------------------------
# Parameter init (PyTorch layout) and one-time prep (pad/transpose/bf16)
# --------------------------------------------------------------------------

def _uniform(key, shape, scale):
    return jax.random.uniform(key, shape, jnp.float32, -scale, scale)


def init_params(key, *, embed_size, hidden_size, vocab_size, num_layers):
    """Raw PyTorch-layout DecoderRNN parameters."""
    keys = iter(jax.random.split(key, 4 + 4 * num_layers))
    p = {}
    p["embed_w"] = jax.random.normal(next(keys), (vocab_size, embed_size),
                                     jnp.float32)
    s = 1.0 / jnp.sqrt(float(hidden_size))
    for l in range(num_layers):
        in_dim = embed_size if l == 0 else hidden_size
        p[f"w_ih_l{l}"] = _uniform(next(keys), (4 * hidden_size, in_dim), s)
        p[f"w_hh_l{l}"] = _uniform(next(keys), (4 * hidden_size, hidden_size), s)
        p[f"b_ih_l{l}"] = _uniform(next(keys), (4 * hidden_size,), s)
        p[f"b_hh_l{l}"] = _uniform(next(keys), (4 * hidden_size,), s)
    p["out_w"] = _uniform(next(keys), (vocab_size, hidden_size), s)
    p["out_b"] = _uniform(next(keys), (vocab_size,), s)
    return p


def prepare_decoder_params(raw, *, embed_size, hidden_size, vocab_size,
                           num_layers):
    """One-time weight prep: transpose to (K, N), pad gates/dims to 128-lane
    multiples (zero padding -> padded lanes provably stay zero), cast bf16."""
    E, H, V = embed_size, hidden_size, vocab_size
    Ep, Hp, Vp = _round_up(E, 128), _round_up(H, 128), _round_up(V, 128)
    p = {}
    p["embed_w"] = jnp.pad(raw["embed_w"],
                           ((0, 0), (0, Ep - E))).astype(jnp.bfloat16)
    for l in range(num_layers):
        in_dim = E if l == 0 else H
        in_p = Ep if l == 0 else Hp
        wih = raw[f"w_ih_l{l}"]                      # (4H, in_dim)
        whh = raw[f"w_hh_l{l}"]                      # (4H, H)
        bias = raw[f"b_ih_l{l}"] + raw[f"b_hh_l{l}"]  # (4H,)
        wih_t = jnp.zeros((in_p, 4 * Hp), jnp.float32)
        whh_t = jnp.zeros((Hp, 4 * Hp), jnp.float32)
        b_t = jnp.zeros((4 * Hp,), jnp.float32)
        for g in range(4):                            # PyTorch gate order i,f,g,o
            wih_t = wih_t.at[:in_dim, g * Hp:g * Hp + H].set(
                wih[g * H:(g + 1) * H, :].T)
            whh_t = whh_t.at[:H, g * Hp:g * Hp + H].set(
                whh[g * H:(g + 1) * H, :].T)
            b_t = b_t.at[g * Hp:g * Hp + H].set(bias[g * H:(g + 1) * H])
        p[f"w_ih_{l}"] = wih_t.astype(jnp.bfloat16)
        p[f"w_hh_{l}"] = whh_t.astype(jnp.bfloat16)
        p[f"b_{l}"] = b_t                             # f32 (folded b_ih + b_hh)
    ow = jnp.zeros((Hp, Vp), jnp.float32).at[:H, :V].set(raw["out_w"].T)
    p["out_w"] = ow.astype(jnp.bfloat16)
    p["out_b"] = jnp.zeros((Vp,), jnp.float32).at[:V].set(raw["out_b"])
    return p


# --------------------------------------------------------------------------
# Main
# --------------------------------------------------------------------------

if __name__ == "__main__":
    embed_size, hidden_size, vocab_size, num_layers = 32, 32, 50, 2
    B, T = 2, 8

    key = jax.random.PRNGKey(0)
    k_feat, k_cap, k_par = jax.random.split(key, 3)
    features = jax.random.normal(k_feat, (B, embed_size), dtype=jnp.float32)
    captions = jax.random.randint(k_cap, (T, B), 0, vocab_size, dtype=jnp.int32)

    raw = init_params(k_par, embed_size=embed_size, hidden_size=hidden_size,
                      vocab_size=vocab_size, num_layers=num_layers)
    params = prepare_decoder_params(raw, embed_size=embed_size,
                                    hidden_size=hidden_size,
                                    vocab_size=vocab_size,
                                    num_layers=num_layers)

    fwd = jax.jit(functools.partial(decoder_rnn_forward,
                                    hidden_size=hidden_size,
                                    num_layers=num_layers,
                                    vocab_size=vocab_size))
    out = fwd(features, captions, params)
    out = jax.block_until_ready(out)

    assert out.shape == (T + 1, B, vocab_size), out.shape
    assert out.dtype == jnp.float32
    assert bool(jnp.all(jnp.isfinite(out)))
    print("KERNEL_OK")
</pallas_src>

<mosaic_0001>
module attributes {stable_mosaic.version = 11 : i64} {
  func.func @_linear_kernel(%arg0: i32, %arg1: i32, %arg2: i32, %arg3: memref<72x128xbf16, #tpu.memory_space<vmem>>, %arg4: memref<128x128xbf16, #tpu.memory_space<vmem>>, %arg5: memref<1x128xf32, #tpu.memory_space<vmem>>, %arg6: memref<72x128xf32, #tpu.memory_space<vmem>>, %arg7: memref<72x128xf32, #tpu.memory_space<vmem>>) attributes {dimension_semantics = [#tpu.dimension_semantics<parallel>, #tpu.dimension_semantics<parallel>, #tpu.dimension_semantics<arbitrary>], iteration_bounds = array<i64: 1, 1, 1>, scalar_prefetch = 0 : i64, scratch_operands = 1 : i64, tpu.core_type = #tpu.core_type<tc>, window_params = [{transform_indices = @transform_0, window_bounds = array<i64: 72, 128>}, {transform_indices = @transform_1, window_bounds = array<i64: 128, 128>}, {transform_indices = @transform_2, window_bounds = array<i64: 1, 128>}, {transform_indices = @transform_3, window_bounds = array<i64: 72, 128>}]} {
    %c0_i32 = arith.constant 0 : i32
    %0 = arith.cmpi eq, %arg2, %c0_i32 : i32
    %1 = arith.extui %0 : i1 to i32
    %c0_i32_0 = arith.constant 0 : i32
    %2 = arith.cmpi ne, %1, %c0_i32_0 : i32
    scf.if %2 {
      %cst_10 = arith.constant 0.000000e+00 : f32
      %12 = vector.broadcast %cst_10 : f32 to vector<72x128xf32>
      %c0_11 = arith.constant 0 : index
      %c0_12 = arith.constant 0 : index
      %13 = vector.load %arg7[%c0_11, %c0_12] : memref<72x128xf32, #tpu.memory_space<vmem>>, vector<72x128xf32>
      tpu.vector_store %arg7[%c0_11, %c0_12], %12 {strides = array<i32>} : memref<72x128xf32, #tpu.memory_space<vmem>>, vector<72x128xf32>,
    } else {
    }
    %c0 = arith.constant 0 : index
    %c0_1 = arith.constant 0 : index
    %3 = vector.load %arg7[%c0, %c0_1] : memref<72x128xf32, #tpu.memory_space<vmem>>, vector<72x128xf32>
    %c0_2 = arith.constant 0 : index
    %c0_3 = arith.constant 0 : index
    %4 = vector.load %arg3[%c0_2, %c0_3] : memref<72x128xbf16, #tpu.memory_space<vmem>>, vector<72x128xbf16>
    %c0_4 = arith.constant 0 : index
    %c0_5 = arith.constant 0 : index
    %5 = vector.load %arg4[%c0_4, %c0_5] : memref<128x128xbf16, #tpu.memory_space<vmem>>, vector<128x128xbf16>
    %cst = arith.constant dense<0.000000e+00> : vector<72x128xf32>
    %6 = tpu.matmul %4, %5, %cst {dimension_numbers = #tpu.dot_dimension_numbers<[1], [0], [0], [1], [0, 0, 1, 1], [], []>} : vector<72x128xbf16>, vector<128x128xbf16>, vector<72x128xf32> -> vector<72x128xf32>
    %7 = arith.addf %3, %6 : vector<72x128xf32>
    %c0_6 = arith.constant 0 : index
    %c0_7 = arith.constant 0 : index
    %8 = vector.load %arg7[%c0_6, %c0_7] : memref<72x128xf32, #tpu.memory_space<vmem>>, vector<72x128xf32>
    tpu.vector_store %arg7[%c0_6, %c0_7], %7 {strides = array<i32>} : memref<72x128xf32, #tpu.memory_space<vmem>>, vector<72x128xf32>,
    %c0_i32_8 = arith.constant 0 : i32
    %9 = arith.cmpi eq, %arg2, %c0_i32_8 : i32
    %10 = arith.extui %9 : i1 to i32
    %c0_i32_9 = arith.constant 0 : i32
    %11 = arith.cmpi ne, %10, %c0_i32_9 : i32
    scf.if %11 {
      %c0_10 = arith.constant 0 : index
      %c0_11 = arith.constant 0 : index
      %12 = vector.load %arg7[%c0_10, %c0_11] : memref<72x128xf32, #tpu.memory_space<vmem>>, vector<72x128xf32>
      %c0_12 = arith.constant 0 : index
      %c0_13 = arith.constant 0 : index
      %13 = vector.load %arg5[%c0_12, %c0_13] : memref<1x128xf32, #tpu.memory_space<vmem>>, vector<1x128xf32>
      %14 = vector.broadcast %13 : vector<1x128xf32> to vector<72x128xf32>
      %15 = arith.addf %12, %14 : vector<72x128xf32>
      %c0_14 = arith.constant 0 : index
      %c0_15 = arith.constant 0 : index
      %16 = vector.load %arg6[%c0_14, %c0_15] : memref<72x128xf32, #tpu.memory_space<vmem>>, vector<72x128xf32>
      tpu.vector_store %arg6[%c0_14, %c0_15], %15 {strides = array<i32>} : memref<72x128xf32, #tpu.memory_space<vmem>>, vector<72x128xf32>,
    } else {
    }
    return
  }
  func.func @transform_0(%arg0: i32, %arg1: i32, %arg2: i32) -> (i32, i32) {
    %c0_i32 = arith.constant 0 : i32
    return %arg0, %arg2 : i32, i32
  }
  func.func @transform_1(%arg0: i32, %arg1: i32, %arg2: i32) -> (i32, i32) {
    %c0_i32 = arith.constant 0 : i32
    return %arg2, %arg1 : i32, i32
  }
  func.func @transform_2(%arg0: i32, %arg1: i32, %arg2: i32) -> (i32, i32) {
    %c0_i32 = arith.constant 0 : i32
    %c0_i32_0 = arith.constant 0 : i32
    return %c0_i32, %arg1 : i32, i32
  }
  func.func @transform_3(%arg0: i32, %arg1: i32, %arg2: i32) -> (i32, i32) {
    %c0_i32 = arith.constant 0 : i32
    return %arg0, %arg1 : i32, i32
  }
}

module attributes {stable_mosaic.version = 11 : i64} {
  func.func @_linear_kernel(%arg0: i32, %arg1: i32, %arg2: i32, %arg3: memref<72x128xbf16, #tpu.memory_space<vmem>>, %arg4: memref<128x256xbf16, #tpu.memory_space<vmem>>, %arg5: memref<1x256xf32, #tpu.memory_space<vmem>>, %arg6: memref<72x256xbf16, #tpu.memory_space<vmem>>, %arg7: memref<72x256xf32, #tpu.memory_space<vmem>>) attributes {dimension_semantics = [#tpu.dimension_semantics<parallel>, #tpu.dimension_semantics<parallel>, #tpu.dimension_semantics<arbitrary>], iteration_bounds = array<i64: 1, 2, 1>, scalar_prefetch = 0 : i64, scratch_operands = 1 : i64, tpu.core_type = #tpu.core_type<tc>, window_params = [{transform_indices = @transform_0, window_bounds = array<i64: 72, 128>}, {transform_indices = @transform_1, window_bounds = array<i64: 128, 256>}, {transform_indices = @transform_2, window_bounds = array<i64: 1, 256>}, {transform_indices = @transform_3, window_bounds = array<i64: 72, 256>}]} {
    %c0_i32 = arith.constant 0 : i32
    %0 = arith.cmpi eq, %arg2, %c0_i32 : i32
    %1 = arith.extui %0 : i1 to i32
    %c0_i32_0 = arith.constant 0 : i32
    %2 = arith.cmpi ne, %1, %c0_i32_0 : i32
    scf.if %2 {
      %cst_10 = arith.constant 0.000000e+00 : f32
      %12 = vector.broadcast %cst_10 : f32 to vector<72x256xf32>
      %c0_11 = arith.constant 0 : index
      %c0_12 = arith.constant 0 : index
      %13 = vector.load %arg7[%c0_11, %c0_12] : memref<72x256xf32, #tpu.memory_space<vmem>>, vector<72x256xf32>
      tpu.vector_store %arg7[%c0_11, %c0_12], %12 {strides = array<i32>} : memref<72x256xf32, #tpu.memory_space<vmem>>, vector<72x256xf32>,
    } else {
    }
    %c0 = arith.constant 0 : index
    %c0_1 = arith.constant 0 : index
    %3 = vector.load %arg7[%c0, %c0_1] : memref<72x256xf32, #tpu.memory_space<vmem>>, vector<72x256xf32>
    %c0_2 = arith.constant 0 : index
    %c0_3 = arith.constant 0 : index
    %4 = vector.load %arg3[%c0_2, %c0_3] : memref<72x128xbf16, #tpu.memory_space<vmem>>, vector<72x128xbf16>
    %c0_4 = arith.constant 0 : index
    %c0_5 = arith.constant 0 : index
    %5 = vector.load %arg4[%c0_4, %c0_5] : memref<128x256xbf16, #tpu.memory_space<vmem>>, vector<128x256xbf16>
    %cst = arith.constant dense<0.000000e+00> : vector<72x256xf32>
    %6 = tpu.matmul %4, %5, %cst {dimension_numbers = #tpu.dot_dimension_numbers<[1], [0], [0], [1], [0, 0, 1, 1], [], []>} : vector<72x128xbf16>, vector<128x256xbf16>, vector<72x256xf32> -> vector<72x256xf32>
    %7 = arith.addf %3, %6 : vector<72x256xf32>
    %c0_6 = arith.constant 0 : index
    %c0_7 = arith.constant 0 : index
    %8 = vector.load %arg7[%c0_6, %c0_7] : memref<72x256xf32, #tpu.memory_space<vmem>>, vector<72x256xf32>
    tpu.vector_store %arg7[%c0_6, %c0_7], %7 {strides = array<i32>} : memref<72x256xf32, #tpu.memory_space<vmem>>, vector<72x256xf32>,
    %c0_i32_8 = arith.constant 0 : i32
    %9 = arith.cmpi eq, %arg2, %c0_i32_8 : i32
    %10 = arith.extui %9 : i1 to i32
    %c0_i32_9 = arith.constant 0 : i32
    %11 = arith.cmpi ne, %10, %c0_i32_9 : i32
    scf.if %11 {
      %c0_10 = arith.constant 0 : index
      %c0_11 = arith.constant 0 : index
      %12 = vector.load %arg7[%c0_10, %c0_11] : memref<72x256xf32, #tpu.memory_space<vmem>>, vector<72x256xf32>
      %c0_12 = arith.constant 0 : index
      %c0_13 = arith.constant 0 : index
      %13 = vector.load %arg5[%c0_12, %c0_13] : memref<1x256xf32, #tpu.memory_space<vmem>>, vector<1x256xf32>
      %14 = vector.broadcast %13 : vector<1x256xf32> to vector<72x256xf32>
      %15 = arith.addf %12, %14 : vector<72x256xf32>
      %16 = arith.truncf %15 : vector<72x256xf32> to vector<72x256xbf16>
      %c0_14 = arith.constant 0 : index
      %c0_15 = arith.constant 0 : index
      %17 = vector.load %arg6[%c0_14, %c0_15] : memref<72x256xbf16, #tpu.memory_space<vmem>>, vector<72x256xbf16>
      tpu.vector_store %arg6[%c0_14, %c0_15], %16 {strides = array<i32>} : memref<72x256xbf16, #tpu.memory_space<vmem>>, vector<72x256xbf16>,
    } else {
    }
    return
  }
  func.func @transform_0(%arg0: i32, %arg1: i32, %arg2: i32) -> (i32, i32) {
    %c0_i32 = arith.constant 0 : i32
    return %arg0, %arg2 : i32, i32
  }
  func.func @transform_1(%arg0: i32, %arg1: i32, %arg2: i32) -> (i32, i32) {
    %c0_i32 = arith.constant 0 : i32
    return %arg2, %arg1 : i32, i32
  }
  func.func @transform_2(%arg0: i32, %arg1: i32, %arg2: i32) -> (i32, i32) {
    %c0_i32 = arith.constant 0 : i32
    %c0_i32_0 = arith.constant 0 : i32
    return %c0_i32, %arg1 : i32, i32
  }
  func.func @transform_3(%arg0: i32, %arg1: i32, %arg2: i32) -> (i32, i32) {
    %c0_i32 = arith.constant 0 : i32
    return %arg0, %arg1 : i32, i32
  }
}

module attributes {stable_mosaic.version = 11 : i64} {
  func.func @kernel(%arg0: i32, %arg1: memref<9x8x512xbf16, #tpu.memory_space<vmem>>, %arg2: memref<128x512xbf16, #tpu.memory_space<vmem>>, %arg3: memref<9x8x128xbf16, #tpu.memory_space<vmem>>, %arg4: memref<8x128xf32, #tpu.memory_space<vmem>>, %arg5: memref<8x128xf32, #tpu.memory_space<vmem>>) attributes {dimension_semantics = [#tpu.dimension_semantics<arbitrary>], iteration_bounds = array<i64: 1>, scalar_prefetch = 0 : i64, scratch_operands = 2 : i64, tpu.core_type = #tpu.core_type<tc>, window_params = [{transform_indices = @transform_0, window_bounds = array<i64: 9, 8, 512>}, {pipeline_mode = #tpu.pipeline_mode<synchronous>, transform_indices = @transform_1, window_bounds = array<i64: 128, 512>}, {transform_indices = @transform_2, window_bounds = array<i64: 9, 8, 128>}]} {
    %c0_i32 = arith.constant 0 : i32
    %0 = arith.cmpi eq, %arg0, %c0_i32 : i32
    %1 = arith.extui %0 : i1 to i32
    %c0_i32_0 = arith.constant 0 : i32
    %2 = arith.cmpi ne, %1, %c0_i32_0 : i32
    scf.if %2 {
      %cst_82 = arith.constant 0.000000e+00 : f32
      %341 = vector.broadcast %cst_82 : f32 to vector<8x128xf32>
      %c0_83 = arith.constant 0 : index
      %c0_84 = arith.constant 0 : index
      %342 = vector.load %arg4[%c0_83, %c0_84] : memref<8x128xf32, #tpu.memory_space<vmem>>, vector<8x128xf32>
      tpu.vector_store %arg4[%c0_83, %c0_84], %341 {strides = array<i32>} : memref<8x128xf32, #tpu.memory_space<vmem>>, vector<8x128xf32>,
      %cst_85 = arith.constant 0.000000e+00 : f32
      %343 = vector.broadcast %cst_85 : f32 to vector<8x128xf32>
      %c0_86 = arith.constant 0 : index
      %c0_87 = arith.constant 0 : index
      %344 = vector.load %arg5[%c0_86, %c0_87] : memref<8x128xf32, #tpu.memory_space<vmem>>, vector<8x128xf32>
      tpu.vector_store %arg5[%c0_86, %c0_87], %343 {strides = array<i32>} : memref<8x128xf32, #tpu.memory_space<vmem>>, vector<8x128xf32>,
    } else {
    }
    %c0 = arith.constant 0 : index
    %c0_1 = arith.constant 0 : index
    %3 = vector.load %arg2[%c0, %c0_1] : memref<128x512xbf16, #tpu.memory_space<vmem>>, vector<128x512xbf16>
    %c0_2 = arith.constant 0 : index
    %c0_3 = arith.constant 0 : index
    %4 = vector.load %arg4[%c0_2, %c0_3] : memref<8x128xf32, #tpu.memory_space<vmem>>, vector<8x128xf32>
    %c0_4 = arith.constant 0 : index
    %c0_5 = arith.constant 0 : index
    %5 = vector.load %arg5[%c0_4, %c0_5] : memref<8x128xf32, #tpu.memory_space<vmem>>, vector<8x128xf32>
    %c0_i32_6 = arith.constant 0 : i32
    %6 = arith.index_cast %c0_i32_6 : i32 to index
    %c0_7 = arith.constant 0 : index
    %c0_8 = arith.constant 0 : index
    %7 = vector.load %arg1[%6, %c0_7, %c0_8] : memref<9x8x512xbf16, #tpu.memory_space<vmem>>, vector<1x8x512xbf16>
    %8 = vector.shape_cast %7 : vector<1x8x512xbf16> to vector<8x512xbf16>
    %9 = arith.truncf %4 : vector<8x128xf32> to vector<8x128xbf16>
    %cst = arith.constant dense<0.000000e+00> : vector<8x512xf32>
    %10 = tpu.matmul %9, %3, %cst {dimension_numbers = #tpu.dot_dimension_numbers<[1], [0], [0], [1], [0, 0, 1, 1], [], []>} : vector<8x128xbf16>, vector<128x512xbf16>, vector<8x512xf32> -> vector<8x512xf32>
    %11 = arith.extf %8 : vector<8x512xbf16> to vector<8x512xf32>
    %12 = arith.addf %11, %10 : vector<8x512xf32>
    %13 = vector.extract_strided_slice %12 {offsets = [0, 0], sizes = [8, 128], strides = [1, 1]} : vector<8x512xf32> to vector<8x128xf32>
    %14 = arith.negf %13 : vector<8x128xf32>
    %15 = math.exp %14 : vector<8x128xf32>
    %cst_9 = arith.constant 1.000000e+00 : f32
    %16 = vector.broadcast %cst_9 : f32 to vector<8x128xf32>
    %17 = arith.addf %16, %15 : vector<8x128xf32>
    %18 = arith.divf %16, %17 : vector<8x128xf32>
    %19 = vector.extract_strided_slice %12 {offsets = [0, 128], sizes = [8, 128], strides = [1, 1]} : vector<8x512xf32> to vector<8x128xf32>
    %20 = arith.negf %19 : vector<8x128xf32>
    %21 = math.exp %20 : vector<8x128xf32>
    %cst_10 = arith.constant 1.000000e+00 : f32
    %22 = vector.broadcast %cst_10 : f32 to vector<8x128xf32>
    %23 = arith.addf %22, %21 : vector<8x128xf32>
    %24 = arith.divf %22, %23 : vector<8x128xf32>
    %25 = vector.extract_strided_slice %12 {offsets = [0, 256], sizes = [8, 128], strides = [1, 1]} : vector<8x512xf32> to vector<8x128xf32>
    %26 = math.tanh %25 : vector<8x128xf32>
    %27 = vector.extract_strided_slice %12 {offsets = [0, 384], sizes = [8, 128], strides = [1, 1]} : vector<8x512xf32> to vector<8x128xf32>
    %28 = arith.negf %27 : vector<8x128xf32>
    %29 = math.exp %28 : vector<8x128xf32>
    %cst_11 = arith.constant 1.000000e+00 : f32
    %30 = vector.broadcast %cst_11 : f32 to vector<8x128xf32>
    %31 = arith.addf %30, %29 : vector<8x128xf32>
    %32 = arith.divf %30, %31 : vector<8x128xf32>
    %33 = arith.mulf %24, %5 : vector<8x128xf32>
    %34 = arith.mulf %18, %26 : vector<8x128xf32>
    %35 = arith.addf %33, %34 : vector<8x128xf32>
    %36 = math.tanh %35 : vector<8x128xf32>
    %37 = arith.mulf %32, %36 : vector<8x128xf32>
    %38 = arith.truncf %37 : vector<8x128xf32> to vector<8x128xbf16>
    %39 = arith.index_cast %c0_i32_6 : i32 to index
    %c0_12 = arith.constant 0 : index
    %c0_13 = arith.constant 0 : index
    %40 = vector.load %arg3[%39, %c0_12, %c0_13] : memref<9x8x128xbf16, #tpu.memory_space<vmem>>, vector<1x8x128xbf16>
    %41 = vector.shape_cast %40 : vector<1x8x128xbf16> to vector<8x128xbf16>
    %42 = vector.shape_cast %38 : vector<8x128xbf16> to vector<1x8x128xbf16>
    tpu.vector_store %arg3[%39, %c0_12, %c0_13], %42 {strides = array<i32>} : memref<9x8x128xbf16, #tpu.memory_space<vmem>>, vector<1x8x128xbf16>,
    %c1_i32 = arith.constant 1 : i32
    %43 = arith.index_cast %c1_i32 : i32 to index
    %c0_14 = arith.constant 0 : index
    %c0_15 = arith.constant 0 : index
    %44 = vector.load %arg1[%43, %c0_14, %c0_15] : memref<9x8x512xbf16, #tpu.memory_space<vmem>>, vector<1x8x512xbf16>
    %45 = vector.shape_cast %44 : vector<1x8x512xbf16> to vector<8x512xbf16>
    %46 = arith.truncf %37 : vector<8x128xf32> to vector<8x128xbf16>
    %cst_16 = arith.constant dense<0.000000e+00> : vector<8x512xf32>
    %47 = tpu.matmul %46, %3, %cst_16 {dimension_numbers = #tpu.dot_dimension_numbers<[1], [0], [0], [1], [0, 0, 1, 1], [], []>} : vector<8x128xbf16>, vector<128x512xbf16>, vector<8x512xf32> -> vector<8x512xf32>
    %48 = arith.extf %45 : vector<8x512xbf16> to vector<8x512xf32>
    %49 = arith.addf %48, %47 : vector<8x512xf32>
    %50 = vector.extract_strided_slice %49 {offsets = [0, 0], sizes = [8, 128], strides = [1, 1]} : vector<8x512xf32> to vector<8x128xf32>
    %51 = arith.negf %50 : vector<8x128xf32>
    %52 = math.exp %51 : vector<8x128xf32>
    %cst_17 = arith.constant 1.000000e+00 : f32
    %53 = vector.broadcast %cst_17 : f32 to vector<8x128xf32>
    %54 = arith.addf %53, %52 : vector<8x128xf32>
    %55 = arith.divf %53, %54 : vector<8x128xf32>
    %56 = vector.extract_strided_slice %49 {offsets = [0, 128], sizes = [8, 128], strides = [1, 1]} : vector<8x512xf32> to vector<8x128xf32>
    %57 = arith.negf %56 : vector<8x128xf32>
    %58 = math.exp %57 : vector<8x128xf32>
    %cst_18 = arith.constant 1.000000e+00 : f32
    %59 = vector.broadcast %cst_18 : f32 to vector<8x128xf32>
    %60 = arith.addf %59, %58 : vector<8x128xf32>
    %61 = arith.divf %59, %60 : vector<8x128xf32>
    %62 = vector.extract_strided_slice %49 {offsets = [0, 256], sizes = [8, 128], strides = [1, 1]} : vector<8x512xf32> to vector<8x128xf32>
    %63 = math.tanh %62 : vector<8x128xf32>
    %64 = vector.extract_strided_slice %49 {offsets = [0, 384], sizes = [8, 128], strides = [1, 1]} : vector<8x512xf32> to vector<8x128xf32>
    %65 = arith.negf %64 : vector<8x128xf32>
    %66 = math.exp %65 : vector<8x128xf32>
    %cst_19 = arith.constant 1.000000e+00 : f32
    %67 = vector.broadcast %cst_19 : f32 to vector<8x128xf32>
    %68 = arith.addf %67, %66 : vector<8x128xf32>
    %69 = arith.divf %67, %68 : vector<8x128xf32>
    %70 = arith.mulf %61, %35 : vector<8x128xf32>
    %71 = arith.mulf %55, %63 : vector<8x128xf32>
    %72 = arith.addf %70, %71 : vector<8x128xf32>
    %73 = math.tanh %72 : vector<8x128xf32>
    %74 = arith.mulf %69, %73 : vector<8x128xf32>
    %75 = arith.truncf %74 : vector<8x128xf32> to vector<8x128xbf16>
    %76 = arith.index_cast %c1_i32 : i32 to index
    %c0_20 = arith.constant 0 : index
    %c0_21 = arith.constant 0 : index
    %77 = vector.load %arg3[%76, %c0_20, %c0_21] : memref<9x8x128xbf16, #tpu.memory_space<vmem>>, vector<1x8x128xbf16>
    %78 = vector.shape_cast %77 : vector<1x8x128xbf16> to vector<8x128xbf16>
    %79 = vector.shape_cast %75 : vector<8x128xbf16> to vector<1x8x128xbf16>
    tpu.vector_store %arg3[%76, %c0_20, %c0_21], %79 {strides = array<i32>} : memref<9x8x128xbf16, #tpu.memory_space<vmem>>, vector<1x8x128xbf16>,
    %c2_i32 = arith.constant 2 : i32
    %80 = arith.index_cast %c2_i32 : i32 to index
    %c0_22 = arith.constant 0 : index
    %c0_23 = arith.constant 0 : index
    %81 = vector.load %arg1[%80, %c0_22, %c0_23] : memref<9x8x512xbf16, #tpu.memory_space<vmem>>, vector<1x8x512xbf16>
    %82 = vector.shape_cast %81 : vector<1x8x512xbf16> to vector<8x512xbf16>
    %83 = arith.truncf %74 : vector<8x128xf32> to vector<8x128xbf16>
    %cst_24 = arith.constant dense<0.000000e+00> : vector<8x512xf32>
    %84 = tpu.matmul %83, %3, %cst_24 {dimension_numbers = #tpu.dot_dimension_numbers<[1], [0], [0], [1], [0, 0, 1, 1], [], []>} : vector<8x128xbf16>, vector<128x512xbf16>, vector<8x512xf32> -> vector<8x512xf32>
    %85 = arith.extf %82 : vector<8x512xbf16> to vector<8x512xf32>
    %86 = arith.addf %85, %84 : vector<8x512xf32>
    %87 = vector.extract_strided_slice %86 {offsets = [0, 0], sizes = [8, 128], strides = [1, 1]} : vector<8x512xf32> to vector<8x128xf32>
    %88 = arith.negf %87 : vector<8x128xf32>
    %89 = math.exp %88 : vector<8x128xf32>
    %cst_25 = arith.constant 1.000000e+00 : f32
    %90 = vector.broadcast %cst_25 : f32 to vector<8x128xf32>
    %91 = arith.addf %90, %89 : vector<8x128xf32>
    %92 = arith.divf %90, %91 : vector<8x128xf32>
    %93 = vector.extract_strided_slice %86 {offsets = [0, 128], sizes = [8, 128], strides = [1, 1]} : vector<8x512xf32> to vector<8x128xf32>
    %94 = arith.negf %93 : vector<8x128xf32>
    %95 = math.exp %94 : vector<8x128xf32>
    %cst_26 = arith.constant 1.000000e+00 : f32
    %96 = vector.broadcast %cst_26 : f32 to vector<8x128xf32>
    %97 = arith.addf %96, %95 : vector<8x128xf32>
    %98 = arith.divf %96, %97 : vector<8x128xf32>
    %99 = vector.extract_strided_slice %86 {offsets = [0, 256], sizes = [8, 128], strides = [1, 1]} : vector<8x512xf32> to vector<8x128xf32>
    %100 = math.tanh %99 : vector<8x128xf32>
    %101 = vector.extract_strided_slice %86 {offsets = [0, 384], sizes = [8, 128], strides = [1, 1]} : vector<8x512xf32> to vector<8x128xf32>
    %102 = arith.negf %101 : vector<8x128xf32>
    %103 = math.exp %102 : vector<8x128xf32>
    %cst_27 = arith.constant 1.000000e+00 : f32
    %104 = vector.broadcast %cst_27 : f32 to vector<8x128xf32>
    %105 = arith.addf %104, %103 : vector<8x128xf32>
    %106 = arith.divf %104, %105 : vector<8x128xf32>
    %107 = arith.mulf %98, %72 : vector<8x128xf32>
    %108 = arith.mulf %92, %100 : vector<8x128xf32>
    %109 = arith.addf %107, %108 : vector<8x128xf32>
    %110 = math.tanh %109 : vector<8x128xf32>
    %111 = arith.mulf %106, %110 : vector<8x128xf32>
    %112 = arith.truncf %111 : vector<8x128xf32> to vector<8x128xbf16>
    %113 = arith.index_cast %c2_i32 : i32 to index
    %c0_28 = arith.constant 0 : index
    %c0_29 = arith.constant 0 : index
    %114 = vector.load %arg3[%113, %c0_28, %c0_29] : memref<9x8x128xbf16, #tpu.memory_space<vmem>>, vector<1x8x128xbf16>
    %115 = vector.shape_cast %114 : vector<1x8x128xbf16> to vector<8x128xbf16>
    %116 = vector.shape_cast %112 : vector<8x128xbf16> to vector<1x8x128xbf16>
    tpu.vector_store %arg3[%113, %c0_28, %c0_29], %116 {strides = array<i32>} : memref<9x8x128xbf16, #tpu.memory_space<vmem>>, vector<1x8x128xbf16>,
    %c3_i32 = arith.constant 3 : i32
    %117 = arith.index_cast %c3_i32 : i32 to index
    %c0_30 = arith.constant 0 : index
    %c0_31 = arith.constant 0 : index
    %118 = vector.load %arg1[%117, %c0_30, %c0_31] : memref<9x8x512xbf16, #tpu.memory_space<vmem>>, vector<1x8x512xbf16>
    %119 = vector.shape_cast %118 : vector<1x8x512xbf16> to vector<8x512xbf16>
    %120 = arith.truncf %111 : vector<8x128xf32> to vector<8x128xbf16>
    %cst_32 = arith.constant dense<0.000000e+00> : vector<8x512xf32>
    %121 = tpu.matmul %120, %3, %cst_32 {dimension_numbers = #tpu.dot_dimension_numbers<[1], [0], [0], [1], [0, 0, 1, 1], [], []>} : vector<8x128xbf16>, vector<128x512xbf16>, vector<8x512xf32> -> vector<8x512xf32>
    %122 = arith.extf %119 : vector<8x512xbf16> to vector<8x512xf32>
    %123 = arith.addf %122, %121 : vector<8x512xf32>
    %124 = vector.extract_strided_slice %123 {offsets = [0, 0], sizes = [8, 128], strides = [1, 1]} : vector<8x512xf32> to vector<8x128xf32>
    %125 = arith.negf %124 : vector<8x128xf32>
    %126 = math.exp %125 : vector<8x128xf32>
    %cst_33 = arith.constant 1.000000e+00 : f32
    %127 = vector.broadcast %cst_33 : f32 to vector<8x128xf32>
    %128 = arith.addf %127, %126 : vector<8x128xf32>
    %129 = arith.divf %127, %128 : vector<8x128xf32>
    %130 = vector.extract_strided_slice %123 {offsets = [0, 128], sizes = [8, 128], strides = [1, 1]} : vector<8x512xf32> to vector<8x128xf32>
    %131 = arith.negf %130 : vector<8x128xf32>
    %132 = math.exp %131 : vector<8x128xf32>
    %cst_34 = arith.constant 1.000000e+00 : f32
    %133 = vector.broadcast %cst_34 : f32 to vector<8x128xf32>
    %134 = arith.addf %133, %132 : vector<8x128xf32>
    %135 = arith.divf %133, %134 : vector<8x128xf32>
    %136 = vector.extract_strided_slice %123 {offsets = [0, 256], sizes = [8, 128], strides = [1, 1]} : vector<8x512xf32> to vector<8x128xf32>
    %137 = math.tanh %136 : vector<8x128xf32>
    %138 = vector.extract_strided_slice %123 {offsets = [0, 384], sizes = [8, 128], strides = [1, 1]} : vector<8x512xf32> to vector<8x128xf32>
    %139 = arith.negf %138 : vector<8x128xf32>
    %140 = math.exp %139 : vector<8x128xf32>
    %cst_35 = arith.constant 1.000000e+00 : f32
    %141 = vector.broadcast %cst_35 : f32 to vector<8x128xf32>
    %142 = arith.addf %141, %140 : vector<8x128xf32>
    %143 = arith.divf %141, %142 : vector<8x128xf32>
    %144 = arith.mulf %135, %109 : vector<8x128xf32>
    %145 = arith.mulf %129, %137 : vector<8x128xf32>
    %146 = arith.addf %144, %145 : vector<8x128xf32>
    %147 = math.tanh %146 : vector<8x128xf32>
    %148 = arith.mulf %143, %147 : vector<8x128xf32>
    %149 = arith.truncf %148 : vector<8x128xf32> to vector<8x128xbf16>
    %150 = arith.index_cast %c3_i32 : i32 to index
    %c0_36 = arith.constant 0 : index
    %c0_37 = arith.constant 0 : index
    %151 = vector.load %arg3[%150, %c0_36, %c0_37] : memref<9x8x128xbf16, #tpu.memory_space<vmem>>, vector<1x8x128xbf16>
    %152 = vector.shape_cast %151 : vector<1x8x128xbf16> to vector<8x128xbf16>
    %153 = vector.shape_cast %149 : vector<8x128xbf16> to vector<1x8x128xbf16>
    tpu.vector_store %arg3[%150, %c0_36, %c0_37], %153 {strides = array<i32>} : memref<9x8x128xbf16, #tpu.memory_space<vmem>>, vector<1x8x128xbf16>,
    %c4_i32 = arith.constant 4 : i32
    %154 = arith.index_cast %c4_i32 : i32 to index
    %c0_38 = arith.constant 0 : index
    %c0_39 = arith.constant 0 : index
    %155 = vector.load %arg1[%154, %c0_38, %c0_39] : memref<9x8x512xbf16, #tpu.memory_space<vmem>>, vector<1x8x512xbf16>
    %156 = vector.shape_cast %155 : vector<1x8x512xbf16> to vector<8x512xbf16>
    %157 = arith.truncf %148 : vector<8x128xf32> to vector<8x128xbf16>
    %cst_40 = arith.constant dense<0.000000e+00> : vector<8x512xf32>
    %158 = tpu.matmul %157, %3, %cst_40 {dimension_numbers = #tpu.dot_dimension_numbers<[1], [0], [0], [1], [0, 0, 1, 1], [], []>} : vector<8x128xbf16>, vector<128x512xbf16>, vector<8x512xf32> -> vector<8x512xf32>
    %159 = arith.extf %156 : vector<8x512xbf16> to vector<8x512xf32>
    %160 = arith.addf %159, %158 : vector<8x512xf32>
    %161 = vector.extract_strided_slice %160 {offsets = [0, 0], sizes = [8, 128], strides = [1, 1]} : vector<8x512xf32> to vector<8x128xf32>
    %162 = arith.negf %161 : vector<8x128xf32>
    %163 = math.exp %162 : vector<8x128xf32>
    %cst_41 = arith.constant 1.000000e+00 : f32
    %164 = vector.broadcast %cst_41 : f32 to vector<8x128xf32>
    %165 = arith.addf %164, %163 : vector<8x128xf32>
    %166 = arith.divf %164, %165 : vector<8x128xf32>
    %167 = vector.extract_strided_slice %160 {offsets = [0, 128], sizes = [8, 128], strides = [1, 1]} : vector<8x512xf32> to vector<8x128xf32>
    %168 = arith.negf %167 : vector<8x128xf32>
    %169 = math.exp %168 : vector<8x128xf32>
    %cst_42 = arith.constant 1.000000e+00 : f32
    %170 = vector.broadcast %cst_42 : f32 to vector<8x128xf32>
    %171 = arith.addf %170, %169 : vector<8x128xf32>
    %172 = arith.divf %170, %171 : vector<8x128xf32>
    %173 = vector.extract_strided_slice %160 {offsets = [0, 256], sizes = [8, 128], strides = [1, 1]} : vector<8x512xf32> to vector<8x128xf32>
    %174 = math.tanh %173 : vector<8x128xf32>
    %175 = vector.extract_strided_slice %160 {offsets = [0, 384], sizes = [8, 128], strides = [1, 1]} : vector<8x512xf32> to vector<8x128xf32>
    %176 = arith.negf %175 : vector<8x128xf32>
    %177 = math.exp %176 : vector<8x128xf32>
    %cst_43 = arith.constant 1.000000e+00 : f32
    %178 = vector.broadcast %cst_43 : f32 to vector<8x128xf32>
    %179 = arith.addf %178, %177 : vector<8x128xf32>
    %180 = arith.divf %178, %179 : vector<8x128xf32>
    %181 = arith.mulf %172, %146 : vector<8x128xf32>
    %182 = arith.mulf %166, %174 : vector<8x128xf32>
    %183 = arith.addf %181, %182 : vector<8x128xf32>
    %184 = math.tanh %183 : vector<8x128xf32>
    %185 = arith.mulf %180, %184 : vector<8x128xf32>
    %186 = arith.truncf %185 : vector<8x128xf32> to vector<8x128xbf16>
    %187 = arith.index_cast %c4_i32 : i32 to index
    %c0_44 = arith.constant 0 : index
    %c0_45 = arith.constant 0 : index
    %188 = vector.load %arg3[%187, %c0_44, %c0_45] : memref<9x8x128xbf16, #tpu.memory_space<vmem>>, vector<1x8x128xbf16>
    %189 = vector.shape_cast %188 : vector<1x8x128xbf16> to vector<8x128xbf16>
    %190 = vector.shape_cast %186 : vector<8x128xbf16> to vector<1x8x128xbf16>
    tpu.vector_store %arg3[%187, %c0_44, %c0_45], %190 {strides = array<i32>} : memref<9x8x128xbf16, #tpu.memory_space<vmem>>, vector<1x8x128xbf16>,
    %c5_i32 = arith.constant 5 : i32
    %191 = arith.index_cast %c5_i32 : i32 to index
    %c0_46 = arith.constant 0 : index
    %c0_47 = arith.constant 0 : index
    %192 = vector.load %arg1[%191, %c0_46, %c0_47] : memref<9x8x512xbf16, #tpu.memory_space<vmem>>, vector<1x8x512xbf16>
    %193 = vector.shape_cast %192 : vector<1x8x512xbf16> to vector<8x512xbf16>
    %194 = arith.truncf %185 : vector<8x128xf32> to vector<8x128xbf16>
    %cst_48 = arith.constant dense<0.000000e+00> : vector<8x512xf32>
    %195 = tpu.matmul %194, %3, %cst_48 {dimension_numbers = #tpu.dot_dimension_numbers<[1], [0], [0], [1], [0, 0, 1, 1], [], []>} : vector<8x128xbf16>, vector<128x512xbf16>, vector<8x512xf32> -> vector<8x512xf32>
    %196 = arith.extf %193 : vector<8x512xbf16> to vector<8x512xf32>
    %197 = arith.addf %196, %195 : vector<8x512xf32>
    %198 = vector.extract_strided_slice %197 {offsets = [0, 0], sizes = [8, 128], strides = [1, 1]} : vector<8x512xf32> to vector<8x128xf32>
    %199 = arith.negf %198 : vector<8x128xf32>
    %200 = math.exp %199 : vector<8x128xf32>
    %cst_49 = arith.constant 1.000000e+00 : f32
    %201 = vector.broadcast %cst_49 : f32 to vector<8x128xf32>
    %202 = arith.addf %201, %200 : vector<8x128xf32>
    %203 = arith.divf %201, %202 : vector<8x128xf32>
    %204 = vector.extract_strided_slice %197 {offsets = [0, 128], sizes = [8, 128], strides = [1, 1]} : vector<8x512xf32> to vector<8x128xf32>
    %205 = arith.negf %204 : vector<8x128xf32>
    %206 = math.exp %205 : vector<8x128xf32>
    %cst_50 = arith.constant 1.000000e+00 : f32
    %207 = vector.broadcast %cst_50 : f32 to vector<8x128xf32>
    %208 = arith.addf %207, %206 : vector<8x128xf32>
    %209 = arith.divf %207, %208 : vector<8x128xf32>
    %210 = vector.extract_strided_slice %197 {offsets = [0, 256], sizes = [8, 128], strides = [1, 1]} : vector<8x512xf32> to vector<8x128xf32>
    %211 = math.tanh %210 : vector<8x128xf32>
    %212 = vector.extract_strided_slice %197 {offsets = [0, 384], sizes = [8, 128], strides = [1, 1]} : vector<8x512xf32> to vector<8x128xf32>
    %213 = arith.negf %212 : vector<8x128xf32>
    %214 = math.exp %213 : vector<8x128xf32>
    %cst_51 = arith.constant 1.000000e+00 : f32
    %215 = vector.broadcast %cst_51 : f32 to vector<8x128xf32>
    %216 = arith.addf %215, %214 : vector<8x128xf32>
    %217 = arith.divf %215, %216 : vector<8x128xf32>
    %218 = arith.mulf %209, %183 : vector<8x128xf32>
    %219 = arith.mulf %203, %211 : vector<8x128xf32>
    %220 = arith.addf %218, %219 : vector<8x128xf32>
    %221 = math.tanh %220 : vector<8x128xf32>
    %222 = arith.mulf %217, %221 : vector<8x128xf32>
    %223 = arith.truncf %222 : vector<8x128xf32> to vector<8x128xbf16>
    %224 = arith.index_cast %c5_i32 : i32 to index
    %c0_52 = arith.constant 0 : index
    %c0_53 = arith.constant 0 : index
    %225 = vector.load %arg3[%224, %c0_52, %c0_53] : memref<9x8x128xbf16, #tpu.memory_space<vmem>>, vector<1x8x128xbf16>
    %226 = vector.shape_cast %225 : vector<1x8x128xbf16> to vector<8x128xbf16>
    %227 = vector.shape_cast %223 : vector<8x128xbf16> to vector<1x8x128xbf16>
    tpu.vector_store %arg3[%224, %c0_52, %c0_53], %227 {strides = array<i32>} : memref<9x8x128xbf16, #tpu.memory_space<vmem>>, vector<1x8x128xbf16>,
    %c6_i32 = arith.constant 6 : i32
    %228 = arith.index_cast %c6_i32 : i32 to index
    %c0_54 = arith.constant 0 : index
    %c0_55 = arith.constant 0 : index
    %229 = vector.load %arg1[%228, %c0_54, %c0_55] : memref<9x8x512xbf16, #tpu.memory_space<vmem>>, vector<1x8x512xbf16>
    %230 = vector.shape_cast %229 : vector<1x8x512xbf16> to vector<8x512xbf16>
    %231 = arith.truncf %222 : vector<8x128xf32> to vector<8x128xbf16>
    %cst_56 = arith.constant dense<0.000000e+00> : vector<8x512xf32>
    %232 = tpu.matmul %231, %3, %cst_56 {dimension_numbers = #tpu.dot_dimension_numbers<[1], [0], [0], [1], [0, 0, 1, 1], [], []>} : vector<8x128xbf16>, vector<128x512xbf16>, vector<8x512xf32> -> vector<8x512xf32>
    %233 = arith.extf %230 : vector<8x512xbf16> to vector<8x512xf32>
    %234 = arith.addf %233, %232 : vector<8x512xf32>
    %235 = vector.extract_strided_slice %234 {offsets = [0, 0], sizes = [8, 128], strides = [1, 1]} : vector<8x512xf32> to vector<8x128xf32>
    %236 = arith.negf %235 : vector<8x128xf32>
    %237 = math.exp %236 : vector<8x128xf32>
    %cst_57 = arith.constant 1.000000e+00 : f32
    %238 = vector.broadcast %cst_57 : f32 to vector<8x128xf32>
    %239 = arith.addf %238, %237 : vector<8x128xf32>
    %240 = arith.divf %238, %239 : vector<8x128xf32>
    %241 = vector.extract_strided_slice %234 {offsets = [0, 128], sizes = [8, 128], strides = [1, 1]} : vector<8x512xf32> to vector<8x128xf32>
    %242 = arith.negf %241 : vector<8x128xf32>
    %243 = math.exp %242 : vector<8x128xf32>
    %cst_58 = arith.constant 1.000000e+00 : f32
    %244 = vector.broadcast %cst_58 : f32 to vector<8x128xf32>
    %245 = arith.addf %244, %243 : vector<8x128xf32>
    %246 = arith.divf %244, %245 : vector<8x128xf32>
    %247 = vector.extract_strided_slice %234 {offsets = [0, 256], sizes = [8, 128], strides = [1, 1]} : vector<8x512xf32> to vector<8x128xf32>
    %248 = math.tanh %247 : vector<8x128xf32>
    %249 = vector.extract_strided_slice %234 {offsets = [0, 384], sizes = [8, 128], strides = [1, 1]} : vector<8x512xf32> to vector<8x128xf32>
    %250 = arith.negf %249 : vector<8x128xf32>
    %251 = math.exp %250 : vector<8x128xf32>
    %cst_59 = arith.constant 1.000000e+00 : f32
    %252 = vector.broadcast %cst_59 : f32 to vector<8x128xf32>
    %253 = arith.addf %252, %251 : vector<8x128xf32>
    %254 = arith.divf %252, %253 : vector<8x128xf32>
    %255 = arith.mulf %246, %220 : vector<8x128xf32>
    %256 = arith.mulf %240, %248 : vector<8x128xf32>
    %257 = arith.addf %255, %256 : vector<8x128xf32>
    %258 = math.tanh %257 : vector<8x128xf32>
    %259 = arith.mulf %254, %258 : vector<8x128xf32>
    %260 = arith.truncf %259 : vector<8x128xf32> to vector<8x128xbf16>
    %261 = arith.index_cast %c6_i32 : i32 to index
    %c0_60 = arith.constant 0 : index
    %c0_61 = arith.constant 0 : index
    %262 = vector.load %arg3[%261, %c0_60, %c0_61] : memref<9x8x128xbf16, #tpu.memory_space<vmem>>, vector<1x8x128xbf16>
    %263 = vector.shape_cast %262 : vector<1x8x128xbf16> to vector<8x128xbf16>
    %264 = vector.shape_cast %260 : vector<8x128xbf16> to vector<1x8x128xbf16>
    tpu.vector_store %arg3[%261, %c0_60, %c0_61], %264 {strides = array<i32>} : memref<9x8x128xbf16, #tpu.memory_space<vmem>>, vector<1x8x128xbf16>,
    %c7_i32 = arith.constant 7 : i32
    %265 = arith.index_cast %c7_i32 : i32 to index
    %c0_62 = arith.constant 0 : index
    %c0_63 = arith.constant 0 : index
    %266 = vector.load %arg1[%265, %c0_62, %c0_63] : memref<9x8x512xbf16, #tpu.memory_space<vmem>>, vector<1x8x512xbf16>
    %267 = vector.shape_cast %266 : vector<1x8x512xbf16> to vector<8x512xbf16>
    %268 = arith.truncf %259 : vector<8x128xf32> to vector<8x128xbf16>
    %cst_64 = arith.constant dense<0.000000e+00> : vector<8x512xf32>
    %269 = tpu.matmul %268, %3, %cst_64 {dimension_numbers = #tpu.dot_dimension_numbers<[1], [0], [0], [1], [0, 0, 1, 1], [], []>} : vector<8x128xbf16>, vector<128x512xbf16>, vector<8x512xf32> -> vector<8x512xf32>
    %270 = arith.extf %267 : vector<8x512xbf16> to vector<8x512xf32>
    %271 = arith.addf %270, %269 : vector<8x512xf32>
    %272 = vector.extract_strided_slice %271 {offsets = [0, 0], sizes = [8, 128], strides = [1, 1]} : vector<8x512xf32> to vector<8x128xf32>
    %273 = arith.negf %272 : vector<8x128xf32>
    %274 = math.exp %273 : vector<8x128xf32>
    %cst_65 = arith.constant 1.000000e+00 : f32
    %275 = vector.broadcast %cst_65 : f32 to vector<8x128xf32>
    %276 = arith.addf %275, %274 : vector<8x128xf32>
    %277 = arith.divf %275, %276 : vector<8x128xf32>
    %278 = vector.extract_strided_slice %271 {offsets = [0, 128], sizes = [8, 128], strides = [1, 1]} : vector<8x512xf32> to vector<8x128xf32>
    %279 = arith.negf %278 : vector<8x128xf32>
    %280 = math.exp %279 : vector<8x128xf32>
    %cst_66 = arith.constant 1.000000e+00 : f32
    %281 = vector.broadcast %cst_66 : f32 to vector<8x128xf32>
    %282 = arith.addf %281, %280 : vector<8x128xf32>
    %283 = arith.divf %281, %282 : vector<8x128xf32>
    %284 = vector.extract_strided_slice %271 {offsets = [0, 256], sizes = [8, 128], strides = [1, 1]} : vector<8x512xf32> to vector<8x128xf32>
    %285 = math.tanh %284 : vector<8x128xf32>
    %286 = vector.extract_strided_slice %271 {offsets = [0, 384], sizes = [8, 128], strides = [1, 1]} : vector<8x512xf32> to vector<8x128xf32>
    %287 = arith.negf %286 : vector<8x128xf32>
    %288 = math.exp %287 : vector<8x128xf32>
    %cst_67 = arith.constant 1.000000e+00 : f32
    %289 = vector.broadcast %cst_67 : f32 to vector<8x128xf32>
    %290 = arith.addf %289, %288 : vector<8x128xf32>
    %291 = arith.divf %289, %290 : vector<8x128xf32>
    %292 = arith.mulf %283, %257 : vector<8x128xf32>
    %293 = arith.mulf %277, %285 : vector<8x128xf32>
    %294 = arith.addf %292, %293 : vector<8x128xf32>
    %295 = math.tanh %294 : vector<8x128xf32>
    %296 = arith.mulf %291, %295 : vector<8x128xf32>
    %297 = arith.truncf %296 : vector<8x128xf32> to vector<8x128xbf16>
    %298 = arith.index_cast %c7_i32 : i32 to index
    %c0_68 = arith.constant 0 : index
    %c0_69 = arith.constant 0 : index
    %299 = vector.load %arg3[%298, %c0_68, %c0_69] : memref<9x8x128xbf16, #tpu.memory_space<vmem>>, vector<1x8x128xbf16>
    %300 = vector.shape_cast %299 : vector<1x8x128xbf16> to vector<8x128xbf16>
    %301 = vector.shape_cast %297 : vector<8x128xbf16> to vector<1x8x128xbf16>
    tpu.vector_store %arg3[%298, %c0_68, %c0_69], %301 {strides = array<i32>} : memref<9x8x128xbf16, #tpu.memory_space<vmem>>, vector<1x8x128xbf16>,
    %c8_i32 = arith.constant 8 : i32
    %302 = arith.index_cast %c8_i32 : i32 to index
    %c0_70 = arith.constant 0 : index
    %c0_71 = arith.constant 0 : index
    %303 = vector.load %arg1[%302, %c0_70, %c0_71] : memref<9x8x512xbf16, #tpu.memory_space<vmem>>, vector<1x8x512xbf16>
    %304 = vector.shape_cast %303 : vector<1x8x512xbf16> to vector<8x512xbf16>
    %305 = arith.truncf %296 : vector<8x128xf32> to vector<8x128xbf16>
    %cst_72 = arith.constant dense<0.000000e+00> : vector<8x512xf32>
    %306 = tpu.matmul %305, %3, %cst_72 {dimension_numbers = #tpu.dot_dimension_numbers<[1], [0], [0], [1], [0, 0, 1, 1], [], []>} : vector<8x128xbf16>, vector<128x512xbf16>, vector<8x512xf32> -> vector<8x512xf32>
    %307 = arith.extf %304 : vector<8x512xbf16> to vector<8x512xf32>
    %308 = arith.addf %307, %306 : vector<8x512xf32>
    %309 = vector.extract_strided_slice %308 {offsets = [0, 0], sizes = [8, 128], strides = [1, 1]} : vector<8x512xf32> to vector<8x128xf32>
    %310 = arith.negf %309 : vector<8x128xf32>
    %311 = math.exp %310 : vector<8x128xf32>
    %cst_73 = arith.constant 1.000000e+00 : f32
    %312 = vector.broadcast %cst_73 : f32 to vector<8x128xf32>
    %313 = arith.addf %312, %311 : vector<8x128xf32>
    %314 = arith.divf %312, %313 : vector<8x128xf32>
    %315 = vector.extract_strided_slice %308 {offsets = [0, 128], sizes = [8, 128], strides = [1, 1]} : vector<8x512xf32> to vector<8x128xf32>
    %316 = arith.negf %315 : vector<8x128xf32>
    %317 = math.exp %316 : vector<8x128xf32>
    %cst_74 = arith.constant 1.000000e+00 : f32
    %318 = vector.broadcast %cst_74 : f32 to vector<8x128xf32>
    %319 = arith.addf %318, %317 : vector<8x128xf32>
    %320 = arith.divf %318, %319 : vector<8x128xf32>
    %321 = vector.extract_strided_slice %308 {offsets = [0, 256], sizes = [8, 128], strides = [1, 1]} : vector<8x512xf32> to vector<8x128xf32>
    %322 = math.tanh %321 : vector<8x128xf32>
    %323 = vector.extract_strided_slice %308 {offsets = [0, 384], sizes = [8, 128], strides = [1, 1]} : vector<8x512xf32> to vector<8x128xf32>
    %324 = arith.negf %323 : vector<8x128xf32>
    %325 = math.exp %324 : vector<8x128xf32>
    %cst_75 = arith.constant 1.000000e+00 : f32
    %326 = vector.broadcast %cst_75 : f32 to vector<8x128xf32>
    %327 = arith.addf %326, %325 : vector<8x128xf32>
    %328 = arith.divf %326, %327 : vector<8x128xf32>
    %329 = arith.mulf %320, %294 : vector<8x128xf32>
    %330 = arith.mulf %314, %322 : vector<8x128xf32>
    %331 = arith.addf %329, %330 : vector<8x128xf32>
    %332 = math.tanh %331 : vector<8x128xf32>
    %333 = arith.mulf %328, %332 : vector<8x128xf32>
    %334 = arith.truncf %333 : vector<8x128xf32> to vector<8x128xbf16>
    %335 = arith.index_cast %c8_i32 : i32 to index
    %c0_76 = arith.constant 0 : index
    %c0_77 = arith.constant 0 : index
    %336 = vector.load %arg3[%335, %c0_76, %c0_77] : memref<9x8x128xbf16, #tpu.memory_space<vmem>>, vector<1x8x128xbf16>
    %337 = vector.shape_cast %336 : vector<1x8x128xbf16> to vector<8x128xbf16>
    %338 = vector.shape_cast %334 : vector<8x128xbf16> to vector<1x8x128xbf16>
    tpu.vector_store %arg3[%335, %c0_76, %c0_77], %338 {strides = array<i32>} : memref<9x8x128xbf16, #tpu.memory_space<vmem>>, vector<1x8x128xbf16>,
    %c9_i32 = arith.constant 9 : i32
    %c0_78 = arith.constant 0 : index
    %c0_79 = arith.constant 0 : index
    %339 = vector.load %arg4[%c0_78, %c0_79] : memref<8x128xf32, #tpu.memory_space<vmem>>, vector<8x128xf32>
    tpu.vector_store %arg4[%c0_78, %c0_79], %333 {strides = array<i32>} : memref<8x128xf32, #tpu.memory_space<vmem>>, vector<8x128xf32>,
    %c0_80 = arith.constant 0 : index
    %c0_81 = arith.constant 0 : index
    %340 = vector.load %arg5[%c0_80, %c0_81] : memref<8x128xf32, #tpu.memory_space<vmem>>, vector<8x128xf32>
    tpu.vector_store %arg5[%c0_80, %c0_81], %331 {strides = array<i32>} : memref<8x128xf32, #tpu.memory_space<vmem>>, vector<8x128xf32>,
    return
  }
  func.func @transform_0(%arg0: i32) -> (i32, i32, i32) {
    %c0_i32 = arith.constant 0 : i32
    %c0_i32_0 = arith.constant 0 : i32
    %c0_i32_1 = arith.constant 0 : i32
    return %arg0, %c0_i32, %c0_i32_0 : i32, i32, i32
  }
  func.func @transform_1(%arg0: i32) -> (i32, i32) {
    %c0_i32 = arith.constant 0 : i32
    %c0_i32_0 = arith.constant 0 : i32
    %c0_i32_1 = arith.constant 0 : i32
    return %c0_i32, %c0_i32_0 : i32, i32
  }
  func.func @transform_2(%arg0: i32) -> (i32, i32, i32) {
    %c0_i32 = arith.constant 0 : i32
    %c0_i32_0 = arith.constant 0 : i32
    %c0_i32_1 = arith.constant 0 : i32
    return %arg0, %c0_i32, %c0_i32_0 : i32, i32, i32
  }
}

</mosaic_0001>

<llo_original>
// kernel: decoder_rnn_forward.9
$region0: #{decoder_rnn_forward.9}
  #allocation0 [shape = 'u32[]', space=smem, size = 0x4, offset = 0x4, fixed_abs, tag = 'smem constant byte address 0x4 - core index']
  #allocation1 [shape = 'u32[144,128]{1,0:T(1,128)}', space=vmem, size = 0x12000, scoped, tag = 'internal scratch']
  #allocation2 [shape = 'f32[72,128]{1,0:T(8,128)}', space=vmem, size = 0x9000, scoped, tag = 'scratch operand']
  %s0 = inlined_call_operand.vmem [shape: bf16[72,128], index: 0, kind: input, shape index: {}]
  %s1 = inlined_call_operand.vmem [shape: bf16[128,128], index: 1, kind: input, shape index: {}]
  %s2 = inlined_call_operand.vmem [shape: f32[1,128], index: 2, kind: input, shape index: {}]
  %s3 = inlined_call_operand.vmem [shape: f32[72,128], index: 3, kind: output, shape index: {}]
  %s4 = sld [smem:[#allocation0]]
  $region30: #{decoder_rnn_forward.9} parent=0
    _
  %s6 = ssub.s32 1, %s4
  %s7 = scalar_select 0, %s6, %s4
  // Predicated region
  $region2: #{decoder_rnn_forward.9} parent=0 // pred_check
    _
  $region3: #{decoder_rnn_forward.9} parent=0 // pred_check_branch
    %9 = sbr.rel (0) target = $region5
  $region4: #{decoder_rnn_forward.9} parent=0 // pred_region
    _
  $region5: #{decoder_rnn_forward.9} parent=0 // pred_fallthru
    _
  // Predicated region
  $region6: #{decoder_rnn_forward.9} parent=0 // pred_check
    _
  $region7: #{decoder_rnn_forward.9} parent=0 // pred_check_branch
    %11 = sbr.rel (0) target = $region9
  $region8: #{decoder_rnn_forward.9} parent=0 // pred_region
    _
  $region9: #{decoder_rnn_forward.9} parent=0 // pred_fallthru
    _
  // Predicated region
  $region10: #{decoder_rnn_forward.9} parent=0 // pred_check
    _
  $region11: #{decoder_rnn_forward.9} parent=0 // pred_check_branch
    %13 = sbr.rel (0) target = $region13
  $region12: #{decoder_rnn_forward.9} parent=0 // pred_region
    _
  $region13: #{decoder_rnn_forward.9} parent=0 // pred_fallthru
    _
  %p15 = scmp.eq.s32.totalorder 0, 0
  // Predicated region
  $region14: #{decoder_rnn_forward.9} parent=0 // pred_check
    %p16 = pneg %p15
  $region15: #{decoder_rnn_forward.9} parent=0 // pred_check_branch
    %18 = sbr.rel (%p16) target = $region17
  $region16: #{decoder_rnn_forward.9} parent=0 // pred_region
    %19 = vst [vmem:[#allocation2] sm:$0xff] 0.0
    %20 = vst [vmem:[#allocation2 + $0x8] sm:$0xff] 0.0
    %21 = vst [vmem:[#allocation2 + $0x10] sm:$0xff] 0.0
    %22 = vst [vmem:[#allocation2 + $0x18] sm:$0xff] 0.0
    %23 = vst [vmem:[#allocation2 + $0x20] sm:$0xff] 0.0
    %24 = vst [vmem:[#allocation2 + $0x28] sm:$0xff] 0.0
    %25 = vst [vmem:[#allocation2 + $0x30] sm:$0xff] 0.0
    %26 = vst [vmem:[#allocation2 + $0x38] sm:$0xff] 0.0
    %27 = vst [vmem:[#allocation2 + $0x40] sm:$0xff] 0.0
  $region17: #{decoder_rnn_forward.9} parent=0 // pred_fallthru
    _
  %v28 = vld [vmem:[#allocation2] sm:$0xff]
  %v29 = vld [vmem:[#allocation2 + $0x8] sm:$0xff]
  %v30 = vld [vmem:[#allocation2 + $0x10] sm:$0xff]
  %v31 = vld [vmem:[#allocation2 + $0x18] sm:$0xff]
  %v32 = vld [vmem:[#allocation2 + $0x20] sm:$0xff]
  %v33 = vld [vmem:[#allocation2 + $0x28] sm:$0xff]
  %v34 = vld [vmem:[#allocation2 + $0x30] sm:$0xff]
  %v35 = vld [vmem:[#allocation2 + $0x38] sm:$0xff]
  %v36 = vld [vmem:[#allocation2 + $0x40] sm:$0xff]
  %v37 = vld [vmem:[%s0] sm:$0xf]
  %v38 = vld [vmem:[%s0 + $0x4] sm:$0xf]
  %v39 = vld [vmem:[%s0 + $0x8] sm:$0xf]
  %v40 = vld [vmem:[%s0 + $0xc] sm:$0xf]
  %v41 = vld [vmem:[%s0 + $0x10] sm:$0xf]
  %v42 = vld [vmem:[%s0 + $0x14] sm:$0xf]
  %v43 = vld [vmem:[%s0 + $0x18] sm:$0xf]
  %v44 = vld [vmem:[%s0 + $0x1c] sm:$0xf]
  %v45 = vld [vmem:[%s0 + $0x20] sm:$0xf]
  %v46 = vld [vmem:[%s1] sm:$0xf]
  %v47 = vld [vmem:[%s1 + $0x4] sm:$0xf]
  %v48 = vld [vmem:[%s1 + $0x8] sm:$0xf]
  %v49 = vld [vmem:[%s1 + $0xc] sm:$0xf]
  %v50 = vld [vmem:[%s1 + $0x10] sm:$0xf]
  %v51 = vld [vmem:[%s1 + $0x14] sm:$0xf]
  %v52 = vld [vmem:[%s1 + $0x18] sm:$0xf]
  %v53 = vld [vmem:[%s1 + $0x1c] sm:$0xf]
  %v54 = vld [vmem:[%s1 + $0x20] sm:$0xf]
  %v55 = vld [vmem:[%s1 + $0x24] sm:$0xf]
  %v56 = vld [vmem:[%s1 + $0x28] sm:$0xf]
  %v57 = vld [vmem:[%s1 + $0x2c] sm:$0xf]
  %v58 = vld [vmem:[%s1 + $0x30] sm:$0xf]
  %v59 = vld [vmem:[%s1 + $0x34] sm:$0xf]
  %v60 = vld [vmem:[%s1 + $0x38] sm:$0xf]
  %v61 = vld [vmem:[%s1 + $0x3c] sm:$0xf]
  %v71 = vunpack.c.l.b16 %v37
  %v72 = vunpack.c.l.b16 %v38
  %v73 = vunpack.c.l.b16 %v39
  %v74 = vunpack.c.l.b16 %v40
  %v75 = vunpack.c.l.b16 %v41
  %v76 = vunpack.c.l.b16 %v42
  %v77 = vunpack.c.l.b16 %v43
  %v78 = vunpack.c.l.b16 %v44
  %v79 = vunpack.c.l.b16 %v45
  %v80 = vpack.c.b16 %v72, %v71
  %v81 = vpack.c.b16 %v74, %v73
  %v82 = vpack.c.b16 %v76, %v75
  %v83 = vpack.c.b16 %v78, %v77
  %v84 = vpack.c.b16 %v79, %v79
  %v106 = vunpack.c.l.b16 %v46
  %v107 = vunpack.c.l.b16 %v47
  %v108 = vunpack.c.l.b16 %v48
  %v109 = vunpack.c.l.b16 %v49
  %v110 = vunpack.c.l.b16 %v50
  %v111 = vunpack.c.l.b16 %v51
  %v112 = vunpack.c.l.b16 %v52
  %v113 = vunpack.c.l.b16 %v53
  %v114 = vunpack.c.l.b16 %v54
  %v115 = vunpack.c.l.b16 %v55
  %v116 = vunpack.c.l.b16 %v56
  %v117 = vunpack.c.l.b16 %v57
  %v118 = vunpack.c.l.b16 %v58
  %v119 = vunpack.c.l.b16 %v59
  %v120 = vunpack.c.l.b16 %v60
  %v121 = vunpack.c.l.b16 %v61
  %v122 = vpack.c.b16 %v107, %v106
  %v123 = vpack.c.b16 %v109, %v108
  %v124 = vpack.c.b16 %v111, %v110
  %v125 = vpack.c.b16 %v113, %v112
  %v126 = vpack.c.b16 %v115, %v114
  %v127 = vpack.c.b16 %v117, %v116
  %v128 = vpack.c.b16 %v119, %v118
  %v129 = vpack.c.b16 %v121, %v120
  %138 = vmatprep.subr.bf16.mxu0 0
  %139 = vmatpush1.bf16.msra.mxu0 %v122
  %140 = vmatprep.subr.bf16.mxu0 0
  %141 = vmatpush1.bf16.msra.mxu0 %v123
  %142 = vmatprep.subr.bf16.mxu0 0
  %143 = vmatpush1.bf16.msra.mxu0 %v124
  %144 = vmatprep.subr.bf16.mxu0 0
  %145 = vmatpush1.bf16.msra.mxu0 %v125
  %146 = vmatprep.subr.bf16.mxu0 0
  %147 = vmatpush1.bf16.msra.mxu0 %v126
  %148 = vmatprep.subr.bf16.mxu0 0
  %149 = vmatpush1.bf16.msra.mxu0 %v127
  %150 = vmatprep.subr.bf16.mxu0 0
  %151 = vmatpush1.bf16.msra.mxu0 %v128
  %152 = vmatprep.subr.bf16.mxu0 0
  %153 = vmatpush1.bf16.msra.mxu0 %v129
  %154 = vmatprep.subr.bf16.mxu0 0
  %155 = vmatpush1.bf16.msra.mxu0 0
  %156 = vmatprep.subr.bf16.mxu0 0
  %157 = vmatpush1.bf16.msra.mxu0 0
  %158 = vmatprep.subr.bf16.mxu0 0
  %159 = vmatpush1.bf16.msra.mxu0 0
  %160 = vmatprep.subr.bf16.mxu0 0
  %161 = vmatpush1.bf16.msra.mxu0 0
  %162 = vmatprep.subr.bf16.mxu0 0
  %163 = vmatpush1.bf16.msra.mxu0 0
  %164 = vmatprep.subr.bf16.mxu0 0
  %165 = vmatpush1.bf16.msra.mxu0 0
  %166 = vmatprep.subr.bf16.mxu0 0
  %167 = vmatpush1.bf16.msra.mxu0 0
  %168 = vmatprep.subr.bf16.mxu0 0
  %169 = vmatpush1.bf16.msra.mxu0 0
  %170 = vmatprep.mubr.bf16.mxu0 0
  %171 = vmatmul.mubr.bf16.gmra.mrb[0].mxu0 %v80
  %v172 = vpop.f32.mrb[0].mxu0
  %v173 = vadd.f32 0.0, %v172
  %v174 = vpop.f32.mrb[0].mxu0
  %v175 = vpop.f32.mrb[0].mxu0
  %v176 = vadd.f32 0.0, %v175
  %v177 = vpop.f32.mrb[0].mxu0
  %178 = vmatprep.mubr.bf16.mxu0 0
  %179 = vmatmul.mubr.bf16.gmra.mrb[0].mxu0 %v81
  %v180 = vpop.f32.mrb[0].mxu0
  %v181 = vadd.f32 0.0, %v180
  %v182 = vpop.f32.mrb[0].mxu0
  %v183 = vpop.f32.mrb[0].mxu0
  %v184 = vadd.f32 0.0, %v183
  %v185 = vpop.f32.mrb[0].mxu0
  %186 = vmatprep.mubr.bf16.mxu0 0
  %187 = vmatmul.mubr.bf16.gmra.mrb[0].mxu0 %v82
  %v188 = vpop.f32.mrb[0].mxu0
  %v189 = vadd.f32 0.0, %v188
  %v190 = vpop.f32.mrb[0].mxu0
  %v191 = vpop.f32.mrb[0].mxu0
  %v192 = vadd.f32 0.0, %v191
  %v193 = vpop.f32.mrb[0].mxu0
  %194 = vmatprep.mubr.bf16.mxu0 0
  %195 = vmatmul.mubr.bf16.gmra.mrb[0].mxu0 %v83
  %v196 = vpop.f32.mrb[0].mxu0
  %v197 = vadd.f32 0.0, %v196
  %v198 = vpop.f32.mrb[0].mxu0
  %v199 = vpop.f32.mrb[0].mxu0
  %v200 = vadd.f32 0.0, %v199
  %v201 = vpop.f32.mrb[0].mxu0
  %202 = vmatprep.mubr.bf16.mxu0 0
  %203 = vmatmul.mubr.bf16.gmra.mrb[0].mxu0 %v84
  %v204 = vpop.f32.mrb[0].mxu0
  %v205 = vadd.f32 0.0, %v204
  %v206 = vpop.f32.mrb[0].mxu0
  %v207 = vpop.f32.mrb[0].mxu0
  %v208 = vpop.f32.mrb[0].mxu0
  %209 = vdwg.mxu0
  %v210 = vadd.f32 %v28, %v173
  %v211 = vadd.f32 %v29, %v176
  %v212 = vadd.f32 %v30, %v181
  %v213 = vadd.f32 %v31, %v184
  %v214 = vadd.f32 %v32, %v189
  %v215 = vadd.f32 %v33, %v192
  %v216 = vadd.f32 %v34, %v197
  %v217 = vadd.f32 %v35, %v200
  %v218 = vadd.f32 %v36, %v205
  %219 = vst [vmem:[#allocation2] sm:$0xff] %v210
  %220 = vst [vmem:[#allocation2 + $0x8] sm:$0xff] %v211
  %221 = vst [vmem:[#allocation2 + $0x10] sm:$0xff] %v212
  %222 = vst [vmem:[#allocation2 + $0x18] sm:$0xff] %v213
  %223 = vst [vmem:[#allocation2 + $0x20] sm:$0xff] %v214
  %224 = vst [vmem:[#allocation2 + $0x28] sm:$0xff] %v215
  %225 = vst [vmem:[#allocation2 + $0x30] sm:$0xff] %v216
  %226 = vst [vmem:[#allocation2 + $0x38] sm:$0xff] %v217
  %227 = vst [vmem:[#allocation2 + $0x40] sm:$0xff] %v218
  // Predicated region
  $region18: #{decoder_rnn_forward.9} parent=0 // pred_check
    %p228 = pneg %p15
  $region19: #{decoder_rnn_forward.9} parent=0 // pred_check_branch
    %230 = sbr.rel (%p228) target = $region21
  $region20: #{decoder_rnn_forward.9} parent=0 // pred_region
    %v231 = vld [vmem:[#allocation2] sm:$0xff]
    %v232 = vld [vmem:[#allocation2 + $0x8] sm:$0xff]
    %v233 = vld [vmem:[#allocation2 + $0x10] sm:$0xff]
    %v234 = vld [vmem:[#allocation2 + $0x18] sm:$0xff]
    %v235 = vld [vmem:[#allocation2 + $0x20] sm:$0xff]
    %v236 = vld [vmem:[#allocation2 + $0x28] sm:$0xff]
    %v237 = vld [vmem:[#allocation2 + $0x30] sm:$0xff]
    %v238 = vld [vmem:[#allocation2 + $0x38] sm:$0xff]
    %v239 = vld [vmem:[#allocation2 + $0x40] sm:$0xff]
    %v240 = vld [vmem:[%s2] sm:$0x1]
    %v242 = vlaneseq
    %v243 = vshrl.u32 %v242, 7
    %v244 = vsub.s32 0, %v243
    %v245 = vrot.slane %v240, %v244
    %v247 = vadd.f32 %v231, %v245
    %v248 = vadd.f32 %v232, %v245
    %v249 = vadd.f32 %v233, %v245
    %v250 = vadd.f32 %v234, %v245
    %v251 = vadd.f32 %v235, %v245
    %v252 = vadd.f32 %v236, %v245
    %v253 = vadd.f32 %v237, %v245
    %v254 = vadd.f32 %v238, %v245
    %v255 = vadd.f32 %v239, %v245
    %256 = vst [vmem:[%s3] sm:$0xff] %v247
    %257 = vst [vmem:[%s3 + $0x8] sm:$0xff] %v248
    %258 = vst [vmem:[%s3 + $0x10] sm:$0xff] %v249
    %259 = vst [vmem:[%s3 + $0x18] sm:$0xff] %v250
    %260 = vst [vmem:[%s3 + $0x20] sm:$0xff] %v251
    %261 = vst [vmem:[%s3 + $0x28] sm:$0xff] %v252
    %262 = vst [vmem:[%s3 + $0x30] sm:$0xff] %v253
    %263 = vst [vmem:[%s3 + $0x38] sm:$0xff] %v254
    %264 = vst [vmem:[%s3 + $0x40] sm:$0xff] %v255
  $region21: #{decoder_rnn_forward.9} parent=0 // pred_fallthru
    _
  // Predicated region
  $region22: #{decoder_rnn_forward.9} parent=0 // pred_check
    _
  $region23: #{decoder_rnn_forward.9} parent=0 // pred_check_branch
    %266 = sbr.rel (0) target = $region25
  $region24: #{decoder_rnn_forward.9} parent=0 // pred_region
    _
  $region25: #{decoder_rnn_forward.9} parent=0 // pred_fallthru
    _
  // Predicated region
  $region26: #{decoder_rnn_forward.9} parent=0 // pred_check
    _
  $region27: #{decoder_rnn_forward.9} parent=0 // pred_check_branch
    %268 = sbr.rel (0) target = $region29
  $region28: #{decoder_rnn_forward.9} parent=0 // pred_region
    _
  $region29: #{decoder_rnn_forward.9} parent=0 // pred_fallthru
    _

// kernel: decoder_rnn_forward.5
$region0: #{decoder_rnn_forward.5}
  #allocation0 [shape = 'u32[]', space=smem, size = 0x4, offset = 0x4, fixed_abs, tag = 'smem constant byte address 0x4 - core index']
  #allocation1 [shape = 'u32[144,128]{1,0:T(1,128)}', space=vmem, size = 0x12000, scoped, tag = 'internal scratch']
  #allocation2 [shape = 'f32[72,256]{1,0:T(8,128)}', space=vmem, size = 0x12000, scoped, tag = 'scratch operand']
  %s0 = inlined_call_operand.vmem [shape: bf16[72,128], index: 0, kind: input, shape index: {}]
  %s1 = inlined_call_operand.vmem [shape: bf16[128,512], index: 1, kind: input, shape index: {}]
  %s2 = inlined_call_operand.vmem [shape: f32[1,512], index: 2, kind: input, shape index: {}]
  %s3 = inlined_call_operand.vmem [shape: bf16[72,512], index: 3, kind: output, shape index: {}]
  %s4 = sld [smem:[#allocation0]]
  $region125: #{decoder_rnn_forward.5} parent=0
    _
  %s6 = ssub.s32 1, %s4
  %s7 = scalar_select 0, %s6, %s4
  $region1: #{decoder_rnn_forward.5} parent=0
    #allocation3 [shape = 'u8[131072]{0}', space=vmem, size = 0x20000, scoped, tag = 'input window, operand 1']
    #allocation4 [shape = 'u8[73728]{0}', space=vmem, size = 0x12000, scoped, tag = 'output window, operand 0']
    loop: start=0, step=1, limit=4
    $region2: #{decoder_rnn_forward.5} parent=1 // loop_pre_header
      _
    $region3: #{decoder_rnn_forward.5} parent=1 // loop_header
      %s9 = sphi 0, %s13
      %p10 = scmp.ge.s32.totalorder %s9, 4
      %s16 = sphi 0, %s35
      %s17 = sphi 0, %s31
      %s18 = sphi 0, %s27
      %s19 = sphi 0, %s16
      %s20 = sphi 0, %s17
      %s21 = sphi 0, %s18
      %s22 = sphi 0, %s19
      %s23 = sphi 0, %s20
      %s24 = sphi 0, %s21
      %s40 = sphi 0, %s42
      %s43 = sphi 0, %s40
      %s44 = sphi 0, %s43
      %s60 = sphi 0, %s44
      %s68 = sphi 0, %s70
      %s71 = sphi 0, %s68
      %s72 = sphi 0, %s71
      %s88 = sphi 0, %s72
      %s94 = sphi 0, %s96
      %s97 = sphi 0, %s94
      %s98 = sphi 0, %s97
      %s114 = sphi 0, %s98
      %s122 = sphi 0, %s124
      %s125 = sphi 0, %s122
      %s126 = sphi 0, %s125
      %s142 = sphi 0, %s126
    $region4: #{decoder_rnn_forward.5} parent=1 // loop_header_branch
      %12 = sbr.rel (%p10) target = $region8
    $region5: #{decoder_rnn_forward.5} parent=1 // loop_body
      %s14 = ssub.s32 %s9, 1
      %s15 = ssub.s32 %s9, 2
      %s25 = sadd.s32 1, %s18
      %p26 = scmp.ge.s32.totalorder %s25, 1
      %s27 = scalar_select %p26, 0, %s25
      %s28 = sadd.s32 1, %s17
      %s29 = scalar_select %p26, %s28, %s17
      %p30 = scmp.ge.s32.totalorder %s29, 2
      %s31 = scalar_select %p30, 0, %s29
      %s32 = sadd.s32 1, %s16
      %s33 = scalar_select %p30, %s32, %s16
      %p34 = scmp.ge.s32.totalorder %s33, 1
      %s35 = scalar_select %p34, 0, %s33
      %s36 = ssub.s32 %s16, %s35
      %s37 = ssub.s32 %s18, %s27
      %s38 = sor.u32 %s36, %s37
      %p39 = scmp.eq.s32.totalorder %s38, 0
      %s41 = sadd.s32 %s40, 1
      %s42 = scalar_select %p39, %s40, %s41
      %p45 = pneg %p39
      %p46 = scmp.eq.s32.totalorder %s9, 1
      %p47 = por %p45, %p46
      %p48 = scmp.ne.s32.totalorder %s40, %s43
      %p49 = scmp.eq.s32.totalorder %s9, 0
      %p50 = por %p48, %p49
      %p51 = scmp.ne.s32.totalorder %s40, %s43
      %p52 = scmp.eq.s32.totalorder %s14, 1
      %p53 = por %p51, %p52
      %p54 = scmp.ne.s32.totalorder %s43, %s44
      %p55 = scmp.eq.s32.totalorder %s14, 0
      %p56 = por %p54, %p55
      %p57 = scmp.ne.s32.totalorder %s43, %s44
      %p58 = scmp.eq.s32.totalorder %s15, 1
      %p59 = por %p57, %p58
      %p61 = scmp.ne.s32.totalorder %s44, %s60
      %p62 = scmp.eq.s32.totalorder %s15, 0
      %p63 = por %p61, %p62
      %s64 = ssub.s32 %s18, %s27
      %s65 = ssub.s32 %s17, %s31
      %s66 = sor.u32 %s64, %s65
      %p67 = scmp.eq.s32.totalorder %s66, 0
      %s69 = sadd.s32 %s68, 1
      %s70 = scalar_select %p67, %s68, %s69
      %p73 = pneg %p67
      %p74 = scmp.eq.s32.totalorder %s9, 1
      %p75 = por %p73, %p74
      %p76 = scmp.ne.s32.totalorder %s68, %s71
      %p77 = scmp.eq.s32.totalorder %s9, 0
      %p78 = por %p76, %p77
      %p79 = scmp.ne.s32.totalorder %s68, %s71
      %p80 = scmp.eq.s32.totalorder %s14, 1
      %p81 = por %p79, %p80
      %p82 = scmp.ne.s32.totalorder %s71, %s72
      %p83 = scmp.eq.s32.totalorder %s14, 0
      %p84 = por %p82, %p83
      %p85 = scmp.ne.s32.totalorder %s71, %s72
      %p86 = scmp.eq.s32.totalorder %s15, 1
      %p87 = por %p85, %p86
      %p89 = scmp.ne.s32.totalorder %s72, %s88
      %p90 = scmp.eq.s32.totalorder %s15, 0
      %p91 = por %p89, %p90
      %s92 = ssub.s32 %s17, %s31
      %p93 = scmp.eq.s32.totalorder %s92, 0
      %s95 = sadd.s32 %s94, 1
      %s96 = scalar_select %p93, %s94, %s95
      %p99 = pneg %p93
      %p100 = scmp.eq.s32.totalorder %s9, 1
      %p101 = por %p99, %p100
      %p102 = scmp.ne.s32.totalorder %s94, %s97
      %p103 = scmp.eq.s32.totalorder %s9, 0
      %p104 = por %p102, %p103
      %p105 = scmp.ne.s32.totalorder %s94, %s97
      %p106 = scmp.eq.s32.totalorder %s14, 1
      %p107 = por %p105, %p106
      %p108 = scmp.ne.s32.totalorder %s97, %s98
      %p109 = scmp.eq.s32.totalorder %s14, 0
      %p110 = por %p108, %p109
      %p111 = scmp.ne.s32.totalorder %s97, %s98
      %p112 = scmp.eq.s32.totalorder %s15, 1
      %p113 = por %p111, %p112
      %p115 = scmp.ne.s32.totalorder %s98, %s114
      %p116 = scmp.eq.s32.totalorder %s15, 0
      %p117 = por %p115, %p116
      %s118 = ssub.s32 %s16, %s35
      %s119 = ssub.s32 %s17, %s31
      %s120 = sor.u32 %s118, %s119
      %p121 = scmp.eq.s32.totalorder %s120, 0
      %s123 = sadd.s32 %s122, 1
      %s124 = scalar_select %p121, %s122, %s123
      %p127 = pneg %p121
      %p128 = scmp.eq.s32.totalorder %s9, 1
      %p129 = por %p127, %p128
      %p130 = scmp.ne.s32.totalorder %s122, %s125
      %p131 = scmp.eq.s32.totalorder %s9, 0
      %p132 = por %p130, %p131
      %p133 = scmp.ne.s32.totalorder %s122, %s125
      %p134 = scmp.eq.s32.totalorder %s14, 1
      %p135 = por %p133, %p134
      %p136 = scmp.ne.s32.totalorder %s125, %s126
      %p137 = scmp.eq.s32.totalorder %s14, 0
      %p138 = por %p136, %p137
      %p139 = scmp.ne.s32.totalorder %s125, %s126
      %p140 = scmp.eq.s32.totalorder %s15, 1
      %p141 = por %p139, %p140
      %p143 = scmp.ne.s32.totalorder %s126, %s142
      %p144 = scmp.eq.s32.totalorder %s15, 0
      %p145 = por %p143, %p144
      %p146 = scmp.le.s32.totalorder 1, %s9
      %p147 = scmp.lt.s32.totalorder %s9, 3
      %p148 = pnand %p146, %p147
      %p149 = pneg %p148
      // Predicated region
      $region9: #{decoder_rnn_forward.5} parent=5 // pred_check
        _
      $region10: #{decoder_rnn_forward.5} parent=5 // pred_check_branch
        %151 = sbr.rel (%p148) target = $region12
      $region11: #{decoder_rnn_forward.5} parent=5 // pred_region
        %s152 = ssub.s32 %s9, 1
        // Predicated region
        $region13: #{decoder_rnn_forward.5} parent=11 // pred_check
          %p153 = pneg %p56
        $region14: #{decoder_rnn_forward.5} parent=11 // pred_check_branch
          %155 = sbr.rel (%p153) target = $region16
        $region15: #{decoder_rnn_forward.5} parent=11 // pred_region
          %s156 = smul.u32 9, %s19
          %p157 = scmp.lt.s32.totalorder %s156, 8
          %s158 = scalar_select %p157, %s156, 8
          %p159 = scmp.lt.s32.totalorder %s21, 0
          %s160 = scalar_select %p159, %s21, 0
          %s161 = sadd.s32 %s160, %s158
          %s162 = smul.addr %s161, 4
          %s163 = scalar_lea.vmem %s0, %s162
          %s164 = smul.u32 9, %s19
        $region16: #{decoder_rnn_forward.5} parent=11 // pred_fallthru
          _
      $region12: #{decoder_rnn_forward.5} parent=5 // pred_fallthru
        _
      %p165 = scmp.lt.s32.totalorder %s9, 2
      // Predicated region
      $region17: #{decoder_rnn_forward.5} parent=5 // pred_check
        %p166 = pneg %p165
      $region18: #{decoder_rnn_forward.5} parent=5 // pred_check_branch
        %168 = sbr.rel (%p166) target = $region20
      $region19: #{decoder_rnn_forward.5} parent=5 // pred_region
        // Predicated region
        $region21: #{decoder_rnn_forward.5} parent=19 // pred_check
          %p169 = pneg %p78
        $region22: #{decoder_rnn_forward.5} parent=19 // pred_check_branch
          %171 = sbr.rel (%p169) target = $region24
        $region23: #{decoder_rnn_forward.5} parent=19 // pred_region
          %s172 = sand.u32 %s68, 1
          %s173 = sand.u32 %s68, 1
          %s174 = smul.addr %s173, 128
          %s175 = scalar_lea.vmem [#allocation3], %s174
          %s176 = smul.u32 16, %s18
          %s177 = smul.u32 2, %s17
          %s178 = smul.addr %s176, 4
          %s179 = sadd.s32 %s177, %s178
          %s180 = smul.addr %s179, 4
          %s181 = scalar_lea.vmem %s1, %s180
          // Predicated region
          $region25: #{decoder_rnn_forward.5} parent=23 // pred_check
            _
          $region26: #{decoder_rnn_forward.5} parent=23 // pred_check_branch
            %183 = sbr.rel (0) target = $region28
          $region27: #{decoder_rnn_forward.5} parent=23 // pred_region
            // Predicated region
            $region29: #{decoder_rnn_forward.5} parent=27 // pred_check
              _
            $region30: #{decoder_rnn_forward.5} parent=27 // pred_check_branch
              %185 = sbr.rel (0) target = $region32
            $region31: #{decoder_rnn_forward.5} parent=27 // pred_region
              // Predicated region
              $region44: #{decoder_rnn_forward.5} parent=31 // pred_check
                _
              $region45: #{decoder_rnn_forward.5} parent=31 // pred_check_branch
                %230 = sbr.rel (0) target = $region47
              $region46: #{decoder_rnn_forward.5} parent=31 // pred_region
                loop: start=0, step=1, limit=1
                $region48: #{decoder_rnn_forward.5} parent=46 // loop_pre_header
                  _
                $region49: #{decoder_rnn_forward.5} parent=46 // loop_header
                  %s232 = sphi 0, %s236
                  %p233 = scmp.ge.s32.totalorder %s232, 1
                  %s237 = sphi %s181, %s181
                  %s238 = sphi %s175, %s175
                $region50: #{decoder_rnn_forward.5} parent=46 // loop_header_branch
                  %235 = sbr.rel (%p233) target = $region54
                $region51: #{decoder_rnn_forward.5} parent=46 // loop_body
                  %v239 = vld [vmem:[%s237] sm:$0xff]
                  %240 = vst [vmem:[%s238] sm:$0xff] %v239
                  %v241 = vld [vmem:[%s237 + $0x10] sm:$0xff]
                  %242 = vst [vmem:[%s238 + $0x8] sm:$0xff] %v241
                  %v243 = vld [vmem:[%s237 + $0x20] sm:$0xff]
                  %244 = vst [vmem:[%s238 + $0x10] sm:$0xff] %v243
                  %v245 = vld [vmem:[%s237 + $0x30] sm:$0xff]
                  %246 = vst [vmem:[%s238 + $0x18] sm:$0xff] %v245
                  %v247 = vld [vmem:[%s237 + $0x40] sm:$0xff]
                  %248 = vst [vmem:[%s238 + $0x20] sm:$0xff] %v247
                  %v249 = vld [vmem:[%s237 + $0x50] sm:$0xff]
                  %250 = vst [vmem:[%s238 + $0x28] sm:$0xff] %v249
                  %v251 = vld [vmem:[%s237 + $0x60] sm:$0xff]
                  %252 = vst [vmem:[%s238 + $0x30] sm:$0xff] %v251
                  %v253 = vld [vmem:[%s237 + $0x70] sm:$0xff]
                  %254 = vst [vmem:[%s238 + $0x38] sm:$0xff] %v253
                  %v255 = vld [vmem:[%s237 + $0x80] sm:$0xff]
                  %256 = vst [vmem:[%s238 + $0x40] sm:$0xff] %v255
                  %v257 = vld [vmem:[%s237 + $0x90] sm:$0xff]
                  %258 = vst [vmem:[%s238 + $0x48] sm:$0xff] %v257
                  %v259 = vld [vmem:[%s237 + $0xa0] sm:$0xff]
                  %260 = vst [vmem:[%s238 + $0x50] sm:$0xff] %v259
                  %v261 = vld [vmem:[%s237 + $0xb0] sm:$0xff]
                  %262 = vst [vmem:[%s238 + $0x58] sm:$0xff] %v261
                  %v263 = vld [vmem:[%s237 + $0xc0] sm:$0xff]
                  %264 = vst [vmem:[%s238 + $0x60] sm:$0xff] %v263
                  %v265 = vld [vmem:[%s237 + $0xd0] sm:$0xff]
                  %266 = vst [vmem:[%s238 + $0x68] sm:$0xff] %v265
                  %v267 = vld [vmem:[%s237 + $0xe0] sm:$0xff]
                  %268 = vst [vmem:[%s238 + $0x70] sm:$0xff] %v267
                  %v269 = vld [vmem:[%s237 + $0xf0] sm:$0xff]
                  %270 = vst [vmem:[%s238 + $0x78] sm:$0xff] %v269
                $region52: #{decoder_rnn_forward.5} parent=46 // loop_footer
                  %s236 = sadd.s32 1, %s232
                $region53: #{decoder_rnn_forward.5} parent=46 // loop_footer_branch
                  %231 = sbr.rel target = $region49
                $region54: #{decoder_rnn_forward.5} parent=46 // loop_exit
                  _
              $region47: #{decoder_rnn_forward.5} parent=31 // pred_fallthru
                _
              // Predicated region
              $region55: #{decoder_rnn_forward.5} parent=31 // pred_check
                _
              $region56: #{decoder_rnn_forward.5} parent=31 // pred_check_branch
                %272 = sbr.rel target = $region58
              $region57: #{decoder_rnn_forward.5} parent=31 // pred_region
                _
              $region58: #{decoder_rnn_forward.5} parent=31 // pred_fallthru
                _
            $region32: #{decoder_rnn_forward.5} parent=27 // pred_fallthru
              _
            // Predicated region
            $region33: #{decoder_rnn_forward.5} parent=27 // pred_check
              _
            $region34: #{decoder_rnn_forward.5} parent=27 // pred_check_branch
              %187 = sbr.rel target = $region36
            $region35: #{decoder_rnn_forward.5} parent=27 // pred_region
              loop: start=0, step=1, limit=1
              $region37: #{decoder_rnn_forward.5} parent=35 // loop_pre_header
                _
              $region38: #{decoder_rnn_forward.5} parent=35 // loop_header
                %s190 = sphi 0, %s194
                %p191 = scmp.ge.s32.totalorder %s190, 1
                %s195 = sphi %s181, %s181
                %s196 = sphi %s175, %s175
              $region39: #{decoder_rnn_forward.5} parent=35 // loop_header_branch
                %193 = sbr.rel (%p191) target = $region43
              $region40: #{decoder_rnn_forward.5} parent=35 // loop_body
                %v197 = vld [vmem:[%s195] sm:$0xff]
                %198 = vst [vmem:[%s196] sm:$0xff] %v197
                %v199 = vld [vmem:[%s195 + $0x10] sm:$0xff]
                %200 = vst [vmem:[%s196 + $0x8] sm:$0xff] %v199
                %v201 = vld [vmem:[%s195 + $0x20] sm:$0xff]
                %202 = vst [vmem:[%s196 + $0x10] sm:$0xff] %v201
                %v203 = vld [vmem:[%s195 + $0x30] sm:$0xff]
                %204 = vst [vmem:[%s196 + $0x18] sm:$0xff] %v203
                %v205 = vld [vmem:[%s195 + $0x40] sm:$0xff]
                %206 = vst [vmem:[%s196 + $0x20] sm:$0xff] %v205
                %v207 = vld [vmem:[%s195 + $0x50] sm:$0xff]
                %208 = vst [vmem:[%s196 + $0x28] sm:$0xff] %v207
                %v209 = vld [vmem:[%s195 + $0x60] sm:$0xff]
                %210 = vst [vmem:[%s196 + $0x30] sm:$0xff] %v209
                %v211 = vld [vmem:[%s195 + $0x70] sm:$0xff]
                %212 = vst [vmem:[%s196 + $0x38] sm:$0xff] %v211
                %v213 = vld [vmem:[%s195 + $0x80] sm:$0xff]
                %214 = vst [vmem:[%s196 + $0x40] sm:$0xff] %v213
                %v215 = vld [vmem:[%s195 + $0x90] sm:$0xff]
                %216 = vst [vmem:[%s196 + $0x48] sm:$0xff] %v215
                %v217 = vld [vmem:[%s195 + $0xa0] sm:$0xff]
                %218 = vst [vmem:[%s196 + $0x50] sm:$0xff] %v217
                %v219 = vld [vmem:[%s195 + $0xb0] sm:$0xff]
                %220 = vst [vmem:[%s196 + $0x58] sm:$0xff] %v219
                %v221 = vld [vmem:[%s195 + $0xc0] sm:$0xff]
                %222 = vst [vmem:[%s196 + $0x60] sm:$0xff] %v221
                %v223 = vld [vmem:[%s195 + $0xd0] sm:$0xff]
                %224 = vst [vmem:[%s196 + $0x68] sm:$0xff] %v223
                %v225 = vld [vmem:[%s195 + $0xe0] sm:$0xff]
                %226 = vst [vmem:[%s196 + $0x70] sm:$0xff] %v225
                %v227 = vld [vmem:[%s195 + $0xf0] sm:$0xff]
                %228 = vst [vmem:[%s196 + $0x78] sm:$0xff] %v227
              $region41: #{decoder_rnn_forward.5} parent=35 // loop_footer
                %s194 = sadd.s32 1, %s190
              $region42: #{decoder_rnn_forward.5} parent=35 // loop_footer_branch
                %189 = sbr.rel target = $region38
              $region43: #{decoder_rnn_forward.5} parent=35 // loop_exit
                _
            $region36: #{decoder_rnn_forward.5} parent=27 // pred_fallthru
              _
          $region28: #{decoder_rnn_forward.5} parent=23 // pred_fallthru
            _
          %273 = vnop
        $region24: #{decoder_rnn_forward.5} parent=19 // pred_fallthru
          _
        // Predicated region
        $region59: #{decoder_rnn_forward.5} parent=19 // pred_check
          %p274 = pneg %p104
        $region60: #{decoder_rnn_forward.5} parent=19 // pred_check_branch
          %276 = sbr.rel (%p274) target = $region62
        $region61: #{decoder_rnn_forward.5} parent=19 // pred_region
          %s277 = smul.u32 2, %s17
          %p278 = scmp.lt.s32.totalorder %s277, 3
          %s279 = scalar_select %p278, %s277, 3
          %s280 = scalar_lea.vmem %s2, %s279
          %s281 = smul.u32 2, %s17
        $region62: #{decoder_rnn_forward.5} parent=19 // pred_fallthru
          _
      $region20: #{decoder_rnn_forward.5} parent=5 // pred_fallthru
        _
      %p282 = scmp.le.s32.totalorder 1, %s9
      %p283 = scmp.lt.s32.totalorder %s9, 3
      %p284 = pnand %p282, %p283
      %p285 = pneg %p284
      // Predicated region
      $region63: #{decoder_rnn_forward.5} parent=5 // pred_check
        _
      $region64: #{decoder_rnn_forward.5} parent=5 // pred_check_branch
        %287 = sbr.rel (%p284) target = $region66
      $region65: #{decoder_rnn_forward.5} parent=5 // pred_region
        %s288 = ssub.s32 %s9, 1
        %s289 = sand.u32 %s71, 1
        %s290 = sand.u32 %s71, 1
        %s291 = smul.addr %s290, 128
        %s292 = scalar_lea.vmem [#allocation3], %s291
        // Predicated region
        $region67: #{decoder_rnn_forward.5} parent=65 // pred_check
          %p293 = pneg %p84
        $region68: #{decoder_rnn_forward.5} parent=65 // pred_check_branch
          %295 = sbr.rel (%p293) target = $region70
        $region69: #{decoder_rnn_forward.5} parent=65 // pred_region
          _
        $region70: #{decoder_rnn_forward.5} parent=65 // pred_fallthru
          _
        %s296 = smul.u32 9, %s19
        %p297 = scmp.lt.s32.totalorder %s296, 8
        %s298 = scalar_select %p297, %s296, 8
        %p299 = scmp.lt.s32.totalorder %s21, 0
        %s300 = scalar_select %p299, %s21, 0
        %s301 = sadd.s32 %s300, %s298
        %s302 = smul.addr %s301, 4
        %s303 = scalar_lea.vmem %s0, %s302
        %p304 = pneg %p56
        %p305 = pneg %p53
        %s306 = sand.u32 %s71, 1
        %s307 = sand.u32 %s71, 1
        %s308 = smul.addr %s307, 128
        %s309 = scalar_lea.vmem [#allocation3], %s308
        %p310 = pneg %p84
        %p311 = pneg %p81
        %s312 = smul.u32 2, %s20
        %p313 = scmp.lt.s32.totalorder %s312, 3
        %s314 = scalar_select %p313, %s312, 3
        %s315 = scalar_lea.vmem %s2, %s314
        %p316 = pneg %p110
        %p317 = pneg %p107
        %p318 = pneg %p138
        %p319 = pneg %p135
        %s320 = sand.u32 %s125, 1
        %s321 = sand.u32 %s125, 1
        %s322 = smul.addr %s321, 72
        %s323 = scalar_lea.vmem [#allocation4], %s322
        %s324 = smul.u32 9, %s19
        %p325 = scmp.lt.s32.totalorder %s324, 8
        %s326 = scalar_select %p325, %s324, 8
        %p327 = scmp.lt.s32.totalorder %s21, 0
        %s328 = scalar_select %p327, %s21, 0
        %s329 = sadd.s32 %s328, %s326
        %s330 = smul.addr %s329, 4
        %s331 = scalar_lea.vmem %s0, %s330
        %s332 = smul.u32 9, %s19
        %s333 = smul.u32 16, %s21
        %s334 = smul.u32 2, %s20
        %s335 = smul.u32 2, %s20
        %p336 = scmp.lt.s32.totalorder %s335, 3
        %s337 = scalar_select %p336, %s335, 3
        %s338 = scalar_lea.vmem %s2, %s337
        %s339 = smul.u32 2, %s20
        %s340 = smul.u32 9, %s19
        %s341 = smul.u32 2, %s20
        %p343 = scmp.eq.s32.totalorder %s21, 0
        // Predicated region
        $region71: #{decoder_rnn_forward.5} parent=65 // pred_check
          %p344 = pneg %p343
        $region72: #{decoder_rnn_forward.5} parent=65 // pred_check_branch
          %346 = sbr.rel (%p344) target = $region74
        $region73: #{decoder_rnn_forward.5} parent=65 // pred_region
          %347 = vst [vmem:[#allocation2] sm:$0xff] 0.0
          %348 = vst [vmem:[#allocation2 + $0x8] sm:$0xff] 0.0
          %349 = vst [vmem:[#allocation2 + $0x10] sm:$0xff] 0.0
          %350 = vst [vmem:[#allocation2 + $0x18] sm:$0xff] 0.0
          %351 = vst [vmem:[#allocation2 + $0x20] sm:$0xff] 0.0
          %352 = vst [vmem:[#allocation2 + $0x28] sm:$0xff] 0.0
          %353 = vst [vmem:[#allocation2 + $0x30] sm:$0xff] 0.0
          %354 = vst [vmem:[#allocation2 + $0x38] sm:$0xff] 0.0
          %355 = vst [vmem:[#allocation2 + $0x40] sm:$0xff] 0.0
          %356 = vst [vmem:[#allocation2 + $0x48] sm:$0xff] 0.0
          %357 = vst [vmem:[#allocation2 + $0x50] sm:$0xff] 0.0
          %358 = vst [vmem:[#allocation2 + $0x58] sm:$0xff] 0.0
          %359 = vst [vmem:[#allocation2 + $0x60] sm:$0xff] 0.0
          %360 = vst [vmem:[#allocation2 + $0x68] sm:$0xff] 0.0
          %361 = vst [vmem:[#allocation2 + $0x70] sm:$0xff] 0.0
          %362 = vst [vmem:[#allocation2 + $0x78] sm:$0xff] 0.0
          %363 = vst [vmem:[#allocation2 + $0x80] sm:$0xff] 0.0
          %364 = vst [vmem:[#allocation2 + $0x88] sm:$0xff] 0.0
        $region74: #{decoder_rnn_forward.5} parent=65 // pred_fallthru
          _
        %v365 = vld [vmem:[#allocation2] sm:$0xff]
        %v366 = vld [vmem:[#allocation2 + $0x8] sm:$0xff]
        %v367 = vld [vmem:[#allocation2 + $0x10] sm:$0xff]
        %v368 = vld [vmem:[#allocation2 + $0x18] sm:$0xff]
        %v369 = vld [vmem:[#allocation2 + $0x20] sm:$0xff]
        %v370 = vld [vmem:[#allocation2 + $0x28] sm:$0xff]
        %v371 = vld [vmem:[#allocation2 + $0x30] sm:$0xff]
        %v372 = vld [vmem:[#allocation2 + $0x38] sm:$0xff]
        %v373 = vld [vmem:[#allocation2 + $0x40] sm:$0xff]
        %v374 = vld [vmem:[#allocation2 + $0x48] sm:$0xff]
        %v375 = vld [vmem:[#allocation2 + $0x50] sm:$0xff]
        %v376 = vld [vmem:[#allocation2 + $0x58] sm:$0xff]
        %v377 = vld [vmem:[#allocation2 + $0x60] sm:$0xff]
        %v378 = vld [vmem:[#allocation2 + $0x68] sm:$0xff]
        %v379 = vld [vmem:[#allocation2 + $0x70] sm:$0xff]
        %v380 = vld [vmem:[#allocation2 + $0x78] sm:$0xff]
        %v381 = vld [vmem:[#allocation2 + $0x80] sm:$0xff]
        %v382 = vld [vmem:[#allocation2 + $0x88] sm:$0xff]
        %v383 = vld [vmem:[%s331] sm:$0xf]
        %v384 = vld [vmem:[%s331 + $0x4] sm:$0xf]
        %v385 = vld [vmem:[%s331 + $0x8] sm:$0xf]
        %v386 = vld [vmem:[%s331 + $0xc] sm:$0xf]
        %v387 = vld [vmem:[%s331 + $0x10] sm:$0xf]
        %v388 = vld [vmem:[%s331 + $0x14] sm:$0xf]
        %v389 = vld [vmem:[%s331 + $0x18] sm:$0xf]
        %v390 = vld [vmem:[%s331 + $0x1c] sm:$0xf]
        %v391 = vld [vmem:[%s331 + $0x20] sm:$0xf]
        %v392 = vld [vmem:[%s292] sm:$0xff]
        %v393 = vld [vmem:[%s292 + $0x8] sm:$0xff]
        %v394 = vld [vmem:[%s292 + $0x10] sm:$0xff]
        %v395 = vld [vmem:[%s292 + $0x18] sm:$0xff]
        %v396 = vld [vmem:[%s292 + $0x20] sm:$0xff]
        %v397 = vld [vmem:[%s292 + $0x28] sm:$0xff]
        %v398 = vld [vmem:[%s292 + $0x30] sm:$0xff]
        %v399 = vld [vmem:[%s292 + $0x38] sm:$0xff]
        %v400 = vld [vmem:[%s292 + $0x40] sm:$0xff]
        %v401 = vld [vmem:[%s292 + $0x48] sm:$0xff]
        %v402 = vld [vmem:[%s292 + $0x50] sm:$0xff]
        %v403 = vld [vmem:[%s292 + $0x58] sm:$0xff]
        %v404 = vld [vmem:[%s292 + $0x60] sm:$0xff]
        %v405 = vld [vmem:[%s292 + $0x68] sm:$0xff]
        %v406 = vld [vmem:[%s292 + $0x70] sm:$0xff]
        %v407 = vld [vmem:[%s292 + $0x78] sm:$0xff]
        %v417 = vunpack.c.l.b16 %v383
        %v418 = vunpack.c.l.b16 %v384
        %v419 = vunpack.c.l.b16 %v385
        %v420 = vunpack.c.l.b16 %v386
        %v421 = vunpack.c.l.b16 %v387
        %v422 = vunpack.c.l.b16 %v388
        %v423 = vunpack.c.l.b16 %v389
        %v424 = vunpack.c.l.b16 %v390
        %v425 = vunpack.c.l.b16 %v391
        %v426 = vpack.c.b16 %v418, %v417
        %v427 = vpack.c.b16 %v420, %v419
        %v428 = vpack.c.b16 %v422, %v421
        %v429 = vpack.c.b16 %v424, %v423
        %v430 = vpack.c.b16 %v425, %v425
        %v452 = vunpack.c.l.b16 %v392
        %v453 = vunpack.c.h.b16 %v392
        %v454 = vunpack.c.l.b16 %v393
        %v455 = vunpack.c.h.b16 %v393
        %v456 = vunpack.c.l.b16 %v394
        %v457 = vunpack.c.h.b16 %v394
        %v458 = vunpack.c.l.b16 %v395
        %v459 = vunpack.c.h.b16 %v395
        %v460 = vunpack.c.l.b16 %v396
        %v461 = vunpack.c.h.b16 %v396
        %v462 = vunpack.c.l.b16 %v397
        %v463 = vunpack.c.h.b16 %v397
        %v464 = vunpack.c.l.b16 %v398
        %v465 = vunpack.c.h.b16 %v398
        %v466 = vunpack.c.l.b16 %v399
        %v467 = vunpack.c.h.b16 %v399
        %v468 = vunpack.c.l.b16 %v400
        %v469 = vunpack.c.h.b16 %v400
        %v470 = vunpack.c.l.b16 %v401
        %v471 = vunpack.c.h.b16 %v401
        %v472 = vunpack.c.l.b16 %v402
        %v473 = vunpack.c.h.b16 %v402
        %v474 = vunpack.c.l.b16 %v403
        %v475 = vunpack.c.h.b16 %v403
        %v476 = vunpack.c.l.b16 %v404
        %v477 = vunpack.c.h.b16 %v404
        %v478 = vunpack.c.l.b16 %v405
        %v479 = vunpack.c.h.b16 %v405
        %v480 = vunpack.c.l.b16 %v406
        %v481 = vunpack.c.h.b16 %v406
        %v482 = vunpack.c.l.b16 %v407
        %v483 = vunpack.c.h.b16 %v407
        %v484 = vpack.c.b16 %v454, %v452
        %v485 = vpack.c.b16 %v455, %v453
        %v486 = vpack.c.b16 %v458, %v456
        %v487 = vpack.c.b16 %v459, %v457
        %v488 = vpack.c.b16 %v462, %v460
        %v489 = vpack.c.b16 %v463, %v461
        %v490 = vpack.c.b16 %v466, %v464
        %v491 = vpack.c.b16 %v467, %v465
        %v492 = vpack.c.b16 %v470, %v468
        %v493 = vpack.c.b16 %v471, %v469
        %v494 = vpack.c.b16 %v474, %v472
        %v495 = vpack.c.b16 %v475, %v473
        %v496 = vpack.c.b16 %v478, %v476
        %v497 = vpack.c.b16 %v479, %v477
        %v498 = vpack.c.b16 %v482, %v480
        %v499 = vpack.c.b16 %v483, %v481
        %516 = vmatprep.subr.bf16.mxu0 %v485
        %517 = vmatpush1.bf16.msra.mxu0 %v484
        %518 = vmatprep.subr.bf16.mxu0 %v487
        %519 = vmatpush1.bf16.msra.mxu0 %v486
        %520 = vmatprep.subr.bf16.mxu0 %v489
        %521 = vmatpush1.bf16.msra.mxu0 %v488
        %522 = vmatprep.subr.bf16.mxu0 %v491
        %523 = vmatpush1.bf16.msra.mxu0 %v490
        %524 = vmatprep.subr.bf16.mxu0 %v493
        %525 = vmatpush1.bf16.msra.mxu0 %v492
        %526 = vmatprep.subr.bf16.mxu0 %v495
        %527 = vmatpush1.bf16.msra.mxu0 %v494
        %528 = vmatprep.subr.bf16.mxu0 %v497
        %529 = vmatpush1.bf16.msra.mxu0 %v496
        %530 = vmatprep.subr.bf16.mxu0 %v499
        %531 = vmatpush1.bf16.msra.mxu0 %v498
        %532 = vmatprep.subr.bf16.mxu0 0
        %533 = vmatpush1.bf16.msra.mxu0 0
        %534 = vmatprep.subr.bf16.mxu0 0
        %535 = vmatpush1.bf16.msra.mxu0 0
        %536 = vmatprep.subr.bf16.mxu0 0
        %537 = vmatpush1.bf16.msra.mxu0 0
        %538 = vmatprep.subr.bf16.mxu0 0
        %539 = vmatpush1.bf16.msra.mxu0 0
        %540 = vmatprep.subr.bf16.mxu0 0
        %541 = vmatpush1.bf16.msra.mxu0 0
        %542 = vmatprep.subr.bf16.mxu0 0
        %543 = vmatpush1.bf16.msra.mxu0 0
        %544 = vmatprep.subr.bf16.mxu0 0
        %545 = vmatpush1.bf16.msra.mxu0 0
        %546 = vmatprep.subr.bf16.mxu0 0
        %547 = vmatpush1.bf16.msra.mxu0 0
        %548 = vmatprep.mubr.bf16.mxu0 0
        %549 = vmatmul.mubr.bf16.gmra.mrb[0].mxu0 %v426
        %v550 = vpop.f32.mrb[0].mxu0
        %v551 = vadd.f32 0.0, %v550
        %v552 = vpop.f32.mrb[0].mxu0
        %v553 = vadd.f32 0.0, %v552
        %v554 = vpop.f32.mrb[0].mxu0
        %v555 = vadd.f32 0.0, %v554
        %v556 = vpop.f32.mrb[0].mxu0
        %v557 = vadd.f32 0.0, %v556
        %558 = vmatprep.mubr.bf16.mxu0 0
        %559 = vmatmul.mubr.bf16.gmra.mrb[0].mxu0 %v427
        %v560 = vpop.f32.mrb[0].mxu0
        %v561 = vadd.f32 0.0, %v560
        %v562 = vpop.f32.mrb[0].mxu0
        %v563 = vadd.f32 0.0, %v562
        %v564 = vpop.f32.mrb[0].mxu0
        %v565 = vadd.f32 0.0, %v564
        %v566 = vpop.f32.mrb[0].mxu0
        %v567 = vadd.f32 0.0, %v566
        %568 = vmatprep.mubr.bf16.mxu0 0
        %569 = vmatmul.mubr.bf16.gmra.mrb[0].mxu0 %v428
        %v570 = vpop.f32.mrb[0].mxu0
        %v571 = vadd.f32 0.0, %v570
        %v572 = vpop.f32.mrb[0].mxu0
        %v573 = vadd.f32 0.0, %v572
        %v574 = vpop.f32.mrb[0].mxu0
        %v575 = vadd.f32 0.0, %v574
        %v576 = vpop.f32.mrb[0].mxu0
        %v577 = vadd.f32 0.0, %v576
        %578 = vmatprep.mubr.bf16.mxu0 0
        %579 = vmatmul.mubr.bf16.gmra.mrb[0].mxu0 %v429
        %v580 = vpop.f32.mrb[0].mxu0
        %v581 = vadd.f32 0.0, %v580
        %v582 = vpop.f32.mrb[0].mxu0
        %v583 = vadd.f32 0.0, %v582
        %v584 = vpop.f32.mrb[0].mxu0
        %v585 = vadd.f32 0.0, %v584
        %v586 = vpop.f32.mrb[0].mxu0
        %v587 = vadd.f32 0.0, %v586
        %588 = vmatprep.mubr.bf16.mxu0 0
        %589 = vmatmul.mubr.bf16.gmra.mrb[0].mxu0 %v430
        %v590 = vpop.f32.mrb[0].mxu0
        %v591 = vadd.f32 0.0, %v590
        %v592 = vpop.f32.mrb[0].mxu0
        %v593 = vadd.f32 0.0, %v592
        %v594 = vpop.f32.mrb[0].mxu0
        %v595 = vpop.f32.mrb[0].mxu0
        %596 = vdwg.mxu0
        %v597 = vadd.f32 %v365, %v551
        %v598 = vadd.f32 %v366, %v553
        %v599 = vadd.f32 %v367, %v555
        %v600 = vadd.f32 %v368, %v557
        %v601 = vadd.f32 %v369, %v561
        %v602 = vadd.f32 %v370, %v563
        %v603 = vadd.f32 %v371, %v565
        %v604 = vadd.f32 %v372, %v567
        %v605 = vadd.f32 %v373, %v571
        %v606 = vadd.f32 %v374, %v573
        %v607 = vadd.f32 %v375, %v575
        %v608 = vadd.f32 %v376, %v577
        %v609 = vadd.f32 %v377, %v581
        %v610 = vadd.f32 %v378, %v583
        %v611 = vadd.f32 %v379, %v585
        %v612 = vadd.f32 %v380, %v587
        %v613 = vadd.f32 %v381, %v591
        %v614 = vadd.f32 %v382, %v593
        %615 = vst [vmem:[#allocation2] sm:$0xff] %v597
        %616 = vst [vmem:[#allocation2 + $0x8] sm:$0xff] %v598
        %617 = vst [vmem:[#allocation2 + $0x10] sm:$0xff] %v599
        %618 = vst [vmem:[#allocation2 + $0x18] sm:$0xff] %v600
        %619 = vst [vmem:[#allocation2 + $0x20] sm:$0xff] %v601
        %620 = vst [vmem:[#allocation2 + $0x28] sm:$0xff] %v602
        %621 = vst [vmem:[#allocation2 + $0x30] sm:$0xff] %v603
        %622 = vst [vmem:[#allocation2 + $0x38] sm:$0xff] %v604
        %623 = vst [vmem:[#allocation2 + $0x40] sm:$0xff] %v605
        %624 = vst [vmem:[#allocation2 + $0x48] sm:$0xff] %v606
        %625 = vst [vmem:[#allocation2 + $0x50] sm:$0xff] %v607
        %626 = vst [vmem:[#allocation2 + $0x58] sm:$0xff] %v608
        %627 = vst [vmem:[#allocation2 + $0x60] sm:$0xff] %v609
        %628 = vst [vmem:[#allocation2 + $0x68] sm:$0xff] %v610
        %629 = vst [vmem:[#allocation2 + $0x70] sm:$0xff] %v611
        %630 = vst [vmem:[#allocation2 + $0x78] sm:$0xff] %v612
        %631 = vst [vmem:[#allocation2 + $0x80] sm:$0xff] %v613
        %632 = vst [vmem:[#allocation2 + $0x88] sm:$0xff] %v614
        // Predicated region
        $region75: #{decoder_rnn_forward.5} parent=65 // pred_check
          %p633 = pneg %p343
        $region76: #{decoder_rnn_forward.5} parent=65 // pred_check_branch
          %635 = sbr.rel (%p633) target = $region78
        $region77: #{decoder_rnn_forward.5} parent=65 // pred_region
          %v636 = vld [vmem:[#allocation2] sm:$0xff]
          %v637 = vld [vmem:[#allocation2 + $0x8] sm:$0xff]
          %v638 = vld [vmem:[#allocation2 + $0x10] sm:$0xff]
          %v639 = vld [vmem:[#allocation2 + $0x18] sm:$0xff]
          %v640 = vld [vmem:[#allocation2 + $0x20] sm:$0xff]
          %v641 = vld [vmem:[#allocation2 + $0x28] sm:$0xff]
          %v642 = vld [vmem:[#allocation2 + $0x30] sm:$0xff]
          %v643 = vld [vmem:[#allocation2 + $0x38] sm:$0xff]
          %v644 = vld [vmem:[#allocation2 + $0x40] sm:$0xff]
          %v645 = vld [vmem:[#allocation2 + $0x48] sm:$0xff]
          %v646 = vld [vmem:[#allocation2 + $0x50] sm:$0xff]
          %v647 = vld [vmem:[#allocation2 + $0x58] sm:$0xff]
          %v648 = vld [vmem:[#allocation2 + $0x60] sm:$0xff]
          %v649 = vld [vmem:[#allocation2 + $0x68] sm:$0xff]
          %v650 = vld [vmem:[#allocation2 + $0x70] sm:$0xff]
          %v651 = vld [vmem:[#allocation2 + $0x78] sm:$0xff]
          %v652 = vld [vmem:[#allocation2 + $0x80] sm:$0xff]
          %v653 = vld [vmem:[#allocation2 + $0x88] sm:$0xff]
          %v654 = vld [vmem:[%s338] sm:$0x3]
          %v656 = vlaneseq
          %v657 = vshrl.u32 %v656, 7
          %v658 = vsub.s32 0, %v657
          %v659 = vrot.slane %v654, %v658
          %v660 = vlaneseq
          %v661 = vshrl.u32 %v660, 7
          %v662 = vsub.s32 1, %v661
          %v663 = vrot.slane %v654, %v662
          %v666 = vadd.f32 %v636, %v659
          %v667 = vadd.f32 %v637, %v663
          %v668 = vadd.f32 %v638, %v659
          %v669 = vadd.f32 %v639, %v663
          %v670 = vadd.f32 %v640, %v659
          %v671 = vadd.f32 %v641, %v663
          %v672 = vadd.f32 %v642, %v659
          %v673 = vadd.f32 %v643, %v663
          %v674 = vadd.f32 %v644, %v659
          %v675 = vadd.f32 %v645, %v663
          %v676 = vadd.f32 %v646, %v659
          %v677 = vadd.f32 %v647, %v663
          %v678 = vadd.f32 %v648, %v659
          %v679 = vadd.f32 %v649, %v663
          %v680 = vadd.f32 %v650, %v659
          %v681 = vadd.f32 %v651, %v663
          %v682 = vadd.f32 %v652, %v659
          %v683 = vadd.f32 %v653, %v663
          %v684 = vpack.c.bf16 %v668, %v666
          %v685 = vpack.c.bf16 %v669, %v667
          %v686 = vpack.c.bf16 %v672, %v670
          %v687 = vpack.c.bf16 %v673, %v671
          %v688 = vpack.c.bf16 %v676, %v674
          %v689 = vpack.c.bf16 %v677, %v675
          %v690 = vpack.c.bf16 %v680, %v678
          %v691 = vpack.c.bf16 %v681, %v679
          %v692 = vpack.c.bf16 %v682, %v682
          %v693 = vpack.c.bf16 %v683, %v683
          %v704 = vunpack.c.l.b16 %v684
          %v705 = vunpack.c.l.b16 %v685
          %v706 = vunpack.c.h.b16 %v684
          %v707 = vunpack.c.h.b16 %v685
          %v708 = vunpack.c.l.b16 %v686
          %v709 = vunpack.c.l.b16 %v687
          %v710 = vunpack.c.h.b16 %v686
          %v711 = vunpack.c.h.b16 %v687
          %v712 = vunpack.c.l.b16 %v688
          %v713 = vunpack.c.l.b16 %v689
          %v714 = vunpack.c.h.b16 %v688
          %v715 = vunpack.c.h.b16 %v689
          %v716 = vunpack.c.l.b16 %v690
          %v717 = vunpack.c.l.b16 %v691
          %v718 = vunpack.c.h.b16 %v690
          %v719 = vunpack.c.h.b16 %v691
          %v720 = vunpack.c.l.b16 %v692
          %v721 = vunpack.c.l.b16 %v693
          %v722 = vpack.c.b16 %v705, %v704
          %v723 = vpack.c.b16 %v707, %v706
          %v724 = vpack.c.b16 %v709, %v708
          %v725 = vpack.c.b16 %v711, %v710
          %v726 = vpack.c.b16 %v713, %v712
          %v727 = vpack.c.b16 %v715, %v714
          %v728 = vpack.c.b16 %v717, %v716
          %v729 = vpack.c.b16 %v719, %v718
          %v730 = vpack.c.b16 %v721, %v720
          %740 = vst [vmem:[%s323] sm:$0xff] %v722
          %741 = vst [vmem:[%s323 + $0x8] sm:$0xff] %v723
          %742 = vst [vmem:[%s323 + $0x10] sm:$0xff] %v724
          %743 = vst [vmem:[%s323 + $0x18] sm:$0xff] %v725
          %744 = vst [vmem:[%s323 + $0x20] sm:$0xff] %v726
          %745 = vst [vmem:[%s323 + $0x28] sm:$0xff] %v727
          %746 = vst [vmem:[%s323 + $0x30] sm:$0xff] %v728
          %747 = vst [vmem:[%s323 + $0x38] sm:$0xff] %v729
          %748 = vst [vmem:[%s323 + $0x40] sm:$0xff] %v730
        $region78: #{decoder_rnn_forward.5} parent=65 // pred_fallthru
          _
        %s749 = sand.u32 %s125, 1
        %s750 = sand.u32 %s125, 1
        %s751 = smul.addr %s750, 72
        %s752 = scalar_lea.vmem [#allocation4], %s751
        // Predicated region
        $region79: #{decoder_rnn_forward.5} parent=65 // pred_check
          %p753 = pneg %p135
        $region80: #{decoder_rnn_forward.5} parent=65 // pred_check_branch
          %755 = sbr.rel (%p753) target = $region82
        $region81: #{decoder_rnn_forward.5} parent=65 // pred_region
          %s756 = smul.u32 9, %s19
          %s757 = smul.u32 2, %s20
          %s758 = smul.addr %s756, 4
          %s759 = sadd.s32 %s757, %s758
          %s760 = smul.addr %s759, 4
          %s761 = scalar_lea.vmem %s3, %s760
          // Predicated region
          $region83: #{decoder_rnn_forward.5} parent=81 // pred_check
            _
          $region84: #{decoder_rnn_forward.5} parent=81 // pred_check_branch
            %763 = sbr.rel (0) target = $region86
          $region85: #{decoder_rnn_forward.5} parent=81 // pred_region
            // Predicated region
            $region87: #{decoder_rnn_forward.5} parent=85 // pred_check
              _
            $region88: #{decoder_rnn_forward.5} parent=85 // pred_check_branch
              %765 = sbr.rel (0) target = $region90
            $region89: #{decoder_rnn_forward.5} parent=85 // pred_region
              // Predicated region
              $region102: #{decoder_rnn_forward.5} parent=89 // pred_check
                _
              $region103: #{decoder_rnn_forward.5} parent=89 // pred_check_branch
                %796 = sbr.rel (0) target = $region105
              $region104: #{decoder_rnn_forward.5} parent=89 // pred_region
                loop: start=0, step=1, limit=1
                $region106: #{decoder_rnn_forward.5} parent=104 // loop_pre_header
                  _
                $region107: #{decoder_rnn_forward.5} parent=104 // loop_header
                  %s798 = sphi 0, %s802
                  %p799 = scmp.ge.s32.totalorder %s798, 1
                  %s803 = sphi %s752, %s752
                  %s804 = sphi %s761, %s761
                $region108: #{decoder_rnn_forward.5} parent=104 // loop_header_branch
                  %801 = sbr.rel (%p799) target = $region112
                $region109: #{decoder_rnn_forward.5} parent=104 // loop_body
                  %v805 = vld [vmem:[%s803] sm:$0xff]
                  %806 = vst [vmem:[%s804] sm:$0xff] %v805
                  %v807 = vld [vmem:[%s803 + $0x8] sm:$0xff]
                  %808 = vst [vmem:[%s804 + $0x10] sm:$0xff] %v807
                  %v809 = vld [vmem:[%s803 + $0x10] sm:$0xff]
                  %810 = vst [vmem:[%s804 + $0x20] sm:$0xff] %v809
                  %v811 = vld [vmem:[%s803 + $0x18] sm:$0xff]
                  %812 = vst [vmem:[%s804 + $0x30] sm:$0xff] %v811
                  %v813 = vld [vmem:[%s803 + $0x20] sm:$0xff]
                  %814 = vst [vmem:[%s804 + $0x40] sm:$0xff] %v813
                  %v815 = vld [vmem:[%s803 + $0x28] sm:$0xff]
                  %816 = vst [vmem:[%s804 + $0x50] sm:$0xff] %v815
                  %v817 = vld [vmem:[%s803 + $0x30] sm:$0xff]
                  %818 = vst [vmem:[%s804 + $0x60] sm:$0xff] %v817
                  %v819 = vld [vmem:[%s803 + $0x38] sm:$0xff]
                  %820 = vst [vmem:[%s804 + $0x70] sm:$0xff] %v819
                  %v821 = vld [vmem:[%s803 + $0x40] sm:$0xff]
                  %822 = vst [vmem:[%s804 + $0x80] sm:$0xff] %v821
                $region110: #{decoder_rnn_forward.5} parent=104 // loop_footer
                  %s802 = sadd.s32 1, %s798
                $region111: #{decoder_rnn_forward.5} parent=104 // loop_footer_branch
                  %797 = sbr.rel target = $region107
                $region112: #{decoder_rnn_forward.5} parent=104 // loop_exit
                  _
              $region105: #{decoder_rnn_forward.5} parent=89 // pred_fallthru
                _
              // Predicated region
              $region113: #{decoder_rnn_forward.5} parent=89 // pred_check
                _
              $region114: #{decoder_rnn_forward.5} parent=89 // pred_check_branch
                %824 = sbr.rel target = $region116
              $region115: #{decoder_rnn_forward.5} parent=89 // pred_region
                _
              $region116: #{decoder_rnn_forward.5} parent=89 // pred_fallthru
                _
            $region90: #{decoder_rnn_forward.5} parent=85 // pred_fallthru
              _
            // Predicated region
            $region91: #{decoder_rnn_forward.5} parent=85 // pred_check
              _
            $region92: #{decoder_rnn_forward.5} parent=85 // pred_check_branch
              %767 = sbr.rel target = $region94
            $region93: #{decoder_rnn_forward.5} parent=85 // pred_region
              loop: start=0, step=1, limit=1
              $region95: #{decoder_rnn_forward.5} parent=93 // loop_pre_header
                _
              $region96: #{decoder_rnn_forward.5} parent=93 // loop_header
                %s770 = sphi 0, %s774
                %p771 = scmp.ge.s32.totalorder %s770, 1
                %s775 = sphi %s752, %s752
                %s776 = sphi %s761, %s761
              $region97: #{decoder_rnn_forward.5} parent=93 // loop_header_branch
                %773 = sbr.rel (%p771) target = $region101
              $region98: #{decoder_rnn_forward.5} parent=93 // loop_body
                %v777 = vld [vmem:[%s775] sm:$0xff]
                %778 = vst [vmem:[%s776] sm:$0xff] %v777
                %v779 = vld [vmem:[%s775 + $0x8] sm:$0xff]
                %780 = vst [vmem:[%s776 + $0x10] sm:$0xff] %v779
                %v781 = vld [vmem:[%s775 + $0x10] sm:$0xff]
                %782 = vst [vmem:[%s776 + $0x20] sm:$0xff] %v781
                %v783 = vld [vmem:[%s775 + $0x18] sm:$0xff]
                %784 = vst [vmem:[%s776 + $0x30] sm:$0xff] %v783
                %v785 = vld [vmem:[%s775 + $0x20] sm:$0xff]
                %786 = vst [vmem:[%s776 + $0x40] sm:$0xff] %v785
                %v787 = vld [vmem:[%s775 + $0x28] sm:$0xff]
                %788 = vst [vmem:[%s776 + $0x50] sm:$0xff] %v787
                %v789 = vld [vmem:[%s775 + $0x30] sm:$0xff]
                %790 = vst [vmem:[%s776 + $0x60] sm:$0xff] %v789
                %v791 = vld [vmem:[%s775 + $0x38] sm:$0xff]
                %792 = vst [vmem:[%s776 + $0x70] sm:$0xff] %v791
                %v793 = vld [vmem:[%s775 + $0x40] sm:$0xff]
                %794 = vst [vmem:[%s776 + $0x80] sm:$0xff] %v793
              $region99: #{decoder_rnn_forward.5} parent=93 // loop_footer
                %s774 = sadd.s32 1, %s770
              $region100: #{decoder_rnn_forward.5} parent=93 // loop_footer_branch
                %769 = sbr.rel target = $region96
              $region101: #{decoder_rnn_forward.5} parent=93 // loop_exit
                _
            $region94: #{decoder_rnn_forward.5} parent=85 // pred_fallthru
              _
          $region86: #{decoder_rnn_forward.5} parent=81 // pred_fallthru
            _
          %825 = vnop
        $region82: #{decoder_rnn_forward.5} parent=65 // pred_fallthru
          _
      $region66: #{decoder_rnn_forward.5} parent=5 // pred_fallthru
        _
      %p826 = scmp.le.s32.totalorder 2, %s9
      // Predicated region
      $region117: #{decoder_rnn_forward.5} parent=5 // pred_check
        %p827 = pneg %p826
      $region118: #{decoder_rnn_forward.5} parent=5 // pred_check_branch
        %829 = sbr.rel (%p827) target = $region120
      $region119: #{decoder_rnn_forward.5} parent=5 // pred_region
        %s830 = ssub.s32 %s9, 2
        // Predicated region
        $region121: #{decoder_rnn_forward.5} parent=119 // pred_check
          %p831 = pneg %p141
        $region122: #{decoder_rnn_forward.5} parent=119 // pred_check_branch
          %833 = sbr.rel (%p831) target = $region124
        $region123: #{decoder_rnn_forward.5} parent=119 // pred_region
          %s834 = sand.u32 %s126, 1
          %s835 = sand.u32 %s126, 1
          %s836 = smul.addr %s835, 72
          %s837 = scalar_lea.vmem [#allocation4], %s836
        $region124: #{decoder_rnn_forward.5} parent=119 // pred_fallthru
          _
      $region120: #{decoder_rnn_forward.5} parent=5 // pred_fallthru
        _
    $region6: #{decoder_rnn_forward.5} parent=1 // loop_footer
      %s13 = sadd.s32 1, %s9
    $region7: #{decoder_rnn_forward.5} parent=1 // loop_footer_branch
      %8 = sbr.rel target = $region3
    $region8: #{decoder_rnn_forward.5} parent=1 // loop_exit
      _

// kernel: decoder_rnn_forward.6
$region0: #{decoder_rnn_forward.6}
  #allocation0 [shape = 'u32[]', space=smem, size = 0x4, offset = 0x4, fixed_abs, tag = 'smem constant byte address 0x4 - core index']
  #allocation1 [shape = 'u32[144,128]{1,0:T(1,128)}', space=vmem, size = 0x12000, scoped, tag = 'internal scratch']
  #allocation2 [shape = 'f32[8,128]{1,0:T(8,128)}', space=vmem, size = 0x1000, scoped, tag = 'scratch operand']
  #allocation3 [shape = 'f32[8,128]{1,0:T(8,128)}', space=vmem, size = 0x1000, scoped, tag = 'scratch operand']
  %s0 = inlined_call_operand.vmem [shape: bf16[9,8,512], index: 0, kind: input, shape index: {}]
  %s1 = inlined_call_operand.vmem [shape: bf16[128,512], index: 1, kind: input, shape index: {}]
  %s2 = inlined_call_operand.vmem [shape: bf16[9,8,128], index: 2, kind: output, shape index: {}]
  %s3 = sld [smem:[#allocation0]]
  $region22: #{decoder_rnn_forward.6} parent=0
    _
  %s5 = ssub.s32 1, %s3
  %s6 = scalar_select 0, %s5, %s3
  // Predicated region
  $region2: #{decoder_rnn_forward.6} parent=0 // pred_check
    _
  $region3: #{decoder_rnn_forward.6} parent=0 // pred_check_branch
    %8 = sbr.rel (0) target = $region5
  $region4: #{decoder_rnn_forward.6} parent=0 // pred_region
    _
  $region5: #{decoder_rnn_forward.6} parent=0 // pred_fallthru
    _
  // Predicated region
  $region6: #{decoder_rnn_forward.6} parent=0 // pred_check
    _
  $region7: #{decoder_rnn_forward.6} parent=0 // pred_check_branch
    %10 = sbr.rel (0) target = $region9
  $region8: #{decoder_rnn_forward.6} parent=0 // pred_region
    _
  $region9: #{decoder_rnn_forward.6} parent=0 // pred_fallthru
    _
  %p12 = scmp.eq.s32.totalorder 0, 0
  // Predicated region
  $region10: #{decoder_rnn_forward.6} parent=0 // pred_check
    %p13 = pneg %p12
  $region11: #{decoder_rnn_forward.6} parent=0 // pred_check_branch
    %15 = sbr.rel (%p13) target = $region13
  $region12: #{decoder_rnn_forward.6} parent=0 // pred_region
    %16 = vst [vmem:[#allocation2] sm:$0xff] 0.0
    %17 = vst [vmem:[#allocation3] sm:$0xff] 0.0
  $region13: #{decoder_rnn_forward.6} parent=0 // pred_fallthru
    _
  %v18 = vld [vmem:[%s1] sm:$0xff]
  %v19 = vld [vmem:[%s1 + $0x8] sm:$0xff]
  %v20 = vld [vmem:[%s1 + $0x10] sm:$0xff]
  %v21 = vld [vmem:[%s1 + $0x18] sm:$0xff]
  %v22 = vld [vmem:[%s1 + $0x20] sm:$0xff]
  %v23 = vld [vmem:[%s1 + $0x28] sm:$0xff]
  %v24 = vld [vmem:[%s1 + $0x30] sm:$0xff]
  %v25 = vld [vmem:[%s1 + $0x38] sm:$0xff]
  %v26 = vld [vmem:[%s1 + $0x40] sm:$0xff]
  %v27 = vld [vmem:[%s1 + $0x48] sm:$0xff]
  %v28 = vld [vmem:[%s1 + $0x50] sm:$0xff]
  %v29 = vld [vmem:[%s1 + $0x58] sm:$0xff]
  %v30 = vld [vmem:[%s1 + $0x60] sm:$0xff]
  %v31 = vld [vmem:[%s1 + $0x68] sm:$0xff]
  %v32 = vld [vmem:[%s1 + $0x70] sm:$0xff]
  %v33 = vld [vmem:[%s1 + $0x78] sm:$0xff]
  %v34 = vld [vmem:[%s1 + $0x80] sm:$0xff]
  %v35 = vld [vmem:[%s1 + $0x88] sm:$0xff]
  %v36 = vld [vmem:[%s1 + $0x90] sm:$0xff]
  %v37 = vld [vmem:[%s1 + $0x98] sm:$0xff]
  %v38 = vld [vmem:[%s1 + $0xa0] sm:$0xff]
  %v39 = vld [vmem:[%s1 + $0xa8] sm:$0xff]
  %v40 = vld [vmem:[%s1 + $0xb0] sm:$0xff]
  %v41 = vld [vmem:[%s1 + $0xb8] sm:$0xff]
  %v42 = vld [vmem:[%s1 + $0xc0] sm:$0xff]
  %v43 = vld [vmem:[%s1 + $0xc8] sm:$0xff]
  %v44 = vld [vmem:[%s1 + $0xd0] sm:$0xff]
  %v45 = vld [vmem:[%s1 + $0xd8] sm:$0xff]
  %v46 = vld [vmem:[%s1 + $0xe0] sm:$0xff]
  %v47 = vld [vmem:[%s1 + $0xe8] sm:$0xff]
  %v48 = vld [vmem:[%s1 + $0xf0] sm:$0xff]
  %v49 = vld [vmem:[%s1 + $0xf8] sm:$0xff]
  %v50 = vld [vmem:[#allocation2] sm:$0xff]
  %v51 = vld [vmem:[#allocation3] sm:$0xff]
  %v52 = vld [vmem:[%s0] sm:$0xff]
  %v53 = vld [vmem:[%s0 + $0x8] sm:$0xff]
  %v54 = vpack.c.bf16 %v50, %v50
  %v87 = vunpack.c.l.b16 %v18
  %v88 = vunpack.c.h.b16 %v18
  %v89 = vunpack.c.l.b16 %v19
  %v90 = vunpack.c.h.b16 %v19
  %v91 = vunpack.c.l.b16 %v20
  %v92 = vunpack.c.h.b16 %v20
  %v93 = vunpack.c.l.b16 %v21
  %v94 = vunpack.c.h.b16 %v21
  %v95 = vunpack.c.l.b16 %v22
  %v96 = vunpack.c.h.b16 %v22
  %v97 = vunpack.c.l.b16 %v23
  %v98 = vunpack.c.h.b16 %v23
  %v99 = vunpack.c.l.b16 %v24
  %v100 = vunpack.c.h.b16 %v24
  %v101 = vunpack.c.l.b16 %v25
  %v102 = vunpack.c.h.b16 %v25
  %v103 = vunpack.c.l.b16 %v26
  %v104 = vunpack.c.h.b16 %v26
  %v105 = vunpack.c.l.b16 %v27
  %v106 = vunpack.c.h.b16 %v27
  %v107 = vunpack.c.l.b16 %v28
  %v108 = vunpack.c.h.b16 %v28
  %v109 = vunpack.c.l.b16 %v29
  %v110 = vunpack.c.h.b16 %v29
  %v111 = vunpack.c.l.b16 %v30
  %v112 = vunpack.c.h.b16 %v30
  %v113 = vunpack.c.l.b16 %v31
  %v114 = vunpack.c.h.b16 %v31
  %v115 = vunpack.c.l.b16 %v32
  %v116 = vunpack.c.h.b16 %v32
  %v117 = vunpack.c.l.b16 %v33
  %v118 = vunpack.c.h.b16 %v33
  %v119 = vunpack.c.l.b16 %v34
  %v120 = vunpack.c.h.b16 %v34
  %v121 = vunpack.c.l.b16 %v35
  %v122 = vunpack.c.h.b16 %v35
  %v123 = vunpack.c.l.b16 %v36
  %v124 = vunpack.c.h.b16 %v36
  %v125 = vunpack.c.l.b16 %v37
  %v126 = vunpack.c.h.b16 %v37
  %v127 = vunpack.c.l.b16 %v38
  %v128 = vunpack.c.h.b16 %v38
  %v129 = vunpack.c.l.b16 %v39
  %v130 = vunpack.c.h.b16 %v39
  %v131 = vunpack.c.l.b16 %v40
  %v132 = vunpack.c.h.b16 %v40
  %v133 = vunpack.c.l.b16 %v41
  %v134 = vunpack.c.h.b16 %v41
  %v135 = vunpack.c.l.b16 %v42
  %v136 = vunpack.c.h.b16 %v42
  %v137 = vunpack.c.l.b16 %v43
  %v138 = vunpack.c.h.b16 %v43
  %v139 = vunpack.c.l.b16 %v44
  %v140 = vunpack.c.h.b16 %v44
  %v141 = vunpack.c.l.b16 %v45
  %v142 = vunpack.c.h.b16 %v45
  %v143 = vunpack.c.l.b16 %v46
  %v144 = vunpack.c.h.b16 %v46
  %v145 = vunpack.c.l.b16 %v47
  %v146 = vunpack.c.h.b16 %v47
  %v147 = vunpack.c.l.b16 %v48
  %v148 = vunpack.c.h.b16 %v48
  %v149 = vunpack.c.l.b16 %v49
  %v150 = vunpack.c.h.b16 %v49
  %v151 = vpack.c.b16 %v91, %v87
  %v152 = vpack.c.b16 %v92, %v88
  %v153 = vpack.c.b16 %v93, %v89
  %v154 = vpack.c.b16 %v94, %v90
  %v155 = vpack.c.b16 %v99, %v95
  %v156 = vpack.c.b16 %v100, %v96
  %v157 = vpack.c.b16 %v101, %v97
  %v158 = vpack.c.b16 %v102, %v98
  %v159 = vpack.c.b16 %v107, %v103
  %v160 = vpack.c.b16 %v108, %v104
  %v161 = vpack.c.b16 %v109, %v105
  %v162 = vpack.c.b16 %v110, %v106
  %v163 = vpack.c.b16 %v115, %v111
  %v164 = vpack.c.b16 %v116, %v112
  %v165 = vpack.c.b16 %v117, %v113
  %v166 = vpack.c.b16 %v118, %v114
  %v167 = vpack.c.b16 %v123, %v119
  %v168 = vpack.c.b16 %v124, %v120
  %v169 = vpack.c.b16 %v125, %v121
  %v170 = vpack.c.b16 %v126, %v122
  %v171 = vpack.c.b16 %v131, %v127
  %v172 = vpack.c.b16 %v132, %v128
  %v173 = vpack.c.b16 %v133, %v129
  %v174 = vpack.c.b16 %v134, %v130
  %v175 = vpack.c.b16 %v139, %v135
  %v176 = vpack.c.b16 %v140, %v136
  %v177 = vpack.c.b16 %v141, %v137
  %v178 = vpack.c.b16 %v142, %v138
  %v179 = vpack.c.b16 %v147, %v143
  %v180 = vpack.c.b16 %v148, %v144
  %v181 = vpack.c.b16 %v149, %v145
  %v182 = vpack.c.b16 %v150, %v146
  %215 = vmatprep.subr.bf16.mxu0 %v152
  %216 = vmatpush1.bf16.msra.mxu0 %v151
  %217 = vmatprep.subr.bf16.mxu0 %v156
  %218 = vmatpush1.bf16.msra.mxu0 %v155
  %219 = vmatprep.subr.bf16.mxu0 %v160
  %220 = vmatpush1.bf16.msra.mxu0 %v159
  %221 = vmatprep.subr.bf16.mxu0 %v164
  %222 = vmatpush1.bf16.msra.mxu0 %v163
  %223 = vmatprep.subr.bf16.mxu0 %v168
  %224 = vmatpush1.bf16.msra.mxu0 %v167
  %225 = vmatprep.subr.bf16.mxu0 %v172
  %226 = vmatpush1.bf16.msra.mxu0 %v171
  %227 = vmatprep.subr.bf16.mxu0 %v176
  %228 = vmatpush1.bf16.msra.mxu0 %v175
  %229 = vmatprep.subr.bf16.mxu0 %v180
  %230 = vmatpush1.bf16.msra.mxu0 %v179
  %231 = vmatprep.subr.bf16.mxu0 0
  %232 = vmatpush1.bf16.msra.mxu0 0
  %233 = vmatprep.subr.bf16.mxu0 0
  %234 = vmatpush1.bf16.msra.mxu0 0
  %235 = vmatprep.subr.bf16.mxu0 0
  %236 = vmatpush1.bf16.msra.mxu0 0
  %237 = vmatprep.subr.bf16.mxu0 0
  %238 = vmatpush1.bf16.msra.mxu0 0
  %239 = vmatprep.subr.bf16.mxu0 0
  %240 = vmatpush1.bf16.msra.mxu0 0
  %241 = vmatprep.subr.bf16.mxu0 0
  %242 = vmatpush1.bf16.msra.mxu0 0
  %243 = vmatprep.subr.bf16.mxu0 0
  %244 = vmatpush1.bf16.msra.mxu0 0
  %245 = vmatprep.subr.bf16.mxu0 0
  %246 = vmatpush1.bf16.msra.mxu0 0
  %247 = vmatprep.mubr.bf16.mxu0 0
  %248 = vmatmul.mubr.bf16.gmra.mrb[0].mxu0 %v54
  %v249 = vpop.f32.mrb[0].mxu0
  %v250 = vadd.f32 0.0, %v249
  %v251 = vpop.f32.mrb[0].mxu0
  %v252 = vadd.f32 0.0, %v251
  %v253 = vpop.f32.mrb[0].mxu0
  %v254 = vpop.f32.mrb[0].mxu0
  %255 = vdwg.mxu0
  %256 = vmatprep.subr.bf16.mxu0 %v154
  %257 = vmatpush1.bf16.msra.mxu0 %v153
  %258 = vmatprep.subr.bf16.mxu0 %v158
  %259 = vmatpush1.bf16.msra.mxu0 %v157
  %260 = vmatprep.subr.bf16.mxu0 %v162
  %261 = vmatpush1.bf16.msra.mxu0 %v161
  %262 = vmatprep.subr.bf16.mxu0 %v166
  %263 = vmatpush1.bf16.msra.mxu0 %v165
  %264 = vmatprep.subr.bf16.mxu0 %v170
  %265 = vmatpush1.bf16.msra.mxu0 %v169
  %266 = vmatprep.subr.bf16.mxu0 %v174
  %267 = vmatpush1.bf16.msra.mxu0 %v173
  %268 = vmatprep.subr.bf16.mxu0 %v178
  %269 = vmatpush1.bf16.msra.mxu0 %v177
  %270 = vmatprep.subr.bf16.mxu0 %v182
  %271 = vmatpush1.bf16.msra.mxu0 %v181
  %272 = vmatprep.subr.bf16.mxu0 0
  %273 = vmatpush1.bf16.msra.mxu0 0
  %274 = vmatprep.subr.bf16.mxu0 0
  %275 = vmatpush1.bf16.msra.mxu0 0
  %276 = vmatprep.subr.bf16.mxu0 0
  %277 = vmatpush1.bf16.msra.mxu0 0
  %278 = vmatprep.subr.bf16.mxu0 0
  %279 = vmatpush1.bf16.msra.mxu0 0
  %280 = vmatprep.subr.bf16.mxu0 0
  %281 = vmatpush1.bf16.msra.mxu0 0
  %282 = vmatprep.subr.bf16.mxu0 0
  %283 = vmatpush1.bf16.msra.mxu0 0
  %284 = vmatprep.subr.bf16.mxu0 0
  %285 = vmatpush1.bf16.msra.mxu0 0
  %286 = vmatprep.subr.bf16.mxu0 0
  %287 = vmatpush1.bf16.msra.mxu0 0
  %288 = vmatprep.mubr.bf16.mxu0 0
  %289 = vmatmul.mubr.bf16.gmra.mrb[0].mxu0 %v54
  %v290 = vpop.f32.mrb[0].mxu0
  %v291 = vadd.f32 0.0, %v290
  %v292 = vpop.f32.mrb[0].mxu0
  %v293 = vadd.f32 0.0, %v292
  %v294 = vpop.f32.mrb[0].mxu0
  %v295 = vpop.f32.mrb[0].mxu0
  %296 = vdwg.mxu0
  %v297 = vunpack.c.l.bf16 %v52
  %v298 = vunpack.c.h.bf16 %v52
  %v299 = vunpack.c.l.bf16 %v53
  %v300 = vunpack.c.h.bf16 %v53
  %v301 = vadd.f32 %v297, %v250
  %v302 = vadd.f32 %v298, %v252
  %v303 = vadd.f32 %v299, %v291
  %v304 = vadd.f32 %v300, %v293
  %v305 = vxor.u32 %v301, 2147483648
  %v306 = vmul.f32 %v305, 1.442695
  %v307 = vpow.pop %v306
  %v308 = vadd.f32 %v307, 1.0
  %v309 = vrcp.pop %v308
  %v310 = vmul.f32 1.0, %v309
  %v311 = vxor.u32 %v302, 2147483648
  %v312 = vmul.f32 %v311, 1.442695
  %v313 = vpow.pop %v312
  %v314 = vadd.f32 %v313, 1.0
  %v315 = vrcp.pop %v314
  %v316 = vmul.f32 1.0, %v315
  %v317 = vtanh.pop %v303
  %v318 = vxor.u32 %v304, 2147483648
  %v319 = vmul.f32 %v318, 1.442695
  %v320 = vpow.pop %v319
  %v321 = vadd.f32 %v320, 1.0
  %v322 = vrcp.pop %v321
  %v323 = vmul.f32 1.0, %v322
  %v324 = vmul.f32 %v316, %v51
  %v325 = vmul.f32 %v310, %v317
  %v326 = vadd.f32 %v324, %v325
  %v327 = vtanh.pop %v326
  %v328 = vmul.f32 %v323, %v327
  %v329 = vpack.c.bf16 %v328, %v328
  %330 = vst [vmem:[%s2] sm:$0xf] %v329
  %s331 = scalar_lea.vmem %s0, 16
  %v332 = vld [vmem:[%s331] sm:$0xff]
  %v333 = vld [vmem:[%s331 + $0x8] sm:$0xff]
  %334 = vmatprep.subr.bf16.mxu0 %v152
  %335 = vmatpush1.bf16.msra.mxu0 %v151
  %336 = vmatprep.subr.bf16.mxu0 %v156
  %337 = vmatpush1.bf16.msra.mxu0 %v155
  %338 = vmatprep.subr.bf16.mxu0 %v160
  %339 = vmatpush1.bf16.msra.mxu0 %v159
  %340 = vmatprep.subr.bf16.mxu0 %v164
  %341 = vmatpush1.bf16.msra.mxu0 %v163
  %342 = vmatprep.subr.bf16.mxu0 %v168
  %343 = vmatpush1.bf16.msra.mxu0 %v167
  %344 = vmatprep.subr.bf16.mxu0 %v172
  %345 = vmatpush1.bf16.msra.mxu0 %v171
  %346 = vmatprep.subr.bf16.mxu0 %v176
  %347 = vmatpush1.bf16.msra.mxu0 %v175
  %348 = vmatprep.subr.bf16.mxu0 %v180
  %349 = vmatpush1.bf16.msra.mxu0 %v179
  %350 = vmatprep.subr.bf16.mxu0 0
  %351 = vmatpush1.bf16.msra.mxu0 0
  %352 = vmatprep.subr.bf16.mxu0 0
  %353 = vmatpush1.bf16.msra.mxu0 0
  %354 = vmatprep.subr.bf16.mxu0 0
  %355 = vmatpush1.bf16.msra.mxu0 0
  %356 = vmatprep.subr.bf16.mxu0 0
  %357 = vmatpush1.bf16.msra.mxu0 0
  %358 = vmatprep.subr.bf16.mxu0 0
  %359 = vmatpush1.bf16.msra.mxu0 0
  %360 = vmatprep.subr.bf16.mxu0 0
  %361 = vmatpush1.bf16.msra.mxu0 0
  %362 = vmatprep.subr.bf16.mxu0 0
  %363 = vmatpush1.bf16.msra.mxu0 0
  %364 = vmatprep.subr.bf16.mxu0 0
  %365 = vmatpush1.bf16.msra.mxu0 0
  %366 = vmatprep.mubr.bf16.mxu0 0
  %367 = vmatmul.mubr.bf16.gmra.mrb[0].mxu0 %v329
  %v368 = vpop.f32.mrb[0].mxu0
  %v369 = vadd.f32 0.0, %v368
  %v370 = vpop.f32.mrb[0].mxu0
  %v371 = vadd.f32 0.0, %v370
  %v372 = vpop.f32.mrb[0].mxu0
  %v373 = vpop.f32.mrb[0].mxu0
  %374 = vdwg.mxu0
  %375 = vmatprep.subr.bf16.mxu0 %v154
  %376 = vmatpush1.bf16.msra.mxu0 %v153
  %377 = vmatprep.subr.bf16.mxu0 %v158
  %378 = vmatpush1.bf16.msra.mxu0 %v157
  %379 = vmatprep.subr.bf16.mxu0 %v162
  %380 = vmatpush1.bf16.msra.mxu0 %v161
  %381 = vmatprep.subr.bf16.mxu0 %v166
  %382 = vmatpush1.bf16.msra.mxu0 %v165
  %383 = vmatprep.subr.bf16.mxu0 %v170
  %384 = vmatpush1.bf16.msra.mxu0 %v169
  %385 = vmatprep.subr.bf16.mxu0 %v174
  %386 = vmatpush1.bf16.msra.mxu0 %v173
  %387 = vmatprep.subr.bf16.mxu0 %v178
  %388 = vmatpush1.bf16.msra.mxu0 %v177
  %389 = vmatprep.subr.bf16.mxu0 %v182
  %390 = vmatpush1.bf16.msra.mxu0 %v181
  %391 = vmatprep.subr.bf16.mxu0 0
  %392 = vmatpush1.bf16.msra.mxu0 0
  %393 = vmatprep.subr.bf16.mxu0 0
  %394 = vmatpush1.bf16.msra.mxu0 0
  %395 = vmatprep.subr.bf16.mxu0 0
  %396 = vmatpush1.bf16.msra.mxu0 0
  %397 = vmatprep.subr.bf16.mxu0 0
  %398 = vmatpush1.bf16.msra.mxu0 0
  %399 = vmatprep.subr.bf16.mxu0 0
  %400 = vmatpush1.bf16.msra.mxu0 0
  %401 = vmatprep.subr.bf16.mxu0 0
  %402 = vmatpush1.bf16.msra.mxu0 0
  %403 = vmatprep.subr.bf16.mxu0 0
  %404 = vmatpush1.bf16.msra.mxu0 0
  %405 = vmatprep.subr.bf16.mxu0 0
  %406 = vmatpush1.bf16.msra.mxu0 0
  %407 = vmatprep.mubr.bf16.mxu0 0
  %408 = vmatmul.mubr.bf16.gmra.mrb[0].mxu0 %v329
  %v409 = vpop.f32.mrb[0].mxu0
  %v410 = vadd.f32 0.0, %v409
  %v411 = vpop.f32.mrb[0].mxu0
  %v412 = vadd.f32 0.0, %v411
  %v413 = vpop.f32.mrb[0].mxu0
  %v414 = vpop.f32.mrb[0].mxu0
  %415 = vdwg.mxu0
  %v416 = vunpack.c.l.bf16 %v332
  %v417 = vunpack.c.h.bf16 %v332
  %v418 = vunpack.c.l.bf16 %v333
  %v419 = vunpack.c.h.bf16 %v333
  %v420 = vadd.f32 %v416, %v369
  %v421 = vadd.f32 %v417, %v371
  %v422 = vadd.f32 %v418, %v410
  %v423 = vadd.f32 %v419, %v412
  %v424 = vxor.u32 %v420, 2147483648
  %v425 = vmul.f32 %v424, 1.442695
  %v426 = vpow.pop %v425
  %v427 = vadd.f32 %v426, 1.0
  %v428 = vrcp.pop %v427
  %v429 = vmul.f32 1.0, %v428
  %v430 = vxor.u32 %v421, 2147483648
  %v431 = vmul.f32 %v430, 1.442695
  %v432 = vpow.pop %v431
  %v433 = vadd.f32 %v432, 1.0
  %v434 = vrcp.pop %v433
  %v435 = vmul.f32 1.0, %v434
  %v436 = vtanh.pop %v422
  %v437 = vxor.u32 %v423, 2147483648
  %v438 = vmul.f32 %v437, 1.442695
  %v439 = vpow.pop %v438
  %v440 = vadd.f32 %v439, 1.0
  %v441 = vrcp.pop %v440
  %v442 = vmul.f32 1.0, %v441
  %v443 = vmul.f32 %v435, %v326
  %v444 = vmul.f32 %v429, %v436
  %v445 = vadd.f32 %v443, %v444
  %v446 = vtanh.pop %v445
  %v447 = vmul.f32 %v442, %v446
  %v448 = vpack.c.bf16 %v447, %v447
  %s449 = scalar_lea.vmem %s2, 4
  %450 = vst [vmem:[%s449] sm:$0xf] %v448
  %s451 = scalar_lea.vmem %s0, 32
  %v452 = vld [vmem:[%s451] sm:$0xff]
  %v453 = vld [vmem:[%s451 + $0x8] sm:$0xff]
  %454 = vmatprep.subr.bf16.mxu0 %v152
  %455 = vmatpush1.bf16.msra.mxu0 %v151
  %456 = vmatprep.subr.bf16.mxu0 %v156
  %457 = vmatpush1.bf16.msra.mxu0 %v155
  %458 = vmatprep.subr.bf16.mxu0 %v160
  %459 = vmatpush1.bf16.msra.mxu0 %v159
  %460 = vmatprep.subr.bf16.mxu0 %v164
  %461 = vmatpush1.bf16.msra.mxu0 %v163
  %462 = vmatprep.subr.bf16.mxu0 %v168
  %463 = vmatpush1.bf16.msra.mxu0 %v167
  %464 = vmatprep.subr.bf16.mxu0 %v172
  %465 = vmatpush1.bf16.msra.mxu0 %v171
  %466 = vmatprep.subr.bf16.mxu0 %v176
  %467 = vmatpush1.bf16.msra.mxu0 %v175
  %468 = vmatprep.subr.bf16.mxu0 %v180
  %469 = vmatpush1.bf16.msra.mxu0 %v179
  %470 = vmatprep.subr.bf16.mxu0 0
  %471 = vmatpush1.bf16.msra.mxu0 0
  %472 = vmatprep.subr.bf16.mxu0 0
  %473 = vmatpush1.bf16.msra.mxu0 0
  %474 = vmatprep.subr.bf16.mxu0 0
  %475 = vmatpush1.bf16.msra.mxu0 0
  %476 = vmatprep.subr.bf16.mxu0 0
  %477 = vmatpush1.bf16.msra.mxu0 0
  %478 = vmatprep.subr.bf16.mxu0 0
  %479 = vmatpush1.bf16.msra.mxu0 0
  %480 = vmatprep.subr.bf16.mxu0 0
  %481 = vmatpush1.bf16.msra.mxu0 0
  %482 = vmatprep.subr.bf16.mxu0 0
  %483 = vmatpush1.bf16.msra.mxu0 0
  %484 = vmatprep.subr.bf16.mxu0 0
  %485 = vmatpush1.bf16.msra.mxu0 0
  %486 = vmatprep.mubr.bf16.mxu0 0
  %487 = vmatmul.mubr.bf16.gmra.mrb[0].mxu0 %v448
  %v488 = vpop.f32.mrb[0].mxu0
  %v489 = vadd.f32 0.0, %v488
  %v490 = vpop.f32.mrb[0].mxu0
  %v491 = vadd.f32 0.0, %v490
  %v492 = vpop.f32.mrb[0].mxu0
  %v493 = vpop.f32.mrb[0].mxu0
  %494 = vdwg.mxu0
  %495 = vmatprep.subr.bf16.mxu0 %v154
  %496 = vmatpush1.bf16.msra.mxu0 %v153
  %497 = vmatprep.subr.bf16.mxu0 %v158
  %498 = vmatpush1.bf16.msra.mxu0 %v157
  %499 = vmatprep.subr.bf16.mxu0 %v162
  %500 = vmatpush1.bf16.msra.mxu0 %v161
  %501 = vmatprep.subr.bf16.mxu0 %v166
  %502 = vmatpush1.bf16.msra.mxu0 %v165
  %503 = vmatprep.subr.bf16.mxu0 %v170
  %504 = vmatpush1.bf16.msra.mxu0 %v169
  %505 = vmatprep.subr.bf16.mxu0 %v174
  %506 = vmatpush1.bf16.msra.mxu0 %v173
  %507 = vmatprep.subr.bf16.mxu0 %v178
  %508 = vmatpush1.bf16.msra.mxu0 %v177
  %509 = vmatprep.subr.bf16.mxu0 %v182
  %510 = vmatpush1.bf16.msra.mxu0 %v181
  %511 = vmatprep.subr.bf16.mxu0 0
  %512 = vmatpush1.bf16.msra.mxu0 0
  %513 = vmatprep.subr.bf16.mxu0 0
  %514 = vmatpush1.bf16.msra.mxu0 0
  %515 = vmatprep.subr.bf16.mxu0 0
  %516 = vmatpush1.bf16.msra.mxu0 0
  %517 = vmatprep.subr.bf16.mxu0 0
  %518 = vmatpush1.bf16.msra.mxu0 0
  %519 = vmatprep.subr.bf16.mxu0 0
  %520 = vmatpush1.bf16.msra.mxu0 0
  %521 = vmatprep.subr.bf16.mxu0 0
  %522 = vmatpush1.bf16.msra.mxu0 0
  %523 = vmatprep.subr.bf16.mxu0 0
  %524 = vmatpush1.bf16.msra.mxu0 0
  %525 = vmatprep.subr.bf16.mxu0 0
  %526 = vmatpush1.bf16.msra.mxu0 0
  %527 = vmatprep.mubr.bf16.mxu0 0
  %528 = vmatmul.mubr.bf16.gmra.mrb[0].mxu0 %v448
  %v529 = vpop.f32.mrb[0].mxu0
  %v530 = vadd.f32 0.0, %v529
  %v531 = vpop.f32.mrb[0].mxu0
  %v532 = vadd.f32 0.0, %v531
  %v533 = vpop.f32.mrb[0].mxu0
  %v534 = vpop.f32.mrb[0].mxu0
  %535 = vdwg.mxu0
  %v536 = vunpack.c.l.bf16 %v452
  %v537 = vunpack.c.h.bf16 %v452
  %v538 = vunpack.c.l.bf16 %v453
  %v539 = vunpack.c.h.bf16 %v453
  %v540 = vadd.f32 %v536, %v489
  %v541 = vadd.f32 %v537, %v491
  %v542 = vadd.f32 %v538, %v530
  %v543 = vadd.f32 %v539, %v532
  %v544 = vxor.u32 %v540, 2147483648
  %v545 = vmul.f32 %v544, 1.442695
  %v546 = vpow.pop %v545
  %v547 = vadd.f32 %v546, 1.0
  %v548 = vrcp.pop %v547
  %v549 = vmul.f32 1.0, %v548
  %v550 = vxor.u32 %v541, 2147483648
  %v551 = vmul.f32 %v550, 1.442695
  %v552 = vpow.pop %v551
  %v553 = vadd.f32 %v552, 1.0
  %v554 = vrcp.pop %v553
  %v555 = vmul.f32 1.0, %v554
  %v556 = vtanh.pop %v542
  %v557 = vxor.u32 %v543, 2147483648
  %v558 = vmul.f32 %v557, 1.442695
  %v559 = vpow.pop %v558
  %v560 = vadd.f32 %v559, 1.0
  %v561 = vrcp.pop %v560
  %v562 = vmul.f32 1.0, %v561
  %v563 = vmul.f32 %v555, %v445
  %v564 = vmul.f32 %v549, %v556
  %v565 = vadd.f32 %v563, %v564
  %v566 = vtanh.pop %v565
  %v567 = vmul.f32 %v562, %v566
  %v568 = vpack.c.bf16 %v567, %v567
  %s569 = scalar_lea.vmem %s2, 8
  %570 = vst [vmem:[%s569] sm:$0xf] %v568
  %s571 = scalar_lea.vmem %s0, 48
  %v572 = vld [vmem:[%s571] sm:$0xff]
  %v573 = vld [vmem:[%s571 + $0x8] sm:$0xff]
  %574 = vmatprep.subr.bf16.mxu0 %v152
  %575 = vmatpush1.bf16.msra.mxu0 %v151
  %576 = vmatprep.subr.bf16.mxu0 %v156
  %577 = vmatpush1.bf16.msra.mxu0 %v155
  %578 = vmatprep.subr.bf16.mxu0 %v160
  %579 = vmatpush1.bf16.msra.mxu0 %v159
  %580 = vmatprep.subr.bf16.mxu0 %v164
  %581 = vmatpush1.bf16.msra.mxu0 %v163
  %582 = vmatprep.subr.bf16.mxu0 %v168
  %583 = vmatpush1.bf16.msra.mxu0 %v167
  %584 = vmatprep.subr.bf16.mxu0 %v172
  %585 = vmatpush1.bf16.msra.mxu0 %v171
  %586 = vmatprep.subr.bf16.mxu0 %v176
  %587 = vmatpush1.bf16.msra.mxu0 %v175
  %588 = vmatprep.subr.bf16.mxu0 %v180
  %589 = vmatpush1.bf16.msra.mxu0 %v179
  %590 = vmatprep.subr.bf16.mxu0 0
  %591 = vmatpush1.bf16.msra.mxu0 0
  %592 = vmatprep.subr.bf16.mxu0 0
  %593 = vmatpush1.bf16.msra.mxu0 0
  %594 = vmatprep.subr.bf16.mxu0 0
  %595 = vmatpush1.bf16.msra.mxu0 0
  %596 = vmatprep.subr.bf16.mxu0 0
  %597 = vmatpush1.bf16.msra.mxu0 0
  %598 = vmatprep.subr.bf16.mxu0 0
  %599 = vmatpush1.bf16.msra.mxu0 0
  %600 = vmatprep.subr.bf16.mxu0 0
  %601 = vmatpush1.bf16.msra.mxu0 0
  %602 = vmatprep.subr.bf16.mxu0 0
  %603 = vmatpush1.bf16.msra.mxu0 0
  %604 = vmatprep.subr.bf16.mxu0 0
  %605 = vmatpush1.bf16.msra.mxu0 0
  %606 = vmatprep.mubr.bf16.mxu0 0
  %607 = vmatmul.mubr.bf16.gmra.mrb[0].mxu0 %v568
  %v608 = vpop.f32.mrb[0].mxu0
  %v609 = vadd.f32 0.0, %v608
  %v610 = vpop.f32.mrb[0].mxu0
  %v611 = vadd.f32 0.0, %v610
  %v612 = vpop.f32.mrb[0].mxu0
  %v613 = vpop.f32.mrb[0].mxu0
  %614 = vdwg.mxu0
  %615 = vmatprep.subr.bf16.mxu0 %v154
  %616 = vmatpush1.bf16.msra.mxu0 %v153
  %617 = vmatprep.subr.bf16.mxu0 %v158
  %618 = vmatpush1.bf16.msra.mxu0 %v157
  %619 = vmatprep.subr.bf16.mxu0 %v162
  %620 = vmatpush1.bf16.msra.mxu0 %v161
  %621 = vmatprep.subr.bf16.mxu0 %v166
  %622 = vmatpush1.bf16.msra.mxu0 %v165
  %623 = vmatprep.subr.bf16.mxu0 %v170
  %624 = vmatpush1.bf16.msra.mxu0 %v169
  %625 = vmatprep.subr.bf16.mxu0 %v174
  %626 = vmatpush1.bf16.msra.mxu0 %v173
  %627 = vmatprep.subr.bf16.mxu0 %v178
  %628 = vmatpush1.bf16.msra.mxu0 %v177
  %629 = vmatprep.subr.bf16.mxu0 %v182
  %630 = vmatpush1.bf16.msra.mxu0 %v181
  %631 = vmatprep.subr.bf16.mxu0 0
  %632 = vmatpush1.bf16.msra.mxu0 0
  %633 = vmatprep.subr.bf16.mxu0 0
  %634 = vmatpush1.bf16.msra.mxu0 0
  %635 = vmatprep.subr.bf16.mxu0 0
  %636 = vmatpush1.bf16.msra.mxu0 0
  %637 = vmatprep.subr.bf16.mxu0 0
  %638 = vmatpush1.bf16.msra.mxu0 0
  %639 = vmatprep.subr.bf16.mxu0 0
  %640 = vmatpush1.bf16.msra.mxu0 0
  %641 = vmatprep.subr.bf16.mxu0 0
  %642 = vmatpush1.bf16.msra.mxu0 0
  %643 = vmatprep.subr.bf16.mxu0 0
  %644 = vmatpush1.bf16.msra.mxu0 0
  %645 = vmatprep.subr.bf16.mxu0 0
  %646 = vmatpush1.bf16.msra.mxu0 0
  %647 = vmatprep.mubr.bf16.mxu0 0
  %648 = vmatmul.mubr.bf16.gmra.mrb[0].mxu0 %v568
  %v649 = vpop.f32.mrb[0].mxu0
  %v650 = vadd.f32 0.0, %v649
  %v651 = vpop.f32.mrb[0].mxu0
  %v652 = vadd.f32 0.0, %v651
  %v653 = vpop.f32.mrb[0].mxu0
  %v654 = vpop.f32.mrb[0].mxu0
  %655 = vdwg.mxu0
  %v656 = vunpack.c.l.bf16 %v572
  %v657 = vunpack.c.h.bf16 %v572
  %v658 = vunpack.c.l.bf16 %v573
  %v659 = vunpack.c.h.bf16 %v573
  %v660 = vadd.f32 %v656, %v609
  %v661 = vadd.f32 %v657, %v611
  %v662 = vadd.f32 %v658, %v650
  %v663 = vadd.f32 %v659, %v652
  %v664 = vxor.u32 %v660, 2147483648
  %v665 = vmul.f32 %v664, 1.442695
  %v666 = vpow.pop %v665
  %v667 = vadd.f32 %v666, 1.0
  %v668 = vrcp.pop %v667
  %v669 = vmul.f32 1.0, %v668
  %v670 = vxor.u32 %v661, 2147483648
  %v671 = vmul.f32 %v670, 1.442695
  %v672 = vpow.pop %v671
  %v673 = vadd.f32 %v672, 1.0
  %v674 = vrcp.pop %v673
  %v675 = vmul.f32 1.0, %v674
  %v676 = vtanh.pop %v662
  %v677 = vxor.u32 %v663, 2147483648
  %v678 = vmul.f32 %v677, 1.442695
  %v679 = vpow.pop %v678
  %v680 = vadd.f32 %v679, 1.0
  %v681 = vrcp.pop %v680
  %v682 = vmul.f32 1.0, %v681
  %v683 = vmul.f32 %v675, %v565
  %v684 = vmul.f32 %v669, %v676
  %v685 = vadd.f32 %v683, %v684
  %v686 = vtanh.pop %v685
  %v687 = vmul.f32 %v682, %v686
  %v688 = vpack.c.bf16 %v687, %v687
  %s689 = scalar_lea.vmem %s2, 12
  %690 = vst [vmem:[%s689] sm:$0xf] %v688
  %s691 = scalar_lea.vmem %s0, 64
  %v692 = vld [vmem:[%s691] sm:$0xff]
  %v693 = vld [vmem:[%s691 + $0x8] sm:$0xff]
  %694 = vmatprep.subr.bf16.mxu0 %v152
  %695 = vmatpush1.bf16.msra.mxu0 %v151
  %696 = vmatprep.subr.bf16.mxu0 %v156
  %697 = vmatpush1.bf16.msra.mxu0 %v155
  %698 = vmatprep.subr.bf16.mxu0 %v160
  %699 = vmatpush1.bf16.msra.mxu0 %v159
  %700 = vmatprep.subr.bf16.mxu0 %v164
  %701 = vmatpush1.bf16.msra.mxu0 %v163
  %702 = vmatprep.subr.bf16.mxu0 %v168
  %703 = vmatpush1.bf16.msra.mxu0 %v167
  %704 = vmatprep.subr.bf16.mxu0 %v172
  %705 = vmatpush1.bf16.msra.mxu0 %v171
  %706 = vmatprep.subr.bf16.mxu0 %v176
  %707 = vmatpush1.bf16.msra.mxu0 %v175
  %708 = vmatprep.subr.bf16.mxu0 %v180
  %709 = vmatpush1.bf16.msra.mxu0 %v179
  %710 = vmatprep.subr.bf16.mxu0 0
  %711 = vmatpush1.bf16.msra.mxu0 0
  %712 = vmatprep.subr.bf16.mxu0 0
  %713 = vmatpush1.bf16.msra.mxu0 0
  %714 = vmatprep.subr.bf16.mxu0 0
  %715 = vmatpush1.bf16.msra.mxu0 0
  %716 = vmatprep.subr.bf16.mxu0 0
  %717 = vmatpush1.bf16.msra.mxu0 0
  %718 = vmatprep.subr.bf16.mxu0 0
  %719 = vmatpush1.bf16.msra.mxu0 0
  %720 = vmatprep.subr.bf16.mxu0 0
  %721 = vmatpush1.bf16.msra.mxu0 0
  %722 = vmatprep.subr.bf16.mxu0 0
  %723 = vmatpush1.bf16.msra.mxu0 0
  %724 = vmatprep.subr.bf16.mxu0 0
  %725 = vmatpush1.bf16.msra.mxu0 0
  %726 = vmatprep.mubr.bf16.mxu0 0
  %727 = vmatmul.mubr.bf16.gmra.mrb[0].mxu0 %v688
  %v728 = vpop.f32.mrb[0].mxu0
  %v729 = vadd.f32 0.0, %v728
  %v730 = vpop.f32.mrb[0].mxu0
  %v731 = vadd.f32 0.0, %v730
  %v732 = vpop.f32.mrb[0].mxu0
  %v733 = vpop.f32.mrb[0].mxu0
  %734 = vdwg.mxu0
  %735 = vmatprep.subr.bf16.mxu0 %v154
  %736 = vmatpush1.bf16.msra.mxu0 %v153
  %737 = vmatprep.subr.bf16.mxu0 %v158
  %738 = vmatpush1.bf16.msra.mxu0 %v157
  %739 = vmatprep.subr.bf16.mxu0 %v162
  %740 = vmatpush1.bf16.msra.mxu0 %v161
  %741 = vmatprep.subr.bf16.mxu0 %v166
  %742 = vmatpush1.bf16.msra.mxu0 %v165
  %743 = vmatprep.subr.bf16.mxu0 %v170
  %744 = vmatpush1.bf16.msra.mxu0 %v169
  %745 = vmatprep.subr.bf16.mxu0 %v174
  %746 = vmatpush1.bf16.msra.mxu0 %v173
  %747 = vmatprep.subr.bf16.mxu0 %v178
  %748 = vmatpush1.bf16.msra.mxu0 %v177
  %749 = vmatprep.subr.bf16.mxu0 %v182
  %750 = vmatpush1.bf16.msra.mxu0 %v181
  %751 = vmatprep.subr.bf16.mxu0 0
  %752 = vmatpush1.bf16.msra.mxu0 0
  %753 = vmatprep.subr.bf16.mxu0 0
  %754 = vmatpush1.bf16.msra.mxu0 0
  %755 = vmatprep.subr.bf16.mxu0 0
  %756 = vmatpush1.bf16.msra.mxu0 0
  %757 = vmatprep.subr.bf16.mxu0 0
  %758 = vmatpush1.bf16.msra.mxu0 0
  %759 = vmatprep.subr.bf16.mxu0 0
  %760 = vmatpush1.bf16.msra.mxu0 0
  %761 = vmatprep.subr.bf16.mxu0 0
  %762 = vmatpush1.bf16.msra.mxu0 0
  %763 = vmatprep.subr.bf16.mxu0 0
  %764 = vmatpush1.bf16.msra.mxu0 0
  %765 = vmatprep.subr.bf16.mxu0 0
  %766 = vmatpush1.bf16.msra.mxu0 0
  %767 = vmatprep.mubr.bf16.mxu0 0
  %768 = vmatmul.mubr.bf16.gmra.mrb[0].mxu0 %v688
  %v769 = vpop.f32.mrb[0].mxu0
  %v770 = vadd.f32 0.0, %v769
  %v771 = vpop.f32.mrb[0].mxu0
  %v772 = vadd.f32 0.0, %v771
  %v773 = vpop.f32.mrb[0].mxu0
  %v774 = vpop.f32.mrb[0].mxu0
  %775 = vdwg.mxu0
  %v776 = vunpack.c.l.bf16 %v692
  %v777 = vunpack.c.h.bf16 %v692
  %v778 = vunpack.c.l.bf16 %v693
  %v779 = vunpack.c.h.bf16 %v693
  %v780 = vadd.f32 %v776, %v729
  %v781 = vadd.f32 %v777, %v731
  %v782 = vadd.f32 %v778, %v770
  %v783 = vadd.f32 %v779, %v772
  %v784 = vxor.u32 %v780, 2147483648
  %v785 = vmul.f32 %v784, 1.442695
  %v786 = vpow.pop %v785
  %v787 = vadd.f32 %v786, 1.0
  %v788 = vrcp.pop %v787
  %v789 = vmul.f32 1.0, %v788
  %v790 = vxor.u32 %v781, 2147483648
  %v791 = vmul.f32 %v790, 1.442695
  %v792 = vpow.pop %v791
  %v793 = vadd.f32 %v792, 1.0
  %v794 = vrcp.pop %v793
  %v795 = vmul.f32 1.0, %v794
  %v796 = vtanh.pop %v782
  %v797 = vxor.u32 %v783, 2147483648
  %v798 = vmul.f32 %v797, 1.442695
  %v799 = vpow.pop %v798
  %v800 = vadd.f32 %v799, 1.0
  %v801 = vrcp.pop %v800
  %v802 = vmul.f32 1.0, %v801
  %v803 = vmul.f32 %v795, %v685
  %v804 = vmul.f32 %v789, %v796
  %v805 = vadd.f32 %v803, %v804
  %v806 = vtanh.pop %v805
  %v807 = vmul.f32 %v802, %v806
  %v808 = vpack.c.bf16 %v807, %v807
  %s809 = scalar_lea.vmem %s2, 16
  %810 = vst [vmem:[%s809] sm:$0xf] %v808
  %s811 = scalar_lea.vmem %s0, 80
  %v812 = vld [vmem:[%s811] sm:$0xff]
  %v813 = vld [vmem:[%s811 + $0x8] sm:$0xff]
  %814 = vmatprep.subr.bf16.mxu0 %v152
  %815 = vmatpush1.bf16.msra.mxu0 %v151
  %816 = vmatprep.subr.bf16.mxu0 %v156
  %817 = vmatpush1.bf16.msra.mxu0 %v155
  %818 = vmatprep.subr.bf16.mxu0 %v160
  %819 = vmatpush1.bf16.msra.mxu0 %v159
  %820 = vmatprep.subr.bf16.mxu0 %v164
  %821 = vmatpush1.bf16.msra.mxu0 %v163
  %822 = vmatprep.subr.bf16.mxu0 %v168
  %823 = vmatpush1.bf16.msra.mxu0 %v167
  %824 = vmatprep.subr.bf16.mxu0 %v172
  %825 = vmatpush1.bf16.msra.mxu0 %v171
  %826 = vmatprep.subr.bf16.mxu0 %v176
  %827 = vmatpush1.bf16.msra.mxu0 %v175
  %828 = vmatprep.subr.bf16.mxu0 %v180
  %829 = vmatpush1.bf16.msra.mxu0 %v179
  %830 = vmatprep.subr.bf16.mxu0 0
  %831 = vmatpush1.bf16.msra.mxu0 0
  %832 = vmatprep.subr.bf16.mxu0 0
  %833 = vmatpush1.bf16.msra.mxu0 0
  %834 = vmatprep.subr.bf16.mxu0 0
  %835 = vmatpush1.bf16.msra.mxu0 0
  %836 = vmatprep.subr.bf16.mxu0 0
  %837 = vmatpush1.bf16.msra.mxu0 0
  %838 = vmatprep.subr.bf16.mxu0 0
  %839 = vmatpush1.bf16.msra.mxu0 0
  %840 = vmatprep.subr.bf16.mxu0 0
  %841 = vmatpush1.bf16.msra.mxu0 0
  %842 = vmatprep.subr.bf16.mxu0 0
  %843 = vmatpush1.bf16.msra.mxu0 0
  %844 = vmatprep.subr.bf16.mxu0 0
  %845 = vmatpush1.bf16.msra.mxu0 0
  %846 = vmatprep.mubr.bf16.mxu0 0
  %847 = vmatmul.mubr.bf16.gmra.mrb[0].mxu0 %v808
  %v848 = vpop.f32.mrb[0].mxu0
  %v849 = vadd.f32 0.0, %v848
  %v850 = vpop.f32.mrb[0].mxu0
  %v851 = vadd.f32 0.0, %v850
  %v852 = vpop.f32.mrb[0].mxu0
  %v853 = vpop.f32.mrb[0].mxu0
  %854 = vdwg.mxu0
  %855 = vmatprep.subr.bf16.mxu0 %v154
  %856 = vmatpush1.bf16.msra.mxu0 %v153
  %857 = vmatprep.subr.bf16.mxu0 %v158
  %858 = vmatpush1.bf16.msra.mxu0 %v157
  %859 = vmatprep.subr.bf16.mxu0 %v162
  %860 = vmatpush1.bf16.msra.mxu0 %v161
  %861 = vmatprep.subr.bf16.mxu0 %v166
  %862 = vmatpush1.bf16.msra.mxu0 %v165
  %863 = vmatprep.subr.bf16.mxu0 %v170
  %864 = vmatpush1.bf16.msra.mxu0 %v169
  %865 = vmatprep.subr.bf16.mxu0 %v174
  %866 = vmatpush1.bf16.msra.mxu0 %v173
  %867 = vmatprep.subr.bf16.mxu0 %v178
  %868 = vmatpush1.bf16.msra.mxu0 %v177
  %869 = vmatprep.subr.bf16.mxu0 %v182
  %870 = vmatpush1.bf16.msra.mxu0 %v181
  %871 = vmatprep.subr.bf16.mxu0 0
  %872 = vmatpush1.bf16.msra.mxu0 0
  %873 = vmatprep.subr.bf16.mxu0 0
  %874 = vmatpush1.bf16.msra.mxu0 0
  %875 = vmatprep.subr.bf16.mxu0 0
  %876 = vmatpush1.bf16.msra.mxu0 0
  %877 = vmatprep.subr.bf16.mxu0 0
  %878 = vmatpush1.bf16.msra.mxu0 0
  %879 = vmatprep.subr.bf16.mxu0 0
  %880 = vmatpush1.bf16.msra.mxu0 0
  %881 = vmatprep.subr.bf16.mxu0 0
  %882 = vmatpush1.bf16.msra.mxu0 0
  %883 = vmatprep.subr.bf16.mxu0 0
  %884 = vmatpush1.bf16.msra.mxu0 0
  %885 = vmatprep.subr.bf16.mxu0 0
  %886 = vmatpush1.bf16.msra.mxu0 0
  %887 = vmatprep.mubr.bf16.mxu0 0
  %888 = vmatmul.mubr.bf16.gmra.mrb[0].mxu0 %v808
  %v889 = vpop.f32.mrb[0].mxu0
  %v890 = vadd.f32 0.0, %v889
  %v891 = vpop.f32.mrb[0].mxu0
  %v892 = vadd.f32 0.0, %v891
  %v893 = vpop.f32.mrb[0].mxu0
  %v894 = vpop.f32.mrb[0].mxu0
  %895 = vdwg.mxu0
  %v896 = vunpack.c.l.bf16 %v812
  %v897 = vunpack.c.h.bf16 %v812
  %v898 = vunpack.c.l.bf16 %v813
  %v899 = vunpack.c.h.bf16 %v813
  %v900 = vadd.f32 %v896, %v849
  %v901 = vadd.f32 %v897, %v851
  %v902 = vadd.f32 %v898, %v890
  %v903 = vadd.f32 %v899, %v892
  %v904 = vxor.u32 %v900, 2147483648
  %v905 = vmul.f32 %v904, 1.442695
  %v906 = vpow.pop %v905
  %v907 = vadd.f32 %v906, 1.0
  %v908 = vrcp.pop %v907
  %v909 = vmul.f32 1.0, %v908
  %v910 = vxor.u32 %v901, 2147483648
  %v911 = vmul.f32 %v910, 1.442695
  %v912 = vpow.pop %v911
  %v913 = vadd.f32 %v912, 1.0
  %v914 = vrcp.pop %v913
  %v915 = vmul.f32 1.0, %v914
  %v916 = vtanh.pop %v902
  %v917 = vxor.u32 %v903, 2147483648
  %v918 = vmul.f32 %v917, 1.442695
  %v919 = vpow.pop %v918
  %v920 = vadd.f32 %v919, 1.0
  %v921 = vrcp.pop %v920
  %v922 = vmul.f32 1.0, %v921
  %v923 = vmul.f32 %v915, %v805
  %v924 = vmul.f32 %v909, %v916
  %v925 = vadd.f32 %v923, %v924
  %v926 = vtanh.pop %v925
  %v927 = vmul.f32 %v922, %v926
  %v928 = vpack.c.bf16 %v927, %v927
  %s929 = scalar_lea.vmem %s2, 20
  %930 = vst [vmem:[%s929] sm:$0xf] %v928
  %s931 = scalar_lea.vmem %s0, 96
  %v932 = vld [vmem:[%s931] sm:$0xff]
  %v933 = vld [vmem:[%s931 + $0x8] sm:$0xff]
  %934 = vmatprep.subr.bf16.mxu0 %v152
  %935 = vmatpush1.bf16.msra.mxu0 %v151
  %936 = vmatprep.subr.bf16.mxu0 %v156
  %937 = vmatpush1.bf16.msra.mxu0 %v155
  %938 = vmatprep.subr.bf16.mxu0 %v160
  %939 = vmatpush1.bf16.msra.mxu0 %v159
  %940 = vmatprep.subr.bf16.mxu0 %v164
  %941 = vmatpush1.bf16.msra.mxu0 %v163
  %942 = vmatprep.subr.bf16.mxu0 %v168
  %943 = vmatpush1.bf16.msra.mxu0 %v167
  %944 = vmatprep.subr.bf16.mxu0 %v172
  %945 = vmatpush1.bf16.msra.mxu0 %v171
  %946 = vmatprep.subr.bf16.mxu0 %v176
  %947 = vmatpush1.bf16.msra.mxu0 %v175
  %948 = vmatprep.subr.bf16.mxu0 %v180
  %949 = vmatpush1.bf16.msra.mxu0 %v179
  %950 = vmatprep.subr.bf16.mxu0 0
  %951 = vmatpush1.bf16.msra.mxu0 0
  %952 = vmatprep.subr.bf16.mxu0 0
  %953 = vmatpush1.bf16.msra.mxu0 0
  %954 = vmatprep.subr.bf16.mxu0 0
  %955 = vmatpush1.bf16.msra.mxu0 0
  %956 = vmatprep.subr.bf16.mxu0 0
  %957 = vmatpush1.bf16.msra.mxu0 0
  %958 = vmatprep.subr.bf16.mxu0 0
  %959 = vmatpush1.bf16.msra.mxu0 0
  %960 = vmatprep.subr.bf16.mxu0 0
  %961 = vmatpush1.bf16.msra.mxu0 0
  %962 = vmatprep.subr.bf16.mxu0 0
  %963 = vmatpush1.bf16.msra.mxu0 0
  %964 = vmatprep.subr.bf16.mxu0 0
  %965 = vmatpush1.bf16.msra.mxu0 0
  %966 = vmatprep.mubr.bf16.mxu0 0
  %967 = vmatmul.mubr.bf16.gmra.mrb[0].mxu0 %v928
  %v968 = vpop.f32.mrb[0].mxu0
  %v969 = vadd.f32 0.0, %v968
  %v970 = vpop.f32.mrb[0].mxu0
  %v971 = vadd.f32 0.0, %v970
  %v972 = vpop.f32.mrb[0].mxu0
  %v973 = vpop.f32.mrb[0].mxu0
  %974 = vdwg.mxu0
  %975 = vmatprep.subr.bf16.mxu0 %v154
  %976 = vmatpush1.bf16.msra.mxu0 %v153
  %977 = vmatprep.subr.bf16.mxu0 %v158
  %978 = vmatpush1.bf16.msra.mxu0 %v157
  %979 = vmatprep.subr.bf16.mxu0 %v162
  %980 = vmatpush1.bf16.msra.mxu0 %v161
  %981 = vmatprep.subr.bf16.mxu0 %v166
  %982 = vmatpush1.bf16.msra.mxu0 %v165
  %983 = vmatprep.subr.bf16.mxu0 %v170
  %984 = vmatpush1.bf16.msra.mxu0 %v169
  %985 = vmatprep.subr.bf16.mxu0 %v174
  %986 = vmatpush1.bf16.msra.mxu0 %v173
  %987 = vmatprep.subr.bf16.mxu0 %v178
  %988 = vmatpush1.bf16.msra.mxu0 %v177
  %989 = vmatprep.subr.bf16.mxu0 %v182
  %990 = vmatpush1.bf16.msra.mxu0 %v181
  %991 = vmatprep.subr.bf16.mxu0 0
  %992 = vmatpush1.bf16.msra.mxu0 0
  %993 = vmatprep.subr.bf16.mxu0 0
  %994 = vmatpush1.bf16.msra.mxu0 0
  %995 = vmatprep.subr.bf16.mxu0 0
  %996 = vmatpush1.bf16.msra.mxu0 0
  %997 = vmatprep.subr.bf16.mxu0 0
  %998 = vmatpush1.bf16.msra.mxu0 0
  %999 = vmatprep.subr.bf16.mxu0 0
  %1000 = vmatpush1.bf16.msra.mxu0 0
  %1001 = vmatprep.subr.bf16.mxu0 0
  %1002 = vmatpush1.bf16.msra.mxu0 0
  %1003 = vmatprep.subr.bf16.mxu0 0
  %1004 = vmatpush1.bf16.msra.mxu0 0
  %1005 = vmatprep.subr.bf16.mxu0 0
  %1006 = vmatpush1.bf16.msra.mxu0 0
  %1007 = vmatprep.mubr.bf16.mxu0 0
  %1008 = vmatmul.mubr.bf16.gmra.mrb[0].mxu0 %v928
  %v1009 = vpop.f32.mrb[0].mxu0
  %v1010 = vadd.f32 0.0, %v1009
  %v1011 = vpop.f32.mrb[0].mxu0
  %v1012 = vadd.f32 0.0, %v1011
  %v1013 = vpop.f32.mrb[0].mxu0
  %v1014 = vpop.f32.mrb[0].mxu0
  %1015 = vdwg.mxu0
  %v1016 = vunpack.c.l.bf16 %v932
  %v1017 = vunpack.c.h.bf16 %v932
  %v1018 = vunpack.c.l.bf16 %v933
  %v1019 = vunpack.c.h.bf16 %v933
  %v1020 = vadd.f32 %v1016, %v969
  %v1021 = vadd.f32 %v1017, %v971
  %v1022 = vadd.f32 %v1018, %v1010
  %v1023 = vadd.f32 %v1019, %v1012
  %v1024 = vxor.u32 %v1020, 2147483648
  %v1025 = vmul.f32 %v1024, 1.442695
  %v1026 = vpow.pop %v1025
  %v1027 = vadd.f32 %v1026, 1.0
  %v1028 = vrcp.pop %v1027
  %v1029 = vmul.f32 1.0, %v1028
  %v1030 = vxor.u32 %v1021, 2147483648
  %v1031 = vmul.f32 %v1030, 1.442695
  %v1032 = vpow.pop %v1031
  %v1033 = vadd.f32 %v1032, 1.0
  %v1034 = vrcp.pop %v1033
  %v1035 = vmul.f32 1.0, %v1034
  %v1036 = vtanh.pop %v1022
  %v1037 = vxor.u32 %v1023, 2147483648
  %v1038 = vmul.f32 %v1037, 1.442695
  %v1039 = vpow.pop %v1038
  %v1040 = vadd.f32 %v1039, 1.0
  %v1041 = vrcp.pop %v1040
  %v1042 = vmul.f32 1.0, %v1041
  %v1043 = vmul.f32 %v1035, %v925
  %v1044 = vmul.f32 %v1029, %v1036
  %v1045 = vadd.f32 %v1043, %v1044
  %v1046 = vtanh.pop %v1045
  %v1047 = vmul.f32 %v1042, %v1046
  %v1048 = vpack.c.bf16 %v1047, %v1047
  %s1049 = scalar_lea.vmem %s2, 24
  %1050 = vst [vmem:[%s1049] sm:$0xf] %v1048
  %s1051 = scalar_lea.vmem %s0, 112
  %v1052 = vld [vmem:[%s1051] sm:$0xff]
  %v1053 = vld [vmem:[%s1051 + $0x8] sm:$0xff]
  %1054 = vmatprep.subr.bf16.mxu0 %v152
  %1055 = vmatpush1.bf16.msra.mxu0 %v151
  %1056 = vmatprep.subr.bf16.mxu0 %v156
  %1057 = vmatpush1.bf16.msra.mxu0 %v155
  %1058 = vmatprep.subr.bf16.mxu0 %v160
  %1059 = vmatpush1.bf16.msra.mxu0 %v159
  %1060 = vmatprep.subr.bf16.mxu0 %v164
  %1061 = vmatpush1.bf16.msra.mxu0 %v163
  %1062 = vmatprep.subr.bf16.mxu0 %v168
  %1063 = vmatpush1.bf16.msra.mxu0 %v167
  %1064 = vmatprep.subr.bf16.mxu0 %v172
  %1065 = vmatpush1.bf16.msra.mxu0 %v171
  %1066 = vmatprep.subr.bf16.mxu0 %v176
  %1067 = vmatpush1.bf16.msra.mxu0 %v175
  %1068 = vmatprep.subr.bf16.mxu0 %v180
  %1069 = vmatpush1.bf16.msra.mxu0 %v179
  %1070 = vmatprep.subr.bf16.mxu0 0
  %1071 = vmatpush1.bf16.msra.mxu0 0
  %1072 = vmatprep.subr.bf16.mxu0 0
  %1073 = vmatpush1.bf16.msra.mxu0 0
  %1074 = vmatprep.subr.bf16.mxu0 0
  %1075 = vmatpush1.bf16.msra.mxu0 0
  %1076 = vmatprep.subr.bf16.mxu0 0
  %1077 = vmatpush1.bf16.msra.mxu0 0
  %1078 = vmatprep.subr.bf16.mxu0 0
  %1079 = vmatpush1.bf16.msra.mxu0 0
  %1080 = vmatprep.subr.bf16.mxu0 0
  %1081 = vmatpush1.bf16.msra.mxu0 0
  %1082 = vmatprep.subr.bf16.mxu0 0
  %1083 = vmatpush1.bf16.msra.mxu0 0
  %1084 = vmatprep.subr.bf16.mxu0 0
  %1085 = vmatpush1.bf16.msra.mxu0 0
  %1086 = vmatprep.mubr.bf16.mxu0 0
  %1087 = vmatmul.mubr.bf16.gmra.mrb[0].mxu0 %v1048
  %v1088 = vpop.f32.mrb[0].mxu0
  %v1089 = vadd.f32 0.0, %v1088
  %v1090 = vpop.f32.mrb[0].mxu0
  %v1091 = vadd.f32 0.0, %v1090
  %v1092 = vpop.f32.mrb[0].mxu0
  %v1093 = vpop.f32.mrb[0].mxu0
  %1094 = vdwg.mxu0
  %1095 = vmatprep.subr.bf16.mxu0 %v154
  %1096 = vmatpush1.bf16.msra.mxu0 %v153
  %1097 = vmatprep.subr.bf16.mxu0 %v158
  %1098 = vmatpush1.bf16.msra.mxu0 %v157
  %1099 = vmatprep.subr.bf16.mxu0 %v162
  %1100 = vmatpush1.bf16.msra.mxu0 %v161
  %1101 = vmatprep.subr.bf16.mxu0 %v166
  %1102 = vmatpush1.bf16.msra.mxu0 %v165
  %1103 = vmatprep.subr.bf16.mxu0 %v170
  %1104 = vmatpush1.bf16.msra.mxu0 %v169
  %1105 = vmatprep.subr.bf16.mxu0 %v174
  %1106 = vmatpush1.bf16.msra.mxu0 %v173
  %1107 = vmatprep.subr.bf16.mxu0 %v178
  %1108 = vmatpush1.bf16.msra.mxu0 %v177
  %1109 = vmatprep.subr.bf16.mxu0 %v182
  %1110 = vmatpush1.bf16.msra.mxu0 %v181
  %1111 = vmatprep.subr.bf16.mxu0 0
  %1112 = vmatpush1.bf16.msra.mxu0 0
  %1113 = vmatprep.subr.bf16.mxu0 0
  %1114 = vmatpush1.bf16.msra.mxu0 0
  %1115 = vmatprep.subr.bf16.mxu0 0
  %1116 = vmatpush1.bf16.msra.mxu0 0
  %1117 = vmatprep.subr.bf16.mxu0 0
  %1118 = vmatpush1.bf16.msra.mxu0 0
  %1119 = vmatprep.subr.bf16.mxu0 0
  %1120 = vmatpush1.bf16.msra.mxu0 0
  %1121 = vmatprep.subr.bf16.mxu0 0
  %1122 = vmatpush1.bf16.msra.mxu0 0
  %1123 = vmatprep.subr.bf16.mxu0 0
  %1124 = vmatpush1.bf16.msra.mxu0 0
  %1125 = vmatprep.subr.bf16.mxu0 0
  %1126 = vmatpush1.bf16.msra.mxu0 0
  %1127 = vmatprep.mubr.bf16.mxu0 0
  %1128 = vmatmul.mubr.bf16.gmra.mrb[0].mxu0 %v1048
  %v1129 = vpop.f32.mrb[0].mxu0
  %v1130 = vadd.f32 0.0, %v1129
  %v1131 = vpop.f32.mrb[0].mxu0
  %v1132 = vadd.f32 0.0, %v1131
  %v1133 = vpop.f32.mrb[0].mxu0
  %v1134 = vpop.f32.mrb[0].mxu0
  %1135 = vdwg.mxu0
  %v1136 = vunpack.c.l.bf16 %v1052
  %v1137 = vunpack.c.h.bf16 %v1052
  %v1138 = vunpack.c.l.bf16 %v1053
  %v1139 = vunpack.c.h.bf16 %v1053
  %v1140 = vadd.f32 %v1136, %v1089
  %v1141 = vadd.f32 %v1137, %v1091
  %v1142 = vadd.f32 %v1138, %v1130
  %v1143 = vadd.f32 %v1139, %v1132
  %v1144 = vxor.u32 %v1140, 2147483648
  %v1145 = vmul.f32 %v1144, 1.442695
  %v1146 = vpow.pop %v1145
  %v1147 = vadd.f32 %v1146, 1.0
  %v1148 = vrcp.pop %v1147
  %v1149 = vmul.f32 1.0, %v1148
  %v1150 = vxor.u32 %v1141, 2147483648
  %v1151 = vmul.f32 %v1150, 1.442695
  %v1152 = vpow.pop %v1151
  %v1153 = vadd.f32 %v1152, 1.0
  %v1154 = vrcp.pop %v1153
  %v1155 = vmul.f32 1.0, %v1154
  %v1156 = vtanh.pop %v1142
  %v1157 = vxor.u32 %v1143, 2147483648
  %v1158 = vmul.f32 %v1157, 1.442695
  %v1159 = vpow.pop %v1158
  %v1160 = vadd.f32 %v1159, 1.0
  %v1161 = vrcp.pop %v1160
  %v1162 = vmul.f32 1.0, %v1161
  %v1163 = vmul.f32 %v1155, %v1045
  %v1164 = vmul.f32 %v1149, %v1156
  %v1165 = vadd.f32 %v1163, %v1164
  %v1166 = vtanh.pop %v1165
  %v1167 = vmul.f32 %v1162, %v1166
  %v1168 = vpack.c.bf16 %v1167, %v1167
  %s1169 = scalar_lea.vmem %s2, 28
  %1170 = vst [vmem:[%s1169] sm:$0xf] %v1168
  %s1171 = scalar_lea.vmem %s0, 128
  %v1172 = vld [vmem:[%s1171] sm:$0xff]
  %v1173 = vld [vmem:[%s1171 + $0x8] sm:$0xff]
  %1174 = vmatprep.subr.bf16.mxu0 %v152
  %1175 = vmatpush1.bf16.msra.mxu0 %v151
  %1176 = vmatprep.subr.bf16.mxu0 %v156
  %1177 = vmatpush1.bf16.msra.mxu0 %v155
  %1178 = vmatprep.subr.bf16.mxu0 %v160
  %1179 = vmatpush1.bf16.msra.mxu0 %v159
  %1180 = vmatprep.subr.bf16.mxu0 %v164
  %1181 = vmatpush1.bf16.msra.mxu0 %v163
  %1182 = vmatprep.subr.bf16.mxu0 %v168
  %1183 = vmatpush1.bf16.msra.mxu0 %v167
  %1184 = vmatprep.subr.bf16.mxu0 %v172
  %1185 = vmatpush1.bf16.msra.mxu0 %v171
  %1186 = vmatprep.subr.bf16.mxu0 %v176
  %1187 = vmatpush1.bf16.msra.mxu0 %v175
  %1188 = vmatprep.subr.bf16.mxu0 %v180
  %1189 = vmatpush1.bf16.msra.mxu0 %v179
  %1190 = vmatprep.subr.bf16.mxu0 0
  %1191 = vmatpush1.bf16.msra.mxu0 0
  %1192 = vmatprep.subr.bf16.mxu0 0
  %1193 = vmatpush1.bf16.msra.mxu0 0
  %1194 = vmatprep.subr.bf16.mxu0 0
  %1195 = vmatpush1.bf16.msra.mxu0 0
  %1196 = vmatprep.subr.bf16.mxu0 0
  %1197 = vmatpush1.bf16.msra.mxu0 0
  %1198 = vmatprep.subr.bf16.mxu0 0
  %1199 = vmatpush1.bf16.msra.mxu0 0
  %1200 = vmatprep.subr.bf16.mxu0 0
  %1201 = vmatpush1.bf16.msra.mxu0 0
  %1202 = vmatprep.subr.bf16.mxu0 0
  %1203 = vmatpush1.bf16.msra.mxu0 0
  %1204 = vmatprep.subr.bf16.mxu0 0
  %1205 = vmatpush1.bf16.msra.mxu0 0
  %1206 = vmatprep.mubr.bf16.mxu0 0
  %1207 = vmatmul.mubr.bf16.gmra.mrb[0].mxu0 %v1168
  %v1208 = vpop.f32.mrb[0].mxu0
  %v1209 = vadd.f32 0.0, %v1208
  %v1210 = vpop.f32.mrb[0].mxu0
  %v1211 = vadd.f32 0.0, %v1210
  %v1212 = vpop.f32.mrb[0].mxu0
  %v1213 = vpop.f32.mrb[0].mxu0
  %1214 = vdwg.mxu0
  %1215 = vmatprep.subr.bf16.mxu0 %v154
  %1216 = vmatpush1.bf16.msra.mxu0 %v153
  %1217 = vmatprep.subr.bf16.mxu0 %v158
  %1218 = vmatpush1.bf16.msra.mxu0 %v157
  %1219 = vmatprep.subr.bf16.mxu0 %v162
  %1220 = vmatpush1.bf16.msra.mxu0 %v161
  %1221 = vmatprep.subr.bf16.mxu0 %v166
  %1222 = vmatpush1.bf16.msra.mxu0 %v165
  %1223 = vmatprep.subr.bf16.mxu0 %v170
  %1224 = vmatpush1.bf16.msra.mxu0 %v169
  %1225 = vmatprep.subr.bf16.mxu0 %v174
  %1226 = vmatpush1.bf16.msra.mxu0 %v173
  %1227 = vmatprep.subr.bf16.mxu0 %v178
  %1228 = vmatpush1.bf16.msra.mxu0 %v177
  %1229 = vmatprep.subr.bf16.mxu0 %v182
  %1230 = vmatpush1.bf16.msra.mxu0 %v181
  %1231 = vmatprep.subr.bf16.mxu0 0
  %1232 = vmatpush1.bf16.msra.mxu0 0
  %1233 = vmatprep.subr.bf16.mxu0 0
  %1234 = vmatpush1.bf16.msra.mxu0 0
  %1235 = vmatprep.subr.bf16.mxu0 0
  %1236 = vmatpush1.bf16.msra.mxu0 0
  %1237 = vmatprep.subr.bf16.mxu0 0
  %1238 = vmatpush1.bf16.msra.mxu0 0
  %1239 = vmatprep.subr.bf16.mxu0 0
  %1240 = vmatpush1.bf16.msra.mxu0 0
  %1241 = vmatprep.subr.bf16.mxu0 0
  %1242 = vmatpush1.bf16.msra.mxu0 0
  %1243 = vmatprep.subr.bf16.mxu0 0
  %1244 = vmatpush1.bf16.msra.mxu0 0
  %1245 = vmatprep.subr.bf16.mxu0 0
  %1246 = vmatpush1.bf16.msra.mxu0 0
  %1247 = vmatprep.mubr.bf16.mxu0 0
  %1248 = vmatmul.mubr.bf16.gmra.mrb[0].mxu0 %v1168
  %v1249 = vpop.f32.mrb[0].mxu0
  %v1250 = vadd.f32 0.0, %v1249
  %v1251 = vpop.f32.mrb[0].mxu0
  %v1252 = vadd.f32 0.0, %v1251
  %v1253 = vpop.f32.mrb[0].mxu0
  %v1254 = vpop.f32.mrb[0].mxu0
  %1255 = vdwg.mxu0
  %v1256 = vunpack.c.l.bf16 %v1172
  %v1257 = vunpack.c.h.bf16 %v1172
  %v1258 = vunpack.c.l.bf16 %v1173
  %v1259 = vunpack.c.h.bf16 %v1173
  %v1260 = vadd.f32 %v1256, %v1209
  %v1261 = vadd.f32 %v1257, %v1211
  %v1262 = vadd.f32 %v1258, %v1250
  %v1263 = vadd.f32 %v1259, %v1252
  %v1264 = vxor.u32 %v1260, 2147483648
  %v1265 = vmul.f32 %v1264, 1.442695
  %v1266 = vpow.pop %v1265
  %v1267 = vadd.f32 %v1266, 1.0
  %v1268 = vrcp.pop %v1267
  %v1269 = vmul.f32 1.0, %v1268
  %v1270 = vxor.u32 %v1261, 2147483648
  %v1271 = vmul.f32 %v1270, 1.442695
  %v1272 = vpow.pop %v1271
  %v1273 = vadd.f32 %v1272, 1.0
  %v1274 = vrcp.pop %v1273
  %v1275 = vmul.f32 1.0, %v1274
  %v1276 = vtanh.pop %v1262
  %v1277 = vxor.u32 %v1263, 2147483648
  %v1278 = vmul.f32 %v1277, 1.442695
  %v1279 = vpow.pop %v1278
  %v1280 = vadd.f32 %v1279, 1.0
  %v1281 = vrcp.pop %v1280
  %v1282 = vmul.f32 1.0, %v1281
  %v1283 = vmul.f32 %v1275, %v1165
  %v1284 = vmul.f32 %v1269, %v1276
  %v1285 = vadd.f32 %v1283, %v1284
  %v1286 = vtanh.pop %v1285
  %v1287 = vmul.f32 %v1282, %v1286
  %v1288 = vpack.c.bf16 %v1287, %v1287
  %s1289 = scalar_lea.vmem %s2, 32
  %1290 = vst [vmem:[%s1289] sm:$0xf] %v1288
  %1291 = vst [vmem:[#allocation2] sm:$0xff] %v1287
  %1292 = vst [vmem:[#allocation3] sm:$0xff] %v1285
  // Predicated region
  $region14: #{decoder_rnn_forward.6} parent=0 // pred_check
    _
  $region15: #{decoder_rnn_forward.6} parent=0 // pred_check_branch
    %1294 = sbr.rel (0) target = $region17
  $region16: #{decoder_rnn_forward.6} parent=0 // pred_region
    _
  $region17: #{decoder_rnn_forward.6} parent=0 // pred_fallthru
    _
  // Predicated region
  $region18: #{decoder_rnn_forward.6} parent=0 // pred_check
    _
  $region19: #{decoder_rnn_forward.6} parent=0 // pred_check_branch
    %1296 = sbr.rel (0) target = $region21
  $region20: #{decoder_rnn_forward.6} parent=0 // pred_region
    _
  $region21: #{decoder_rnn_forward.6} parent=0 // pred_fallthru
    _

</llo_original>
